<compile_context>
chip_gen: v7x
topology: tpu7x:2x2x1
jax: 0.10.0
libtpu: 0.0.40
codegen_flags: <defaults>
</compile_context>

<pallas_src>
import jax
import jax.numpy as jnp
from jax.experimental import pallas as pl
from jax.experimental.pallas import tpu as pltpu

# ---------------- small synthetic BERT config ----------------
VOCAB = 100
TYPE_VOCAB = 2
MAX_POS = 16
HIDDEN = 32
N_LAYERS = 2
N_HEADS = 4
HEAD_DIM = HIDDEN // N_HEADS
INTERMEDIATE = 64
LN_EPS = 1e-12
BATCH = 2
SEQ = 8

# ---------------- packed-parameter layout ----------------
TAB_ROWS = VOCAB + MAX_POS + TYPE_VOCAB        # 118 rows: [word ; position ; type]
MAT_COLS = 3 * HIDDEN                          # 96 (widest matrix: W_qkv)
R_QKV = 0                                      # W_qkv rows   [0, H)
R_WO = HIDDEN                                  # W_o   rows   [H, 2H)
R_W1 = 2 * HIDDEN                              # W_ffn1 rows  [2H, 3H)
R_W2 = 3 * HIDDEN                              # W_ffn2 rows  [3H, 3H+I)
MAT_ROWS = 3 * HIDDEN + INTERMEDIATE           # 160
VEC_ROWS = 2 + 8 * N_LAYERS                    # emb LN (2 rows) + 8 rows per layer


def _erf(z):
    """Abramowitz & Stegun 7.1.26 erf approximation (|err| < 1.5e-7).
    Uses only exp/mul/add/select so it lowers on every TPU generation."""
    a1, a2, a3, a4, a5 = 0.254829592, -0.284496736, 1.421413741, -1.453152027, 1.061405429
    p = 0.3275911
    sgn = jnp.where(z < 0.0, -1.0, 1.0)
    za = jnp.abs(z)
    t = 1.0 / (1.0 + p * za)
    poly = ((((a5 * t + a4) * t + a3) * t + a2) * t + a1) * t
    return sgn * (1.0 - poly * jnp.exp(-za * za))


# ---------------- fused whole-model Pallas kernel (one grid step per batch) ----------------
def _bert_kernel(tok_ref, seg_ref, msk_ref,        # scalar-prefetch (SMEM), each (B, S) int32
                 emb_tab_ref, wmat_ref, vec_ref,   # packed params (VMEM)
                 out_ref):                         # (1, 1, HIDDEN) [CLS] slot for this batch
    f32, bf16 = jnp.float32, jnp.bfloat16
    b = pl.program_id(0)

    def layer_norm(h, g, beta):
        mu = jnp.mean(h, axis=-1, keepdims=True)
        var = jnp.mean(jnp.square(h - mu), axis=-1, keepdims=True)
        return (h - mu) * jax.lax.rsqrt(var + LN_EPS) * g + beta

    vecs = vec_ref[...]                                        # (VEC_ROWS, 96) f32, tiny

    # ---- embeddings: word + position + type gather-sum as ONE one-hot matmul ----
    row_ids = jax.lax.broadcasted_iota(jnp.int32, (SEQ, TAB_ROWS), 0)
    col_ids = jax.lax.broadcasted_iota(jnp.int32, (SEQ, TAB_ROWS), 1)
    onehot = jnp.zeros((SEQ, TAB_ROWS), f32)
    for s in range(SEQ):                                       # unrolled, SEQ = 8
        tok = tok_ref[b, s]
        seg = seg_ref[b, s]
        hit = ((col_ids == tok)
               | (col_ids == VOCAB + s)
               | (col_ids == VOCAB + MAX_POS + seg))
        onehot = onehot + jnp.where((row_ids == s) & hit, f32(1.0), f32(0.0))
    emb = jnp.dot(onehot, emb_tab_ref[...], preferred_element_type=f32)   # (S, H)
    x = layer_norm(emb, vecs[0:1, 0:HIDDEN], vecs[1:2, 0:HIDDEN])

    # ---- additive padding bias (per-batch row), built from SMEM mask scalars ----
    lane = jax.lax.broadcasted_iota(jnp.int32, (1, SEQ), 1)
    bias = jnp.zeros((1, SEQ), f32)
    for s in range(SEQ):
        pad = f32(-10000.0) * (f32(1.0) - msk_ref[b, s].astype(f32))
        bias = bias + jnp.where(lane == s, pad, f32(0.0))

    col = jax.lax.broadcasted_iota(jnp.int32, (1, HIDDEN), 1)

    for l in range(N_LAYERS):                # unrolled; activations stay in vregs/VMEM
        wm = wmat_ref[l]                     # (MAT_ROWS, MAT_COLS) bf16 for this layer
        vb = 2 + 8 * l
        w_qkv = wm[R_QKV:R_QKV + HIDDEN, :]                         # (H, 3H), Q-scale folded in
        w_o = wm[R_WO:R_WO + HIDDEN, 0:HIDDEN]                      # (H, H)
        w_1 = wm[R_W1:R_W1 + HIDDEN, 0:INTERMEDIATE]                # (H, I)
        w_2 = wm[R_W2:R_W2 + INTERMEDIATE, 0:HIDDEN]                # (I, H)
        b_qkv = vecs[vb + 0:vb + 1, 0:3 * HIDDEN]
        b_o = vecs[vb + 1:vb + 2, 0:HIDDEN]
        ln1_g = vecs[vb + 2:vb + 3, 0:HIDDEN]
        ln1_b = vecs[vb + 3:vb + 4, 0:HIDDEN]
        b_1 = vecs[vb + 4:vb + 5, 0:INTERMEDIATE]
        b_2 = vecs[vb + 5:vb + 6, 0:HIDDEN]
        ln2_g = vecs[vb + 6:vb + 7, 0:HIDDEN]
        ln2_b = vecs[vb + 7:vb + 8, 0:HIDDEN]

        # --- self-attention (fused QKV projection, per-head column masks) ---
        qkv = jnp.dot(x.astype(bf16), w_qkv, preferred_element_type=f32) + b_qkv   # (S, 3H)
        q = qkv[:, 0:HIDDEN]                           # already scaled by 1/sqrt(head_dim)
        k = qkv[:, HIDDEN:2 * HIDDEN].astype(bf16)     # shared, un-masked across heads
        v = qkv[:, 2 * HIDDEN:3 * HIDDEN]

        ctx = jnp.zeros((SEQ, HIDDEN), f32)
        for h in range(N_HEADS):
            hm = jnp.where((col >= h * HEAD_DIM) & (col < (h + 1) * HEAD_DIM),
                           f32(1.0), f32(0.0))                                   # (1, H)
            qh = (q * hm).astype(bf16)
            # zero Q columns kill cross-head products -> contract against full K
            scores = jax.lax.dot_general(qh, k, (((1,), (1,)), ((), ())),
                                         preferred_element_type=f32)             # (S, S)
            scores = scores + bias
            scores = scores - jnp.max(scores, axis=-1, keepdims=True)
            p = jnp.exp(scores)
            p = p * pl.reciprocal(jnp.sum(p, axis=-1, keepdims=True), approx=True)
            # V stays head-masked so head h only writes its own output columns
            ctx = ctx + jnp.dot(p.astype(bf16), (v * hm).astype(bf16),
                                preferred_element_type=f32)
        attn = jnp.dot(ctx.astype(bf16), w_o, preferred_element_type=f32) + b_o
        x = layer_norm(attn + x, ln1_g, ln1_b)

        # --- feed-forward block (erf-GELU, matching HF BertModel's "gelu") ---
        hmid = jnp.dot(x.astype(bf16), w_1, preferred_element_type=f32) + b_1
        hmid = 0.5 * hmid * (1.0 + _erf(hmid * f32(0.7071067811865476)))
        ffn = jnp.dot(hmid.astype(bf16), w_2, preferred_element_type=f32) + b_2
        x = layer_norm(ffn + x, ln2_g, ln2_b)

    # only the [CLS] row leaves the kernel
    out_ref[...] = x[0:1, :].reshape(1, 1, HIDDEN).astype(out_ref.dtype)


# ---------------- BERT forward ----------------
def bert_forward(packed, tokens, segments, input_masks):
    emb_table, wmat, vecs = packed
    B, S = tokens.shape
    assert S == SEQ

    grid_spec = pltpu.PrefetchScalarGridSpec(
        num_scalar_prefetch=3,                 # tokens / segments / masks -> SMEM
        grid=(B,),
        in_specs=[
            pl.BlockSpec((TAB_ROWS, HIDDEN), lambda b, *_: (0, 0)),
            pl.BlockSpec((N_LAYERS, MAT_ROWS, MAT_COLS), lambda b, *_: (0, 0, 0)),
            pl.BlockSpec((VEC_ROWS, MAT_COLS), lambda b, *_: (0, 0)),
        ],
        out_specs=pl.BlockSpec((1, 1, HIDDEN), lambda b, *_: (b, 0, 0)),
    )
    cls = pl.pallas_call(
        _bert_kernel,
        out_shape=jax.ShapeDtypeStruct((B, 1, HIDDEN), jnp.float32),
        grid_spec=grid_spec,
        compiler_params=pltpu.CompilerParams(dimension_semantics=("parallel",)),
    )(tokens.astype(jnp.int32), segments.astype(jnp.int32),
      input_masks.astype(jnp.int32), emb_table, wmat, vecs)

    # == output[0][:, 0, :] in the PyTorch module
    return cls[:, 0, :]


# ---------------- deterministic synthetic parameters ----------------
def init_params(key):
    def normal(k, shape):
        return (0.02 * jax.random.normal(k, shape)).astype(jnp.float32)

    ks = jax.random.split(key, 7)
    L = N_LAYERS
    return {
        "word_emb": normal(ks[0], (VOCAB, HIDDEN)),
        "pos_emb": normal(ks[1], (MAX_POS, HIDDEN)),
        "type_emb": normal(ks[2], (TYPE_VOCAB, HIDDEN)),
        "emb_ln_g": jnp.ones((HIDDEN,), jnp.float32),
        "emb_ln_b": jnp.zeros((HIDDEN,), jnp.float32),
        "wqkv": normal(ks[3], (L, HIDDEN, 3 * HIDDEN)),
        "bqkv": jnp.zeros((L, 3 * HIDDEN), jnp.float32),
        "wo": normal(ks[4], (L, HIDDEN, HIDDEN)),
        "bo": jnp.zeros((L, HIDDEN), jnp.float32),
        "ln1_g": jnp.ones((L, HIDDEN), jnp.float32),
        "ln1_b": jnp.zeros((L, HIDDEN), jnp.float32),
        "w1": normal(ks[5], (L, HIDDEN, INTERMEDIATE)),
        "b1": jnp.zeros((L, INTERMEDIATE), jnp.float32),
        "w2": normal(ks[6], (L, INTERMEDIATE, HIDDEN)),
        "b2": jnp.zeros((L, HIDDEN), jnp.float32),
        "ln2_g": jnp.ones((L, HIDDEN), jnp.float32),
        "ln2_b": jnp.zeros((L, HIDDEN), jnp.float32),
    }


def pack_params(p):
    """One-time weight transform: fold 1/sqrt(head_dim) into the Q columns of
    W_qkv/b_qkv and pack all parameters into 3 slabs (few large DMAs instead of
    17 tiny ones).  Weight matrices are stored in bf16 for the MXU."""
    scale = jnp.float32(1.0 / (HEAD_DIM ** 0.5))

    # packed embedding table  [word ; position ; type]   (TAB_ROWS, H) f32
    emb_table = jnp.concatenate(
        [p["word_emb"], p["pos_emb"], p["type_emb"]], axis=0).astype(jnp.float32)

    # per-layer matrix slab (L, MAT_ROWS, MAT_COLS) bf16
    wqkv = p["wqkv"].at[:, :, :HIDDEN].multiply(scale)

    def padcols(m):
        return jnp.pad(m, ((0, 0), (0, 0), (0, MAT_COLS - m.shape[-1])))

    wmat = jnp.concatenate(
        [padcols(wqkv), padcols(p["wo"]), padcols(p["w1"]), padcols(p["w2"])],
        axis=1).astype(jnp.bfloat16)                     # (L, 160, 96)

    # bias / LayerNorm vector slab (VEC_ROWS, MAT_COLS) f32
    def row(v):
        v = v.reshape(1, -1)
        return jnp.pad(v, ((0, 0), (0, MAT_COLS - v.shape[-1])))

    bqkv = p["bqkv"].at[:, :HIDDEN].multiply(scale)
    rows = [row(p["emb_ln_g"]), row(p["emb_ln_b"])]
    for l in range(N_LAYERS):
        rows += [row(bqkv[l]), row(p["bo"][l]),
                 row(p["ln1_g"][l]), row(p["ln1_b"][l]),
                 row(p["b1"][l]), row(p["b2"][l]),
                 row(p["ln2_g"][l]), row(p["ln2_b"][l])]
    vecs = jnp.concatenate(rows, axis=0).astype(jnp.float32)   # (18, 96)
    return emb_table, wmat, vecs


if __name__ == "__main__":
    key = jax.random.PRNGKey(0)
    pkey, tkey = jax.random.split(key)
    packed = pack_params(init_params(pkey))

    tokens = jax.random.randint(tkey, (BATCH, SEQ), 0, VOCAB, dtype=jnp.int32)
    segments = jnp.concatenate(
        [jnp.zeros((BATCH, SEQ // 2), jnp.int32),
         jnp.ones((BATCH, SEQ - SEQ // 2), jnp.int32)], axis=1)
    input_masks = jnp.array([[1] * SEQ,
                             [1] * (SEQ - 2) + [0, 0]], dtype=jnp.int32)

    fwd = jax.jit(bert_forward)
    text_embeddings = fwd(packed, tokens, segments, input_masks)
    jax.block_until_ready(text_embeddings)
    assert text_embeddings.shape == (BATCH, HIDDEN)
    assert text_embeddings.dtype == jnp.float32
    assert bool(jnp.all(jnp.isfinite(text_embeddings)))
    print("KERNEL_OK")
</pallas_src>

<mosaic_0001>
module attributes {stable_mosaic.version = 11 : i64} {
  func.func @_bert_kernel(%arg0: i32, %arg1: memref<2x8xi32, #tpu.memory_space<smem>>, %arg2: memref<2x8xi32, #tpu.memory_space<smem>>, %arg3: memref<2x8xi32, #tpu.memory_space<smem>>, %arg4: memref<118x32xf32, #tpu.memory_space<vmem>>, %arg5: memref<2x160x96xbf16, #tpu.memory_space<vmem>>, %arg6: memref<18x96xf32, #tpu.memory_space<vmem>>, %arg7: memref<1x1x32xf32, #tpu.memory_space<vmem>>) attributes {dimension_semantics = [#tpu.dimension_semantics<parallel>], iteration_bounds = array<i64: 2>, scalar_prefetch = 3 : i64, scratch_operands = 0 : i64, tpu.core_type = #tpu.core_type<tc>, window_params = [{pipeline_mode = #tpu.pipeline_mode<synchronous>, transform_indices = @transform_0, window_bounds = array<i64: 118, 32>}, {pipeline_mode = #tpu.pipeline_mode<synchronous>, transform_indices = @transform_1, window_bounds = array<i64: 2, 160, 96>}, {pipeline_mode = #tpu.pipeline_mode<synchronous>, transform_indices = @transform_2, window_bounds = array<i64: 18, 96>}, {transform_indices = @transform_3, window_bounds = array<i64: 1, 1, 32>}]} {
    %c0 = arith.constant 0 : index
    %c0_0 = arith.constant 0 : index
    %0 = vector.load %arg6[%c0, %c0_0] : memref<18x96xf32, #tpu.memory_space<vmem>>, vector<18x96xf32>
    %1 = tpu.iota {dimensions = array<i32: 0>} : vector<8x118xi32>
    %2 = tpu.iota {dimensions = array<i32: 1>} : vector<8x118xi32>
    %cst = arith.constant 0.000000e+00 : f32
    %3 = vector.broadcast %cst : f32 to vector<8x118xf32>
    %4 = arith.index_cast %arg0 : i32 to index
    %c0_1 = arith.constant 0 : index
    %5 = memref.load %arg1[%4, %c0_1] : memref<2x8xi32, #tpu.memory_space<smem>>
    %6 = arith.index_cast %arg0 : i32 to index
    %c0_2 = arith.constant 0 : index
    %7 = memref.load %arg2[%6, %c0_2] : memref<2x8xi32, #tpu.memory_space<smem>>
    %8 = vector.broadcast %5 : i32 to vector<8x118xi32>
    %9 = arith.cmpi eq, %2, %8 : vector<8x118xi32>
    %c100_i32 = arith.constant 100 : i32
    %10 = vector.broadcast %c100_i32 : i32 to vector<8x118xi32>
    %11 = arith.cmpi eq, %2, %10 : vector<8x118xi32>
    %12 = arith.ori %9, %11 : vector<8x118xi1>
    %c116_i32 = arith.constant 116 : i32
    %13 = arith.addi %c116_i32, %7 : i32
    %14 = vector.broadcast %13 : i32 to vector<8x118xi32>
    %15 = arith.cmpi eq, %2, %14 : vector<8x118xi32>
    %16 = arith.ori %12, %15 : vector<8x118xi1>
    %c0_i32 = arith.constant 0 : i32
    %17 = vector.broadcast %c0_i32 : i32 to vector<8x118xi32>
    %18 = arith.cmpi eq, %1, %17 : vector<8x118xi32>
    %19 = arith.andi %18, %16 : vector<8x118xi1>
    %cst_3 = arith.constant 1.000000e+00 : f32
    %cst_4 = arith.constant 0.000000e+00 : f32
    %20 = vector.broadcast %cst_3 : f32 to vector<8x118xf32>
    %21 = vector.broadcast %cst_4 : f32 to vector<8x118xf32>
    %22 = arith.select %19, %20, %21 : vector<8x118xi1>, vector<8x118xf32>
    %23 = arith.addf %3, %22 : vector<8x118xf32>
    %24 = arith.index_cast %arg0 : i32 to index
    %c1 = arith.constant 1 : index
    %25 = memref.load %arg1[%24, %c1] : memref<2x8xi32, #tpu.memory_space<smem>>
    %26 = arith.index_cast %arg0 : i32 to index
    %c1_5 = arith.constant 1 : index
    %27 = memref.load %arg2[%26, %c1_5] : memref<2x8xi32, #tpu.memory_space<smem>>
    %28 = vector.broadcast %25 : i32 to vector<8x118xi32>
    %29 = arith.cmpi eq, %2, %28 : vector<8x118xi32>
    %c101_i32 = arith.constant 101 : i32
    %30 = vector.broadcast %c101_i32 : i32 to vector<8x118xi32>
    %31 = arith.cmpi eq, %2, %30 : vector<8x118xi32>
    %32 = arith.ori %29, %31 : vector<8x118xi1>
    %c116_i32_6 = arith.constant 116 : i32
    %33 = arith.addi %c116_i32_6, %27 : i32
    %34 = vector.broadcast %33 : i32 to vector<8x118xi32>
    %35 = arith.cmpi eq, %2, %34 : vector<8x118xi32>
    %36 = arith.ori %32, %35 : vector<8x118xi1>
    %c1_i32 = arith.constant 1 : i32
    %37 = vector.broadcast %c1_i32 : i32 to vector<8x118xi32>
    %38 = arith.cmpi eq, %1, %37 : vector<8x118xi32>
    %39 = arith.andi %38, %36 : vector<8x118xi1>
    %cst_7 = arith.constant 1.000000e+00 : f32
    %cst_8 = arith.constant 0.000000e+00 : f32
    %40 = vector.broadcast %cst_7 : f32 to vector<8x118xf32>
    %41 = vector.broadcast %cst_8 : f32 to vector<8x118xf32>
    %42 = arith.select %39, %40, %41 : vector<8x118xi1>, vector<8x118xf32>
    %43 = arith.addf %23, %42 : vector<8x118xf32>
    %44 = arith.index_cast %arg0 : i32 to index
    %c2 = arith.constant 2 : index
    %45 = memref.load %arg1[%44, %c2] : memref<2x8xi32, #tpu.memory_space<smem>>
    %46 = arith.index_cast %arg0 : i32 to index
    %c2_9 = arith.constant 2 : index
    %47 = memref.load %arg2[%46, %c2_9] : memref<2x8xi32, #tpu.memory_space<smem>>
    %48 = vector.broadcast %45 : i32 to vector<8x118xi32>
    %49 = arith.cmpi eq, %2, %48 : vector<8x118xi32>
    %c102_i32 = arith.constant 102 : i32
    %50 = vector.broadcast %c102_i32 : i32 to vector<8x118xi32>
    %51 = arith.cmpi eq, %2, %50 : vector<8x118xi32>
    %52 = arith.ori %49, %51 : vector<8x118xi1>
    %c116_i32_10 = arith.constant 116 : i32
    %53 = arith.addi %c116_i32_10, %47 : i32
    %54 = vector.broadcast %53 : i32 to vector<8x118xi32>
    %55 = arith.cmpi eq, %2, %54 : vector<8x118xi32>
    %56 = arith.ori %52, %55 : vector<8x118xi1>
    %c2_i32 = arith.constant 2 : i32
    %57 = vector.broadcast %c2_i32 : i32 to vector<8x118xi32>
    %58 = arith.cmpi eq, %1, %57 : vector<8x118xi32>
    %59 = arith.andi %58, %56 : vector<8x118xi1>
    %cst_11 = arith.constant 1.000000e+00 : f32
    %cst_12 = arith.constant 0.000000e+00 : f32
    %60 = vector.broadcast %cst_11 : f32 to vector<8x118xf32>
    %61 = vector.broadcast %cst_12 : f32 to vector<8x118xf32>
    %62 = arith.select %59, %60, %61 : vector<8x118xi1>, vector<8x118xf32>
    %63 = arith.addf %43, %62 : vector<8x118xf32>
    %64 = arith.index_cast %arg0 : i32 to index
    %c3 = arith.constant 3 : index
    %65 = memref.load %arg1[%64, %c3] : memref<2x8xi32, #tpu.memory_space<smem>>
    %66 = arith.index_cast %arg0 : i32 to index
    %c3_13 = arith.constant 3 : index
    %67 = memref.load %arg2[%66, %c3_13] : memref<2x8xi32, #tpu.memory_space<smem>>
    %68 = vector.broadcast %65 : i32 to vector<8x118xi32>
    %69 = arith.cmpi eq, %2, %68 : vector<8x118xi32>
    %c103_i32 = arith.constant 103 : i32
    %70 = vector.broadcast %c103_i32 : i32 to vector<8x118xi32>
    %71 = arith.cmpi eq, %2, %70 : vector<8x118xi32>
    %72 = arith.ori %69, %71 : vector<8x118xi1>
    %c116_i32_14 = arith.constant 116 : i32
    %73 = arith.addi %c116_i32_14, %67 : i32
    %74 = vector.broadcast %73 : i32 to vector<8x118xi32>
    %75 = arith.cmpi eq, %2, %74 : vector<8x118xi32>
    %76 = arith.ori %72, %75 : vector<8x118xi1>
    %c3_i32 = arith.constant 3 : i32
    %77 = vector.broadcast %c3_i32 : i32 to vector<8x118xi32>
    %78 = arith.cmpi eq, %1, %77 : vector<8x118xi32>
    %79 = arith.andi %78, %76 : vector<8x118xi1>
    %cst_15 = arith.constant 1.000000e+00 : f32
    %cst_16 = arith.constant 0.000000e+00 : f32
    %80 = vector.broadcast %cst_15 : f32 to vector<8x118xf32>
    %81 = vector.broadcast %cst_16 : f32 to vector<8x118xf32>
    %82 = arith.select %79, %80, %81 : vector<8x118xi1>, vector<8x118xf32>
    %83 = arith.addf %63, %82 : vector<8x118xf32>
    %84 = arith.index_cast %arg0 : i32 to index
    %c4 = arith.constant 4 : index
    %85 = memref.load %arg1[%84, %c4] : memref<2x8xi32, #tpu.memory_space<smem>>
    %86 = arith.index_cast %arg0 : i32 to index
    %c4_17 = arith.constant 4 : index
    %87 = memref.load %arg2[%86, %c4_17] : memref<2x8xi32, #tpu.memory_space<smem>>
    %88 = vector.broadcast %85 : i32 to vector<8x118xi32>
    %89 = arith.cmpi eq, %2, %88 : vector<8x118xi32>
    %c104_i32 = arith.constant 104 : i32
    %90 = vector.broadcast %c104_i32 : i32 to vector<8x118xi32>
    %91 = arith.cmpi eq, %2, %90 : vector<8x118xi32>
    %92 = arith.ori %89, %91 : vector<8x118xi1>
    %c116_i32_18 = arith.constant 116 : i32
    %93 = arith.addi %c116_i32_18, %87 : i32
    %94 = vector.broadcast %93 : i32 to vector<8x118xi32>
    %95 = arith.cmpi eq, %2, %94 : vector<8x118xi32>
    %96 = arith.ori %92, %95 : vector<8x118xi1>
    %c4_i32 = arith.constant 4 : i32
    %97 = vector.broadcast %c4_i32 : i32 to vector<8x118xi32>
    %98 = arith.cmpi eq, %1, %97 : vector<8x118xi32>
    %99 = arith.andi %98, %96 : vector<8x118xi1>
    %cst_19 = arith.constant 1.000000e+00 : f32
    %cst_20 = arith.constant 0.000000e+00 : f32
    %100 = vector.broadcast %cst_19 : f32 to vector<8x118xf32>
    %101 = vector.broadcast %cst_20 : f32 to vector<8x118xf32>
    %102 = arith.select %99, %100, %101 : vector<8x118xi1>, vector<8x118xf32>
    %103 = arith.addf %83, %102 : vector<8x118xf32>
    %104 = arith.index_cast %arg0 : i32 to index
    %c5 = arith.constant 5 : index
    %105 = memref.load %arg1[%104, %c5] : memref<2x8xi32, #tpu.memory_space<smem>>
    %106 = arith.index_cast %arg0 : i32 to index
    %c5_21 = arith.constant 5 : index
    %107 = memref.load %arg2[%106, %c5_21] : memref<2x8xi32, #tpu.memory_space<smem>>
    %108 = vector.broadcast %105 : i32 to vector<8x118xi32>
    %109 = arith.cmpi eq, %2, %108 : vector<8x118xi32>
    %c105_i32 = arith.constant 105 : i32
    %110 = vector.broadcast %c105_i32 : i32 to vector<8x118xi32>
    %111 = arith.cmpi eq, %2, %110 : vector<8x118xi32>
    %112 = arith.ori %109, %111 : vector<8x118xi1>
    %c116_i32_22 = arith.constant 116 : i32
    %113 = arith.addi %c116_i32_22, %107 : i32
    %114 = vector.broadcast %113 : i32 to vector<8x118xi32>
    %115 = arith.cmpi eq, %2, %114 : vector<8x118xi32>
    %116 = arith.ori %112, %115 : vector<8x118xi1>
    %c5_i32 = arith.constant 5 : i32
    %117 = vector.broadcast %c5_i32 : i32 to vector<8x118xi32>
    %118 = arith.cmpi eq, %1, %117 : vector<8x118xi32>
    %119 = arith.andi %118, %116 : vector<8x118xi1>
    %cst_23 = arith.constant 1.000000e+00 : f32
    %cst_24 = arith.constant 0.000000e+00 : f32
    %120 = vector.broadcast %cst_23 : f32 to vector<8x118xf32>
    %121 = vector.broadcast %cst_24 : f32 to vector<8x118xf32>
    %122 = arith.select %119, %120, %121 : vector<8x118xi1>, vector<8x118xf32>
    %123 = arith.addf %103, %122 : vector<8x118xf32>
    %124 = arith.index_cast %arg0 : i32 to index
    %c6 = arith.constant 6 : index
    %125 = memref.load %arg1[%124, %c6] : memref<2x8xi32, #tpu.memory_space<smem>>
    %126 = arith.index_cast %arg0 : i32 to index
    %c6_25 = arith.constant 6 : index
    %127 = memref.load %arg2[%126, %c6_25] : memref<2x8xi32, #tpu.memory_space<smem>>
    %128 = vector.broadcast %125 : i32 to vector<8x118xi32>
    %129 = arith.cmpi eq, %2, %128 : vector<8x118xi32>
    %c106_i32 = arith.constant 106 : i32
    %130 = vector.broadcast %c106_i32 : i32 to vector<8x118xi32>
    %131 = arith.cmpi eq, %2, %130 : vector<8x118xi32>
    %132 = arith.ori %129, %131 : vector<8x118xi1>
    %c116_i32_26 = arith.constant 116 : i32
    %133 = arith.addi %c116_i32_26, %127 : i32
    %134 = vector.broadcast %133 : i32 to vector<8x118xi32>
    %135 = arith.cmpi eq, %2, %134 : vector<8x118xi32>
    %136 = arith.ori %132, %135 : vector<8x118xi1>
    %c6_i32 = arith.constant 6 : i32
    %137 = vector.broadcast %c6_i32 : i32 to vector<8x118xi32>
    %138 = arith.cmpi eq, %1, %137 : vector<8x118xi32>
    %139 = arith.andi %138, %136 : vector<8x118xi1>
    %cst_27 = arith.constant 1.000000e+00 : f32
    %cst_28 = arith.constant 0.000000e+00 : f32
    %140 = vector.broadcast %cst_27 : f32 to vector<8x118xf32>
    %141 = vector.broadcast %cst_28 : f32 to vector<8x118xf32>
    %142 = arith.select %139, %140, %141 : vector<8x118xi1>, vector<8x118xf32>
    %143 = arith.addf %123, %142 : vector<8x118xf32>
    %144 = arith.index_cast %arg0 : i32 to index
    %c7 = arith.constant 7 : index
    %145 = memref.load %arg1[%144, %c7] : memref<2x8xi32, #tpu.memory_space<smem>>
    %146 = arith.index_cast %arg0 : i32 to index
    %c7_29 = arith.constant 7 : index
    %147 = memref.load %arg2[%146, %c7_29] : memref<2x8xi32, #tpu.memory_space<smem>>
    %148 = vector.broadcast %145 : i32 to vector<8x118xi32>
    %149 = arith.cmpi eq, %2, %148 : vector<8x118xi32>
    %c107_i32 = arith.constant 107 : i32
    %150 = vector.broadcast %c107_i32 : i32 to vector<8x118xi32>
    %151 = arith.cmpi eq, %2, %150 : vector<8x118xi32>
    %152 = arith.ori %149, %151 : vector<8x118xi1>
    %c116_i32_30 = arith.constant 116 : i32
    %153 = arith.addi %c116_i32_30, %147 : i32
    %154 = vector.broadcast %153 : i32 to vector<8x118xi32>
    %155 = arith.cmpi eq, %2, %154 : vector<8x118xi32>
    %156 = arith.ori %152, %155 : vector<8x118xi1>
    %c7_i32 = arith.constant 7 : i32
    %157 = vector.broadcast %c7_i32 : i32 to vector<8x118xi32>
    %158 = arith.cmpi eq, %1, %157 : vector<8x118xi32>
    %159 = arith.andi %158, %156 : vector<8x118xi1>
    %cst_31 = arith.constant 1.000000e+00 : f32
    %cst_32 = arith.constant 0.000000e+00 : f32
    %160 = vector.broadcast %cst_31 : f32 to vector<8x118xf32>
    %161 = vector.broadcast %cst_32 : f32 to vector<8x118xf32>
    %162 = arith.select %159, %160, %161 : vector<8x118xi1>, vector<8x118xf32>
    %163 = arith.addf %143, %162 : vector<8x118xf32>
    %c0_33 = arith.constant 0 : index
    %c0_34 = arith.constant 0 : index
    %164 = vector.load %arg4[%c0_33, %c0_34] : memref<118x32xf32, #tpu.memory_space<vmem>>, vector<118x32xf32>
    %cst_35 = arith.constant dense<0.000000e+00> : vector<8x32xf32>
    %165 = tpu.matmul %163, %164, %cst_35 {dimension_numbers = #tpu.dot_dimension_numbers<[1], [0], [0], [1], [0, 0, 1, 1], [], []>} : vector<8x118xf32>, vector<118x32xf32>, vector<8x32xf32> -> vector<8x32xf32>
    %166 = vector.extract_strided_slice %0 {offsets = [0, 0], sizes = [1, 32], strides = [1, 1]} : vector<18x96xf32> to vector<1x32xf32>
    %167 = vector.extract_strided_slice %0 {offsets = [1, 0], sizes = [1, 32], strides = [1, 1]} : vector<18x96xf32> to vector<1x32xf32>
    %cst_36 = arith.constant dense<0.000000e+00> : vector<8xf32>
    %168 = vector.multi_reduction <add>, %165, %cst_36 [1] : vector<8x32xf32> to vector<8xf32>
    %169 = vector.shape_cast %168 : vector<8xf32> to vector<8x1xf32>
    %cst_37 = arith.constant 3.200000e+01 : f32
    %170 = vector.broadcast %cst_37 : f32 to vector<8x1xf32>
    %171 = arith.divf %169, %170 : vector<8x1xf32>
    %172 = vector.broadcast %171 : vector<8x1xf32> to vector<8x32xf32>
    %173 = arith.subf %165, %172 : vector<8x32xf32>
    %174 = arith.mulf %173, %173 : vector<8x32xf32>
    %cst_38 = arith.constant dense<0.000000e+00> : vector<8xf32>
    %175 = vector.multi_reduction <add>, %174, %cst_38 [1] : vector<8x32xf32> to vector<8xf32>
    %176 = vector.shape_cast %175 : vector<8xf32> to vector<8x1xf32>
    %cst_39 = arith.constant 3.200000e+01 : f32
    %177 = vector.broadcast %cst_39 : f32 to vector<8x1xf32>
    %178 = arith.divf %176, %177 : vector<8x1xf32>
    %179 = vector.broadcast %171 : vector<8x1xf32> to vector<8x32xf32>
    %180 = arith.subf %165, %179 : vector<8x32xf32>
    %cst_40 = arith.constant 9.99999996E-13 : f32
    %181 = vector.broadcast %cst_40 : f32 to vector<8x1xf32>
    %182 = arith.addf %178, %181 : vector<8x1xf32>
    %183 = math.rsqrt %182 : vector<8x1xf32>
    %184 = vector.broadcast %183 : vector<8x1xf32> to vector<8x32xf32>
    %185 = arith.mulf %180, %184 : vector<8x32xf32>
    %186 = vector.broadcast %166 : vector<1x32xf32> to vector<8x32xf32>
    %187 = arith.mulf %185, %186 : vector<8x32xf32>
    %188 = vector.broadcast %167 : vector<1x32xf32> to vector<8x32xf32>
    %189 = arith.addf %187, %188 : vector<8x32xf32>
    %190 = tpu.iota {dimensions = array<i32: 1>} : vector<1x8xi32>
    %cst_41 = arith.constant 0.000000e+00 : f32
    %191 = vector.broadcast %cst_41 : f32 to vector<1x8xf32>
    %192 = arith.index_cast %arg0 : i32 to index
    %c0_42 = arith.constant 0 : index
    %193 = memref.load %arg3[%192, %c0_42] : memref<2x8xi32, #tpu.memory_space<smem>>
    %194 = arith.sitofp %193 : i32 to f32
    %cst_43 = arith.constant 1.000000e+00 : f32
    %195 = arith.subf %cst_43, %194 : f32
    %cst_44 = arith.constant -1.000000e+04 : f32
    %196 = arith.mulf %cst_44, %195 : f32
    %c0_i32_45 = arith.constant 0 : i32
    %197 = vector.broadcast %c0_i32_45 : i32 to vector<1x8xi32>
    %198 = arith.cmpi eq, %190, %197 : vector<1x8xi32>
    %cst_46 = arith.constant 0.000000e+00 : f32
    %199 = vector.broadcast %196 : f32 to vector<1x8xf32>
    %200 = vector.broadcast %cst_46 : f32 to vector<1x8xf32>
    %201 = arith.select %198, %199, %200 : vector<1x8xi1>, vector<1x8xf32>
    %202 = arith.addf %191, %201 : vector<1x8xf32>
    %203 = arith.index_cast %arg0 : i32 to index
    %c1_47 = arith.constant 1 : index
    %204 = memref.load %arg3[%203, %c1_47] : memref<2x8xi32, #tpu.memory_space<smem>>
    %205 = arith.sitofp %204 : i32 to f32
    %cst_48 = arith.constant 1.000000e+00 : f32
    %206 = arith.subf %cst_48, %205 : f32
    %cst_49 = arith.constant -1.000000e+04 : f32
    %207 = arith.mulf %cst_49, %206 : f32
    %c1_i32_50 = arith.constant 1 : i32
    %208 = vector.broadcast %c1_i32_50 : i32 to vector<1x8xi32>
    %209 = arith.cmpi eq, %190, %208 : vector<1x8xi32>
    %cst_51 = arith.constant 0.000000e+00 : f32
    %210 = vector.broadcast %207 : f32 to vector<1x8xf32>
    %211 = vector.broadcast %cst_51 : f32 to vector<1x8xf32>
    %212 = arith.select %209, %210, %211 : vector<1x8xi1>, vector<1x8xf32>
    %213 = arith.addf %202, %212 : vector<1x8xf32>
    %214 = arith.index_cast %arg0 : i32 to index
    %c2_52 = arith.constant 2 : index
    %215 = memref.load %arg3[%214, %c2_52] : memref<2x8xi32, #tpu.memory_space<smem>>
    %216 = arith.sitofp %215 : i32 to f32
    %cst_53 = arith.constant 1.000000e+00 : f32
    %217 = arith.subf %cst_53, %216 : f32
    %cst_54 = arith.constant -1.000000e+04 : f32
    %218 = arith.mulf %cst_54, %217 : f32
    %c2_i32_55 = arith.constant 2 : i32
    %219 = vector.broadcast %c2_i32_55 : i32 to vector<1x8xi32>
    %220 = arith.cmpi eq, %190, %219 : vector<1x8xi32>
    %cst_56 = arith.constant 0.000000e+00 : f32
    %221 = vector.broadcast %218 : f32 to vector<1x8xf32>
    %222 = vector.broadcast %cst_56 : f32 to vector<1x8xf32>
    %223 = arith.select %220, %221, %222 : vector<1x8xi1>, vector<1x8xf32>
    %224 = arith.addf %213, %223 : vector<1x8xf32>
    %225 = arith.index_cast %arg0 : i32 to index
    %c3_57 = arith.constant 3 : index
    %226 = memref.load %arg3[%225, %c3_57] : memref<2x8xi32, #tpu.memory_space<smem>>
    %227 = arith.sitofp %226 : i32 to f32
    %cst_58 = arith.constant 1.000000e+00 : f32
    %228 = arith.subf %cst_58, %227 : f32
    %cst_59 = arith.constant -1.000000e+04 : f32
    %229 = arith.mulf %cst_59, %228 : f32
    %c3_i32_60 = arith.constant 3 : i32
    %230 = vector.broadcast %c3_i32_60 : i32 to vector<1x8xi32>
    %231 = arith.cmpi eq, %190, %230 : vector<1x8xi32>
    %cst_61 = arith.constant 0.000000e+00 : f32
    %232 = vector.broadcast %229 : f32 to vector<1x8xf32>
    %233 = vector.broadcast %cst_61 : f32 to vector<1x8xf32>
    %234 = arith.select %231, %232, %233 : vector<1x8xi1>, vector<1x8xf32>
    %235 = arith.addf %224, %234 : vector<1x8xf32>
    %236 = arith.index_cast %arg0 : i32 to index
    %c4_62 = arith.constant 4 : index
    %237 = memref.load %arg3[%236, %c4_62] : memref<2x8xi32, #tpu.memory_space<smem>>
    %238 = arith.sitofp %237 : i32 to f32
    %cst_63 = arith.constant 1.000000e+00 : f32
    %239 = arith.subf %cst_63, %238 : f32
    %cst_64 = arith.constant -1.000000e+04 : f32
    %240 = arith.mulf %cst_64, %239 : f32
    %c4_i32_65 = arith.constant 4 : i32
    %241 = vector.broadcast %c4_i32_65 : i32 to vector<1x8xi32>
    %242 = arith.cmpi eq, %190, %241 : vector<1x8xi32>
    %cst_66 = arith.constant 0.000000e+00 : f32
    %243 = vector.broadcast %240 : f32 to vector<1x8xf32>
    %244 = vector.broadcast %cst_66 : f32 to vector<1x8xf32>
    %245 = arith.select %242, %243, %244 : vector<1x8xi1>, vector<1x8xf32>
    %246 = arith.addf %235, %245 : vector<1x8xf32>
    %247 = arith.index_cast %arg0 : i32 to index
    %c5_67 = arith.constant 5 : index
    %248 = memref.load %arg3[%247, %c5_67] : memref<2x8xi32, #tpu.memory_space<smem>>
    %249 = arith.sitofp %248 : i32 to f32
    %cst_68 = arith.constant 1.000000e+00 : f32
    %250 = arith.subf %cst_68, %249 : f32
    %cst_69 = arith.constant -1.000000e+04 : f32
    %251 = arith.mulf %cst_69, %250 : f32
    %c5_i32_70 = arith.constant 5 : i32
    %252 = vector.broadcast %c5_i32_70 : i32 to vector<1x8xi32>
    %253 = arith.cmpi eq, %190, %252 : vector<1x8xi32>
    %cst_71 = arith.constant 0.000000e+00 : f32
    %254 = vector.broadcast %251 : f32 to vector<1x8xf32>
    %255 = vector.broadcast %cst_71 : f32 to vector<1x8xf32>
    %256 = arith.select %253, %254, %255 : vector<1x8xi1>, vector<1x8xf32>
    %257 = arith.addf %246, %256 : vector<1x8xf32>
    %258 = arith.index_cast %arg0 : i32 to index
    %c6_72 = arith.constant 6 : index
    %259 = memref.load %arg3[%258, %c6_72] : memref<2x8xi32, #tpu.memory_space<smem>>
    %260 = arith.sitofp %259 : i32 to f32
    %cst_73 = arith.constant 1.000000e+00 : f32
    %261 = arith.subf %cst_73, %260 : f32
    %cst_74 = arith.constant -1.000000e+04 : f32
    %262 = arith.mulf %cst_74, %261 : f32
    %c6_i32_75 = arith.constant 6 : i32
    %263 = vector.broadcast %c6_i32_75 : i32 to vector<1x8xi32>
    %264 = arith.cmpi eq, %190, %263 : vector<1x8xi32>
    %cst_76 = arith.constant 0.000000e+00 : f32
    %265 = vector.broadcast %262 : f32 to vector<1x8xf32>
    %266 = vector.broadcast %cst_76 : f32 to vector<1x8xf32>
    %267 = arith.select %264, %265, %266 : vector<1x8xi1>, vector<1x8xf32>
    %268 = arith.addf %257, %267 : vector<1x8xf32>
    %269 = arith.index_cast %arg0 : i32 to index
    %c7_77 = arith.constant 7 : index
    %270 = memref.load %arg3[%269, %c7_77] : memref<2x8xi32, #tpu.memory_space<smem>>
    %271 = arith.sitofp %270 : i32 to f32
    %cst_78 = arith.constant 1.000000e+00 : f32
    %272 = arith.subf %cst_78, %271 : f32
    %cst_79 = arith.constant -1.000000e+04 : f32
    %273 = arith.mulf %cst_79, %272 : f32
    %c7_i32_80 = arith.constant 7 : i32
    %274 = vector.broadcast %c7_i32_80 : i32 to vector<1x8xi32>
    %275 = arith.cmpi eq, %190, %274 : vector<1x8xi32>
    %cst_81 = arith.constant 0.000000e+00 : f32
    %276 = vector.broadcast %273 : f32 to vector<1x8xf32>
    %277 = vector.broadcast %cst_81 : f32 to vector<1x8xf32>
    %278 = arith.select %275, %276, %277 : vector<1x8xi1>, vector<1x8xf32>
    %279 = arith.addf %268, %278 : vector<1x8xf32>
    %280 = tpu.iota {dimensions = array<i32: 1>} : vector<1x32xi32>
    %c0_82 = arith.constant 0 : index
    %c0_83 = arith.constant 0 : index
    %c0_84 = arith.constant 0 : index
    %281 = vector.load %arg5[%c0_82, %c0_83, %c0_84] : memref<2x160x96xbf16, #tpu.memory_space<vmem>>, vector<1x160x96xbf16>
    %282 = vector.shape_cast %281 : vector<1x160x96xbf16> to vector<160x96xbf16>
    %283 = vector.extract_strided_slice %282 {offsets = [0, 0], sizes = [32, 96], strides = [1, 1]} : vector<160x96xbf16> to vector<32x96xbf16>
    %284 = vector.extract_strided_slice %282 {offsets = [32, 0], sizes = [32, 32], strides = [1, 1]} : vector<160x96xbf16> to vector<32x32xbf16>
    %285 = vector.extract_strided_slice %282 {offsets = [64, 0], sizes = [32, 64], strides = [1, 1]} : vector<160x96xbf16> to vector<32x64xbf16>
    %286 = vector.extract_strided_slice %282 {offsets = [96, 0], sizes = [64, 32], strides = [1, 1]} : vector<160x96xbf16> to vector<64x32xbf16>
    %287 = vector.extract_strided_slice %0 {offsets = [2, 0], sizes = [1, 96], strides = [1, 1]} : vector<18x96xf32> to vector<1x96xf32>
    %288 = vector.extract_strided_slice %0 {offsets = [3, 0], sizes = [1, 32], strides = [1, 1]} : vector<18x96xf32> to vector<1x32xf32>
    %289 = vector.extract_strided_slice %0 {offsets = [4, 0], sizes = [1, 32], strides = [1, 1]} : vector<18x96xf32> to vector<1x32xf32>
    %290 = vector.extract_strided_slice %0 {offsets = [5, 0], sizes = [1, 32], strides = [1, 1]} : vector<18x96xf32> to vector<1x32xf32>
    %291 = vector.extract_strided_slice %0 {offsets = [6, 0], sizes = [1, 64], strides = [1, 1]} : vector<18x96xf32> to vector<1x64xf32>
    %292 = vector.extract_strided_slice %0 {offsets = [7, 0], sizes = [1, 32], strides = [1, 1]} : vector<18x96xf32> to vector<1x32xf32>
    %293 = vector.extract_strided_slice %0 {offsets = [8, 0], sizes = [1, 32], strides = [1, 1]} : vector<18x96xf32> to vector<1x32xf32>
    %294 = vector.extract_strided_slice %0 {offsets = [9, 0], sizes = [1, 32], strides = [1, 1]} : vector<18x96xf32> to vector<1x32xf32>
    %295 = arith.truncf %189 : vector<8x32xf32> to vector<8x32xbf16>
    %cst_85 = arith.constant dense<0.000000e+00> : vector<8x96xf32>
    %296 = tpu.matmul %295, %283, %cst_85 {dimension_numbers = #tpu.dot_dimension_numbers<[1], [0], [0], [1], [0, 0, 1, 1], [], []>} : vector<8x32xbf16>, vector<32x96xbf16>, vector<8x96xf32> -> vector<8x96xf32>
    %297 = vector.broadcast %287 : vector<1x96xf32> to vector<8x96xf32>
    %298 = arith.addf %296, %297 : vector<8x96xf32>
    %299 = vector.extract_strided_slice %298 {offsets = [0, 0], sizes = [8, 32], strides = [1, 1]} : vector<8x96xf32> to vector<8x32xf32>
    %300 = vector.extract_strided_slice %298 {offsets = [0, 32], sizes = [8, 32], strides = [1, 1]} : vector<8x96xf32> to vector<8x32xf32>
    %301 = arith.truncf %300 : vector<8x32xf32> to vector<8x32xbf16>
    %302 = vector.extract_strided_slice %298 {offsets = [0, 64], sizes = [8, 32], strides = [1, 1]} : vector<8x96xf32> to vector<8x32xf32>
    %cst_86 = arith.constant 0.000000e+00 : f32
    %303 = vector.broadcast %cst_86 : f32 to vector<8x32xf32>
    %c0_i32_87 = arith.constant 0 : i32
    %304 = vector.broadcast %c0_i32_87 : i32 to vector<1x32xi32>
    %305 = arith.cmpi sge, %280, %304 : vector<1x32xi32>
    %c8_i32 = arith.constant 8 : i32
    %306 = vector.broadcast %c8_i32 : i32 to vector<1x32xi32>
    %307 = arith.cmpi slt, %280, %306 : vector<1x32xi32>
    %308 = arith.andi %305, %307 : vector<1x32xi1>
    %cst_88 = arith.constant 1.000000e+00 : f32
    %cst_89 = arith.constant 0.000000e+00 : f32
    %309 = vector.broadcast %cst_88 : f32 to vector<1x32xf32>
    %310 = vector.broadcast %cst_89 : f32 to vector<1x32xf32>
    %311 = arith.select %308, %309, %310 : vector<1x32xi1>, vector<1x32xf32>
    %312 = vector.broadcast %311 : vector<1x32xf32> to vector<8x32xf32>
    %313 = arith.mulf %299, %312 : vector<8x32xf32>
    %314 = arith.truncf %313 : vector<8x32xf32> to vector<8x32xbf16>
    %cst_90 = arith.constant dense<0.000000e+00> : vector<8x8xf32>
    %315 = tpu.matmul %314, %301, %cst_90 {dimension_numbers = #tpu.dot_dimension_numbers<[1], [1], [0], [0], [0, 0, 1, 0], [], []>} : vector<8x32xbf16>, vector<8x32xbf16>, vector<8x8xf32> -> vector<8x8xf32>
    %316 = vector.broadcast %279 : vector<1x8xf32> to vector<8x8xf32>
    %317 = arith.addf %315, %316 : vector<8x8xf32>
    %cst_91 = arith.constant dense<0xFF800000> : vector<8xf32>
    %318 = vector.multi_reduction <maximumf>, %317, %cst_91 [1] : vector<8x8xf32> to vector<8xf32>
    %319 = vector.shape_cast %318 : vector<8xf32> to vector<8x1xf32>
    %320 = vector.broadcast %319 : vector<8x1xf32> to vector<8x8xf32>
    %321 = arith.subf %317, %320 : vector<8x8xf32>
    %322 = math.exp %321 : vector<8x8xf32>
    %cst_92 = arith.constant dense<0.000000e+00> : vector<8xf32>
    %323 = vector.multi_reduction <add>, %322, %cst_92 [1] : vector<8x8xf32> to vector<8xf32>
    %324 = vector.shape_cast %323 : vector<8xf32> to vector<8x1xf32>
    %325 = tpu.reciprocal %324 {approx = true} : vector<8x1xf32> -> vector<8x1xf32>
    %326 = vector.broadcast %325 : vector<8x1xf32> to vector<8x8xf32>
    %327 = arith.mulf %322, %326 : vector<8x8xf32>
    %328 = arith.truncf %327 : vector<8x8xf32> to vector<8x8xbf16>
    %329 = vector.broadcast %311 : vector<1x32xf32> to vector<8x32xf32>
    %330 = arith.mulf %302, %329 : vector<8x32xf32>
    %331 = arith.truncf %330 : vector<8x32xf32> to vector<8x32xbf16>
    %cst_93 = arith.constant dense<0.000000e+00> : vector<8x32xf32>
    %332 = tpu.matmul %328, %331, %cst_93 {dimension_numbers = #tpu.dot_dimension_numbers<[1], [0], [0], [1], [0, 0, 1, 1], [], []>} : vector<8x8xbf16>, vector<8x32xbf16>, vector<8x32xf32> -> vector<8x32xf32>
    %333 = arith.addf %303, %332 : vector<8x32xf32>
    %c8_i32_94 = arith.constant 8 : i32
    %334 = vector.broadcast %c8_i32_94 : i32 to vector<1x32xi32>
    %335 = arith.cmpi sge, %280, %334 : vector<1x32xi32>
    %c16_i32 = arith.constant 16 : i32
    %336 = vector.broadcast %c16_i32 : i32 to vector<1x32xi32>
    %337 = arith.cmpi slt, %280, %336 : vector<1x32xi32>
    %338 = arith.andi %335, %337 : vector<1x32xi1>
    %cst_95 = arith.constant 1.000000e+00 : f32
    %cst_96 = arith.constant 0.000000e+00 : f32
    %339 = vector.broadcast %cst_95 : f32 to vector<1x32xf32>
    %340 = vector.broadcast %cst_96 : f32 to vector<1x32xf32>
    %341 = arith.select %338, %339, %340 : vector<1x32xi1>, vector<1x32xf32>
    %342 = vector.broadcast %341 : vector<1x32xf32> to vector<8x32xf32>
    %343 = arith.mulf %299, %342 : vector<8x32xf32>
    %344 = arith.truncf %343 : vector<8x32xf32> to vector<8x32xbf16>
    %cst_97 = arith.constant dense<0.000000e+00> : vector<8x8xf32>
    %345 = tpu.matmul %344, %301, %cst_97 {dimension_numbers = #tpu.dot_dimension_numbers<[1], [1], [0], [0], [0, 0, 1, 0], [], []>} : vector<8x32xbf16>, vector<8x32xbf16>, vector<8x8xf32> -> vector<8x8xf32>
    %346 = vector.broadcast %279 : vector<1x8xf32> to vector<8x8xf32>
    %347 = arith.addf %345, %346 : vector<8x8xf32>
    %cst_98 = arith.constant dense<0xFF800000> : vector<8xf32>
    %348 = vector.multi_reduction <maximumf>, %347, %cst_98 [1] : vector<8x8xf32> to vector<8xf32>
    %349 = vector.shape_cast %348 : vector<8xf32> to vector<8x1xf32>
    %350 = vector.broadcast %349 : vector<8x1xf32> to vector<8x8xf32>
    %351 = arith.subf %347, %350 : vector<8x8xf32>
    %352 = math.exp %351 : vector<8x8xf32>
    %cst_99 = arith.constant dense<0.000000e+00> : vector<8xf32>
    %353 = vector.multi_reduction <add>, %352, %cst_99 [1] : vector<8x8xf32> to vector<8xf32>
    %354 = vector.shape_cast %353 : vector<8xf32> to vector<8x1xf32>
    %355 = tpu.reciprocal %354 {approx = true} : vector<8x1xf32> -> vector<8x1xf32>
    %356 = vector.broadcast %355 : vector<8x1xf32> to vector<8x8xf32>
    %357 = arith.mulf %352, %356 : vector<8x8xf32>
    %358 = arith.truncf %357 : vector<8x8xf32> to vector<8x8xbf16>
    %359 = vector.broadcast %341 : vector<1x32xf32> to vector<8x32xf32>
    %360 = arith.mulf %302, %359 : vector<8x32xf32>
    %361 = arith.truncf %360 : vector<8x32xf32> to vector<8x32xbf16>
    %cst_100 = arith.constant dense<0.000000e+00> : vector<8x32xf32>
    %362 = tpu.matmul %358, %361, %cst_100 {dimension_numbers = #tpu.dot_dimension_numbers<[1], [0], [0], [1], [0, 0, 1, 1], [], []>} : vector<8x8xbf16>, vector<8x32xbf16>, vector<8x32xf32> -> vector<8x32xf32>
    %363 = arith.addf %333, %362 : vector<8x32xf32>
    %c16_i32_101 = arith.constant 16 : i32
    %364 = vector.broadcast %c16_i32_101 : i32 to vector<1x32xi32>
    %365 = arith.cmpi sge, %280, %364 : vector<1x32xi32>
    %c24_i32 = arith.constant 24 : i32
    %366 = vector.broadcast %c24_i32 : i32 to vector<1x32xi32>
    %367 = arith.cmpi slt, %280, %366 : vector<1x32xi32>
    %368 = arith.andi %365, %367 : vector<1x32xi1>
    %cst_102 = arith.constant 1.000000e+00 : f32
    %cst_103 = arith.constant 0.000000e+00 : f32
    %369 = vector.broadcast %cst_102 : f32 to vector<1x32xf32>
    %370 = vector.broadcast %cst_103 : f32 to vector<1x32xf32>
    %371 = arith.select %368, %369, %370 : vector<1x32xi1>, vector<1x32xf32>
    %372 = vector.broadcast %371 : vector<1x32xf32> to vector<8x32xf32>
    %373 = arith.mulf %299, %372 : vector<8x32xf32>
    %374 = arith.truncf %373 : vector<8x32xf32> to vector<8x32xbf16>
    %cst_104 = arith.constant dense<0.000000e+00> : vector<8x8xf32>
    %375 = tpu.matmul %374, %301, %cst_104 {dimension_numbers = #tpu.dot_dimension_numbers<[1], [1], [0], [0], [0, 0, 1, 0], [], []>} : vector<8x32xbf16>, vector<8x32xbf16>, vector<8x8xf32> -> vector<8x8xf32>
    %376 = vector.broadcast %279 : vector<1x8xf32> to vector<8x8xf32>
    %377 = arith.addf %375, %376 : vector<8x8xf32>
    %cst_105 = arith.constant dense<0xFF800000> : vector<8xf32>
    %378 = vector.multi_reduction <maximumf>, %377, %cst_105 [1] : vector<8x8xf32> to vector<8xf32>
    %379 = vector.shape_cast %378 : vector<8xf32> to vector<8x1xf32>
    %380 = vector.broadcast %379 : vector<8x1xf32> to vector<8x8xf32>
    %381 = arith.subf %377, %380 : vector<8x8xf32>
    %382 = math.exp %381 : vector<8x8xf32>
    %cst_106 = arith.constant dense<0.000000e+00> : vector<8xf32>
    %383 = vector.multi_reduction <add>, %382, %cst_106 [1] : vector<8x8xf32> to vector<8xf32>
    %384 = vector.shape_cast %383 : vector<8xf32> to vector<8x1xf32>
    %385 = tpu.reciprocal %384 {approx = true} : vector<8x1xf32> -> vector<8x1xf32>
    %386 = vector.broadcast %385 : vector<8x1xf32> to vector<8x8xf32>
    %387 = arith.mulf %382, %386 : vector<8x8xf32>
    %388 = arith.truncf %387 : vector<8x8xf32> to vector<8x8xbf16>
    %389 = vector.broadcast %371 : vector<1x32xf32> to vector<8x32xf32>
    %390 = arith.mulf %302, %389 : vector<8x32xf32>
    %391 = arith.truncf %390 : vector<8x32xf32> to vector<8x32xbf16>
    %cst_107 = arith.constant dense<0.000000e+00> : vector<8x32xf32>
    %392 = tpu.matmul %388, %391, %cst_107 {dimension_numbers = #tpu.dot_dimension_numbers<[1], [0], [0], [1], [0, 0, 1, 1], [], []>} : vector<8x8xbf16>, vector<8x32xbf16>, vector<8x32xf32> -> vector<8x32xf32>
    %393 = arith.addf %363, %392 : vector<8x32xf32>
    %c24_i32_108 = arith.constant 24 : i32
    %394 = vector.broadcast %c24_i32_108 : i32 to vector<1x32xi32>
    %395 = arith.cmpi sge, %280, %394 : vector<1x32xi32>
    %c32_i32 = arith.constant 32 : i32
    %396 = vector.broadcast %c32_i32 : i32 to vector<1x32xi32>
    %397 = arith.cmpi slt, %280, %396 : vector<1x32xi32>
    %398 = arith.andi %395, %397 : vector<1x32xi1>
    %cst_109 = arith.constant 1.000000e+00 : f32
    %cst_110 = arith.constant 0.000000e+00 : f32
    %399 = vector.broadcast %cst_109 : f32 to vector<1x32xf32>
    %400 = vector.broadcast %cst_110 : f32 to vector<1x32xf32>
    %401 = arith.select %398, %399, %400 : vector<1x32xi1>, vector<1x32xf32>
    %402 = vector.broadcast %401 : vector<1x32xf32> to vector<8x32xf32>
    %403 = arith.mulf %299, %402 : vector<8x32xf32>
    %404 = arith.truncf %403 : vector<8x32xf32> to vector<8x32xbf16>
    %cst_111 = arith.constant dense<0.000000e+00> : vector<8x8xf32>
    %405 = tpu.matmul %404, %301, %cst_111 {dimension_numbers = #tpu.dot_dimension_numbers<[1], [1], [0], [0], [0, 0, 1, 0], [], []>} : vector<8x32xbf16>, vector<8x32xbf16>, vector<8x8xf32> -> vector<8x8xf32>
    %406 = vector.broadcast %279 : vector<1x8xf32> to vector<8x8xf32>
    %407 = arith.addf %405, %406 : vector<8x8xf32>
    %cst_112 = arith.constant dense<0xFF800000> : vector<8xf32>
    %408 = vector.multi_reduction <maximumf>, %407, %cst_112 [1] : vector<8x8xf32> to vector<8xf32>
    %409 = vector.shape_cast %408 : vector<8xf32> to vector<8x1xf32>
    %410 = vector.broadcast %409 : vector<8x1xf32> to vector<8x8xf32>
    %411 = arith.subf %407, %410 : vector<8x8xf32>
    %412 = math.exp %411 : vector<8x8xf32>
    %cst_113 = arith.constant dense<0.000000e+00> : vector<8xf32>
    %413 = vector.multi_reduction <add>, %412, %cst_113 [1] : vector<8x8xf32> to vector<8xf32>
    %414 = vector.shape_cast %413 : vector<8xf32> to vector<8x1xf32>
    %415 = tpu.reciprocal %414 {approx = true} : vector<8x1xf32> -> vector<8x1xf32>
    %416 = vector.broadcast %415 : vector<8x1xf32> to vector<8x8xf32>
    %417 = arith.mulf %412, %416 : vector<8x8xf32>
    %418 = arith.truncf %417 : vector<8x8xf32> to vector<8x8xbf16>
    %419 = vector.broadcast %401 : vector<1x32xf32> to vector<8x32xf32>
    %420 = arith.mulf %302, %419 : vector<8x32xf32>
    %421 = arith.truncf %420 : vector<8x32xf32> to vector<8x32xbf16>
    %cst_114 = arith.constant dense<0.000000e+00> : vector<8x32xf32>
    %422 = tpu.matmul %418, %421, %cst_114 {dimension_numbers = #tpu.dot_dimension_numbers<[1], [0], [0], [1], [0, 0, 1, 1], [], []>} : vector<8x8xbf16>, vector<8x32xbf16>, vector<8x32xf32> -> vector<8x32xf32>
    %423 = arith.addf %393, %422 : vector<8x32xf32>
    %424 = arith.truncf %423 : vector<8x32xf32> to vector<8x32xbf16>
    %cst_115 = arith.constant dense<0.000000e+00> : vector<8x32xf32>
    %425 = tpu.matmul %424, %284, %cst_115 {dimension_numbers = #tpu.dot_dimension_numbers<[1], [0], [0], [1], [0, 0, 1, 1], [], []>} : vector<8x32xbf16>, vector<32x32xbf16>, vector<8x32xf32> -> vector<8x32xf32>
    %426 = vector.broadcast %288 : vector<1x32xf32> to vector<8x32xf32>
    %427 = arith.addf %425, %426 : vector<8x32xf32>
    %428 = arith.addf %427, %189 : vector<8x32xf32>
    %cst_116 = arith.constant dense<0.000000e+00> : vector<8xf32>
    %429 = vector.multi_reduction <add>, %428, %cst_116 [1] : vector<8x32xf32> to vector<8xf32>
    %430 = vector.shape_cast %429 : vector<8xf32> to vector<8x1xf32>
    %cst_117 = arith.constant 3.200000e+01 : f32
    %431 = vector.broadcast %cst_117 : f32 to vector<8x1xf32>
    %432 = arith.divf %430, %431 : vector<8x1xf32>
    %433 = vector.broadcast %432 : vector<8x1xf32> to vector<8x32xf32>
    %434 = arith.subf %428, %433 : vector<8x32xf32>
    %435 = arith.mulf %434, %434 : vector<8x32xf32>
    %cst_118 = arith.constant dense<0.000000e+00> : vector<8xf32>
    %436 = vector.multi_reduction <add>, %435, %cst_118 [1] : vector<8x32xf32> to vector<8xf32>
    %437 = vector.shape_cast %436 : vector<8xf32> to vector<8x1xf32>
    %cst_119 = arith.constant 3.200000e+01 : f32
    %438 = vector.broadcast %cst_119 : f32 to vector<8x1xf32>
    %439 = arith.divf %437, %438 : vector<8x1xf32>
    %440 = vector.broadcast %432 : vector<8x1xf32> to vector<8x32xf32>
    %441 = arith.subf %428, %440 : vector<8x32xf32>
    %cst_120 = arith.constant 9.99999996E-13 : f32
    %442 = vector.broadcast %cst_120 : f32 to vector<8x1xf32>
    %443 = arith.addf %439, %442 : vector<8x1xf32>
    %444 = math.rsqrt %443 : vector<8x1xf32>
    %445 = vector.broadcast %444 : vector<8x1xf32> to vector<8x32xf32>
    %446 = arith.mulf %441, %445 : vector<8x32xf32>
    %447 = vector.broadcast %289 : vector<1x32xf32> to vector<8x32xf32>
    %448 = arith.mulf %446, %447 : vector<8x32xf32>
    %449 = vector.broadcast %290 : vector<1x32xf32> to vector<8x32xf32>
    %450 = arith.addf %448, %449 : vector<8x32xf32>
    %451 = arith.truncf %450 : vector<8x32xf32> to vector<8x32xbf16>
    %cst_121 = arith.constant dense<0.000000e+00> : vector<8x64xf32>
    %452 = tpu.matmul %451, %285, %cst_121 {dimension_numbers = #tpu.dot_dimension_numbers<[1], [0], [0], [1], [0, 0, 1, 1], [], []>} : vector<8x32xbf16>, vector<32x64xbf16>, vector<8x64xf32> -> vector<8x64xf32>
    %453 = vector.broadcast %291 : vector<1x64xf32> to vector<8x64xf32>
    %454 = arith.addf %452, %453 : vector<8x64xf32>
    %cst_122 = arith.constant 5.000000e-01 : f32
    %455 = vector.broadcast %cst_122 : f32 to vector<8x64xf32>
    %456 = arith.mulf %455, %454 : vector<8x64xf32>
    %cst_123 = arith.constant 0.707106769 : f32
    %457 = vector.broadcast %cst_123 : f32 to vector<8x64xf32>
    %458 = arith.mulf %454, %457 : vector<8x64xf32>
    %cst_124 = arith.constant 0.000000e+00 : f32
    %459 = vector.broadcast %cst_124 : f32 to vector<8x64xf32>
    %460 = arith.cmpf olt, %458, %459 : vector<8x64xf32>
    %cst_125 = arith.constant -1.000000e+00 : f32
    %cst_126 = arith.constant 1.000000e+00 : f32
    %461 = vector.broadcast %cst_125 : f32 to vector<8x64xf32>
    %462 = vector.broadcast %cst_126 : f32 to vector<8x64xf32>
    %463 = arith.select %460, %461, %462 : vector<8x64xi1>, vector<8x64xf32>
    %464 = math.absf %458 : vector<8x64xf32>
    %cst_127 = arith.constant 0.327591091 : f32
    %465 = vector.broadcast %cst_127 : f32 to vector<8x64xf32>
    %466 = arith.mulf %465, %464 : vector<8x64xf32>
    %cst_128 = arith.constant 1.000000e+00 : f32
    %467 = vector.broadcast %cst_128 : f32 to vector<8x64xf32>
    %468 = arith.addf %467, %466 : vector<8x64xf32>
    %cst_129 = arith.constant 1.000000e+00 : f32
    %469 = vector.broadcast %cst_129 : f32 to vector<8x64xf32>
    %470 = arith.divf %469, %468 : vector<8x64xf32>
    %cst_130 = arith.constant 1.06140542 : f32
    %471 = vector.broadcast %cst_130 : f32 to vector<8x64xf32>
    %472 = arith.mulf %471, %470 : vector<8x64xf32>
    %cst_131 = arith.constant -1.45315206 : f32
    %473 = vector.broadcast %cst_131 : f32 to vector<8x64xf32>
    %474 = arith.addf %472, %473 : vector<8x64xf32>
    %475 = arith.mulf %474, %470 : vector<8x64xf32>
    %cst_132 = arith.constant 1.42141378 : f32
    %476 = vector.broadcast %cst_132 : f32 to vector<8x64xf32>
    %477 = arith.addf %475, %476 : vector<8x64xf32>
    %478 = arith.mulf %477, %470 : vector<8x64xf32>
    %cst_133 = arith.constant -0.284496725 : f32
    %479 = vector.broadcast %cst_133 : f32 to vector<8x64xf32>
    %480 = arith.addf %478, %479 : vector<8x64xf32>
    %481 = arith.mulf %480, %470 : vector<8x64xf32>
    %cst_134 = arith.constant 0.254829586 : f32
    %482 = vector.broadcast %cst_134 : f32 to vector<8x64xf32>
    %483 = arith.addf %481, %482 : vector<8x64xf32>
    %484 = arith.mulf %483, %470 : vector<8x64xf32>
    %cst_135 = arith.constant 0.000000e+00 : f32
    %485 = vector.broadcast %cst_135 : f32 to vector<8x64xf32>
    %486 = arith.subf %485, %464 : vector<8x64xf32>
    %487 = arith.mulf %486, %464 : vector<8x64xf32>
    %488 = math.exp %487 : vector<8x64xf32>
    %489 = arith.mulf %484, %488 : vector<8x64xf32>
    %cst_136 = arith.constant 1.000000e+00 : f32
    %490 = vector.broadcast %cst_136 : f32 to vector<8x64xf32>
    %491 = arith.subf %490, %489 : vector<8x64xf32>
    %492 = arith.mulf %463, %491 : vector<8x64xf32>
    %cst_137 = arith.constant 1.000000e+00 : f32
    %493 = vector.broadcast %cst_137 : f32 to vector<8x64xf32>
    %494 = arith.addf %493, %492 : vector<8x64xf32>
    %495 = arith.mulf %456, %494 : vector<8x64xf32>
    %496 = arith.truncf %495 : vector<8x64xf32> to vector<8x64xbf16>
    %cst_138 = arith.constant dense<0.000000e+00> : vector<8x32xf32>
    %497 = tpu.matmul %496, %286, %cst_138 {dimension_numbers = #tpu.dot_dimension_numbers<[1], [0], [0], [1], [0, 0, 1, 1], [], []>} : vector<8x64xbf16>, vector<64x32xbf16>, vector<8x32xf32> -> vector<8x32xf32>
    %498 = vector.broadcast %292 : vector<1x32xf32> to vector<8x32xf32>
    %499 = arith.addf %497, %498 : vector<8x32xf32>
    %500 = arith.addf %499, %450 : vector<8x32xf32>
    %cst_139 = arith.constant dense<0.000000e+00> : vector<8xf32>
    %501 = vector.multi_reduction <add>, %500, %cst_139 [1] : vector<8x32xf32> to vector<8xf32>
    %502 = vector.shape_cast %501 : vector<8xf32> to vector<8x1xf32>
    %cst_140 = arith.constant 3.200000e+01 : f32
    %503 = vector.broadcast %cst_140 : f32 to vector<8x1xf32>
    %504 = arith.divf %502, %503 : vector<8x1xf32>
    %505 = vector.broadcast %504 : vector<8x1xf32> to vector<8x32xf32>
    %506 = arith.subf %500, %505 : vector<8x32xf32>
    %507 = arith.mulf %506, %506 : vector<8x32xf32>
    %cst_141 = arith.constant dense<0.000000e+00> : vector<8xf32>
    %508 = vector.multi_reduction <add>, %507, %cst_141 [1] : vector<8x32xf32> to vector<8xf32>
    %509 = vector.shape_cast %508 : vector<8xf32> to vector<8x1xf32>
    %cst_142 = arith.constant 3.200000e+01 : f32
    %510 = vector.broadcast %cst_142 : f32 to vector<8x1xf32>
    %511 = arith.divf %509, %510 : vector<8x1xf32>
    %512 = vector.broadcast %504 : vector<8x1xf32> to vector<8x32xf32>
    %513 = arith.subf %500, %512 : vector<8x32xf32>
    %cst_143 = arith.constant 9.99999996E-13 : f32
    %514 = vector.broadcast %cst_143 : f32 to vector<8x1xf32>
    %515 = arith.addf %511, %514 : vector<8x1xf32>
    %516 = math.rsqrt %515 : vector<8x1xf32>
    %517 = vector.broadcast %516 : vector<8x1xf32> to vector<8x32xf32>
    %518 = arith.mulf %513, %517 : vector<8x32xf32>
    %519 = vector.broadcast %293 : vector<1x32xf32> to vector<8x32xf32>
    %520 = arith.mulf %518, %519 : vector<8x32xf32>
    %521 = vector.broadcast %294 : vector<1x32xf32> to vector<8x32xf32>
    %522 = arith.addf %520, %521 : vector<8x32xf32>
    %c1_144 = arith.constant 1 : index
    %c0_145 = arith.constant 0 : index
    %c0_146 = arith.constant 0 : index
    %523 = vector.load %arg5[%c1_144, %c0_145, %c0_146] : memref<2x160x96xbf16, #tpu.memory_space<vmem>>, vector<1x160x96xbf16>
    %524 = vector.shape_cast %523 : vector<1x160x96xbf16> to vector<160x96xbf16>
    %525 = vector.extract_strided_slice %524 {offsets = [0, 0], sizes = [32, 96], strides = [1, 1]} : vector<160x96xbf16> to vector<32x96xbf16>
    %526 = vector.extract_strided_slice %524 {offsets = [32, 0], sizes = [32, 32], strides = [1, 1]} : vector<160x96xbf16> to vector<32x32xbf16>
    %527 = vector.extract_strided_slice %524 {offsets = [64, 0], sizes = [32, 64], strides = [1, 1]} : vector<160x96xbf16> to vector<32x64xbf16>
    %528 = vector.extract_strided_slice %524 {offsets = [96, 0], sizes = [64, 32], strides = [1, 1]} : vector<160x96xbf16> to vector<64x32xbf16>
    %529 = vector.extract_strided_slice %0 {offsets = [10, 0], sizes = [1, 96], strides = [1, 1]} : vector<18x96xf32> to vector<1x96xf32>
    %530 = vector.extract_strided_slice %0 {offsets = [11, 0], sizes = [1, 32], strides = [1, 1]} : vector<18x96xf32> to vector<1x32xf32>
    %531 = vector.extract_strided_slice %0 {offsets = [12, 0], sizes = [1, 32], strides = [1, 1]} : vector<18x96xf32> to vector<1x32xf32>
    %532 = vector.extract_strided_slice %0 {offsets = [13, 0], sizes = [1, 32], strides = [1, 1]} : vector<18x96xf32> to vector<1x32xf32>
    %533 = vector.extract_strided_slice %0 {offsets = [14, 0], sizes = [1, 64], strides = [1, 1]} : vector<18x96xf32> to vector<1x64xf32>
    %534 = vector.extract_strided_slice %0 {offsets = [15, 0], sizes = [1, 32], strides = [1, 1]} : vector<18x96xf32> to vector<1x32xf32>
    %535 = vector.extract_strided_slice %0 {offsets = [16, 0], sizes = [1, 32], strides = [1, 1]} : vector<18x96xf32> to vector<1x32xf32>
    %536 = vector.extract_strided_slice %0 {offsets = [17, 0], sizes = [1, 32], strides = [1, 1]} : vector<18x96xf32> to vector<1x32xf32>
    %537 = arith.truncf %522 : vector<8x32xf32> to vector<8x32xbf16>
    %cst_147 = arith.constant dense<0.000000e+00> : vector<8x96xf32>
    %538 = tpu.matmul %537, %525, %cst_147 {dimension_numbers = #tpu.dot_dimension_numbers<[1], [0], [0], [1], [0, 0, 1, 1], [], []>} : vector<8x32xbf16>, vector<32x96xbf16>, vector<8x96xf32> -> vector<8x96xf32>
    %539 = vector.broadcast %529 : vector<1x96xf32> to vector<8x96xf32>
    %540 = arith.addf %538, %539 : vector<8x96xf32>
    %541 = vector.extract_strided_slice %540 {offsets = [0, 0], sizes = [8, 32], strides = [1, 1]} : vector<8x96xf32> to vector<8x32xf32>
    %542 = vector.extract_strided_slice %540 {offsets = [0, 32], sizes = [8, 32], strides = [1, 1]} : vector<8x96xf32> to vector<8x32xf32>
    %543 = arith.truncf %542 : vector<8x32xf32> to vector<8x32xbf16>
    %544 = vector.extract_strided_slice %540 {offsets = [0, 64], sizes = [8, 32], strides = [1, 1]} : vector<8x96xf32> to vector<8x32xf32>
    %cst_148 = arith.constant 0.000000e+00 : f32
    %545 = vector.broadcast %cst_148 : f32 to vector<8x32xf32>
    %c0_i32_149 = arith.constant 0 : i32
    %546 = vector.broadcast %c0_i32_149 : i32 to vector<1x32xi32>
    %547 = arith.cmpi sge, %280, %546 : vector<1x32xi32>
    %c8_i32_150 = arith.constant 8 : i32
    %548 = vector.broadcast %c8_i32_150 : i32 to vector<1x32xi32>
    %549 = arith.cmpi slt, %280, %548 : vector<1x32xi32>
    %550 = arith.andi %547, %549 : vector<1x32xi1>
    %cst_151 = arith.constant 1.000000e+00 : f32
    %cst_152 = arith.constant 0.000000e+00 : f32
    %551 = vector.broadcast %cst_151 : f32 to vector<1x32xf32>
    %552 = vector.broadcast %cst_152 : f32 to vector<1x32xf32>
    %553 = arith.select %550, %551, %552 : vector<1x32xi1>, vector<1x32xf32>
    %554 = vector.broadcast %553 : vector<1x32xf32> to vector<8x32xf32>
    %555 = arith.mulf %541, %554 : vector<8x32xf32>
    %556 = arith.truncf %555 : vector<8x32xf32> to vector<8x32xbf16>
    %cst_153 = arith.constant dense<0.000000e+00> : vector<8x8xf32>
    %557 = tpu.matmul %556, %543, %cst_153 {dimension_numbers = #tpu.dot_dimension_numbers<[1], [1], [0], [0], [0, 0, 1, 0], [], []>} : vector<8x32xbf16>, vector<8x32xbf16>, vector<8x8xf32> -> vector<8x8xf32>
    %558 = vector.broadcast %279 : vector<1x8xf32> to vector<8x8xf32>
    %559 = arith.addf %557, %558 : vector<8x8xf32>
    %cst_154 = arith.constant dense<0xFF800000> : vector<8xf32>
    %560 = vector.multi_reduction <maximumf>, %559, %cst_154 [1] : vector<8x8xf32> to vector<8xf32>
    %561 = vector.shape_cast %560 : vector<8xf32> to vector<8x1xf32>
    %562 = vector.broadcast %561 : vector<8x1xf32> to vector<8x8xf32>
    %563 = arith.subf %559, %562 : vector<8x8xf32>
    %564 = math.exp %563 : vector<8x8xf32>
    %cst_155 = arith.constant dense<0.000000e+00> : vector<8xf32>
    %565 = vector.multi_reduction <add>, %564, %cst_155 [1] : vector<8x8xf32> to vector<8xf32>
    %566 = vector.shape_cast %565 : vector<8xf32> to vector<8x1xf32>
    %567 = tpu.reciprocal %566 {approx = true} : vector<8x1xf32> -> vector<8x1xf32>
    %568 = vector.broadcast %567 : vector<8x1xf32> to vector<8x8xf32>
    %569 = arith.mulf %564, %568 : vector<8x8xf32>
    %570 = arith.truncf %569 : vector<8x8xf32> to vector<8x8xbf16>
    %571 = vector.broadcast %553 : vector<1x32xf32> to vector<8x32xf32>
    %572 = arith.mulf %544, %571 : vector<8x32xf32>
    %573 = arith.truncf %572 : vector<8x32xf32> to vector<8x32xbf16>
    %cst_156 = arith.constant dense<0.000000e+00> : vector<8x32xf32>
    %574 = tpu.matmul %570, %573, %cst_156 {dimension_numbers = #tpu.dot_dimension_numbers<[1], [0], [0], [1], [0, 0, 1, 1], [], []>} : vector<8x8xbf16>, vector<8x32xbf16>, vector<8x32xf32> -> vector<8x32xf32>
    %575 = arith.addf %545, %574 : vector<8x32xf32>
    %c8_i32_157 = arith.constant 8 : i32
    %576 = vector.broadcast %c8_i32_157 : i32 to vector<1x32xi32>
    %577 = arith.cmpi sge, %280, %576 : vector<1x32xi32>
    %c16_i32_158 = arith.constant 16 : i32
    %578 = vector.broadcast %c16_i32_158 : i32 to vector<1x32xi32>
    %579 = arith.cmpi slt, %280, %578 : vector<1x32xi32>
    %580 = arith.andi %577, %579 : vector<1x32xi1>
    %cst_159 = arith.constant 1.000000e+00 : f32
    %cst_160 = arith.constant 0.000000e+00 : f32
    %581 = vector.broadcast %cst_159 : f32 to vector<1x32xf32>
    %582 = vector.broadcast %cst_160 : f32 to vector<1x32xf32>
    %583 = arith.select %580, %581, %582 : vector<1x32xi1>, vector<1x32xf32>
    %584 = vector.broadcast %583 : vector<1x32xf32> to vector<8x32xf32>
    %585 = arith.mulf %541, %584 : vector<8x32xf32>
    %586 = arith.truncf %585 : vector<8x32xf32> to vector<8x32xbf16>
    %cst_161 = arith.constant dense<0.000000e+00> : vector<8x8xf32>
    %587 = tpu.matmul %586, %543, %cst_161 {dimension_numbers = #tpu.dot_dimension_numbers<[1], [1], [0], [0], [0, 0, 1, 0], [], []>} : vector<8x32xbf16>, vector<8x32xbf16>, vector<8x8xf32> -> vector<8x8xf32>
    %588 = vector.broadcast %279 : vector<1x8xf32> to vector<8x8xf32>
    %589 = arith.addf %587, %588 : vector<8x8xf32>
    %cst_162 = arith.constant dense<0xFF800000> : vector<8xf32>
    %590 = vector.multi_reduction <maximumf>, %589, %cst_162 [1] : vector<8x8xf32> to vector<8xf32>
    %591 = vector.shape_cast %590 : vector<8xf32> to vector<8x1xf32>
    %592 = vector.broadcast %591 : vector<8x1xf32> to vector<8x8xf32>
    %593 = arith.subf %589, %592 : vector<8x8xf32>
    %594 = math.exp %593 : vector<8x8xf32>
    %cst_163 = arith.constant dense<0.000000e+00> : vector<8xf32>
    %595 = vector.multi_reduction <add>, %594, %cst_163 [1] : vector<8x8xf32> to vector<8xf32>
    %596 = vector.shape_cast %595 : vector<8xf32> to vector<8x1xf32>
    %597 = tpu.reciprocal %596 {approx = true} : vector<8x1xf32> -> vector<8x1xf32>
    %598 = vector.broadcast %597 : vector<8x1xf32> to vector<8x8xf32>
    %599 = arith.mulf %594, %598 : vector<8x8xf32>
    %600 = arith.truncf %599 : vector<8x8xf32> to vector<8x8xbf16>
    %601 = vector.broadcast %583 : vector<1x32xf32> to vector<8x32xf32>
    %602 = arith.mulf %544, %601 : vector<8x32xf32>
    %603 = arith.truncf %602 : vector<8x32xf32> to vector<8x32xbf16>
    %cst_164 = arith.constant dense<0.000000e+00> : vector<8x32xf32>
    %604 = tpu.matmul %600, %603, %cst_164 {dimension_numbers = #tpu.dot_dimension_numbers<[1], [0], [0], [1], [0, 0, 1, 1], [], []>} : vector<8x8xbf16>, vector<8x32xbf16>, vector<8x32xf32> -> vector<8x32xf32>
    %605 = arith.addf %575, %604 : vector<8x32xf32>
    %c16_i32_165 = arith.constant 16 : i32
    %606 = vector.broadcast %c16_i32_165 : i32 to vector<1x32xi32>
    %607 = arith.cmpi sge, %280, %606 : vector<1x32xi32>
    %c24_i32_166 = arith.constant 24 : i32
    %608 = vector.broadcast %c24_i32_166 : i32 to vector<1x32xi32>
    %609 = arith.cmpi slt, %280, %608 : vector<1x32xi32>
    %610 = arith.andi %607, %609 : vector<1x32xi1>
    %cst_167 = arith.constant 1.000000e+00 : f32
    %cst_168 = arith.constant 0.000000e+00 : f32
    %611 = vector.broadcast %cst_167 : f32 to vector<1x32xf32>
    %612 = vector.broadcast %cst_168 : f32 to vector<1x32xf32>
    %613 = arith.select %610, %611, %612 : vector<1x32xi1>, vector<1x32xf32>
    %614 = vector.broadcast %613 : vector<1x32xf32> to vector<8x32xf32>
    %615 = arith.mulf %541, %614 : vector<8x32xf32>
    %616 = arith.truncf %615 : vector<8x32xf32> to vector<8x32xbf16>
    %cst_169 = arith.constant dense<0.000000e+00> : vector<8x8xf32>
    %617 = tpu.matmul %616, %543, %cst_169 {dimension_numbers = #tpu.dot_dimension_numbers<[1], [1], [0], [0], [0, 0, 1, 0], [], []>} : vector<8x32xbf16>, vector<8x32xbf16>, vector<8x8xf32> -> vector<8x8xf32>
    %618 = vector.broadcast %279 : vector<1x8xf32> to vector<8x8xf32>
    %619 = arith.addf %617, %618 : vector<8x8xf32>
    %cst_170 = arith.constant dense<0xFF800000> : vector<8xf32>
    %620 = vector.multi_reduction <maximumf>, %619, %cst_170 [1] : vector<8x8xf32> to vector<8xf32>
    %621 = vector.shape_cast %620 : vector<8xf32> to vector<8x1xf32>
    %622 = vector.broadcast %621 : vector<8x1xf32> to vector<8x8xf32>
    %623 = arith.subf %619, %622 : vector<8x8xf32>
    %624 = math.exp %623 : vector<8x8xf32>
    %cst_171 = arith.constant dense<0.000000e+00> : vector<8xf32>
    %625 = vector.multi_reduction <add>, %624, %cst_171 [1] : vector<8x8xf32> to vector<8xf32>
    %626 = vector.shape_cast %625 : vector<8xf32> to vector<8x1xf32>
    %627 = tpu.reciprocal %626 {approx = true} : vector<8x1xf32> -> vector<8x1xf32>
    %628 = vector.broadcast %627 : vector<8x1xf32> to vector<8x8xf32>
    %629 = arith.mulf %624, %628 : vector<8x8xf32>
    %630 = arith.truncf %629 : vector<8x8xf32> to vector<8x8xbf16>
    %631 = vector.broadcast %613 : vector<1x32xf32> to vector<8x32xf32>
    %632 = arith.mulf %544, %631 : vector<8x32xf32>
    %633 = arith.truncf %632 : vector<8x32xf32> to vector<8x32xbf16>
    %cst_172 = arith.constant dense<0.000000e+00> : vector<8x32xf32>
    %634 = tpu.matmul %630, %633, %cst_172 {dimension_numbers = #tpu.dot_dimension_numbers<[1], [0], [0], [1], [0, 0, 1, 1], [], []>} : vector<8x8xbf16>, vector<8x32xbf16>, vector<8x32xf32> -> vector<8x32xf32>
    %635 = arith.addf %605, %634 : vector<8x32xf32>
    %c24_i32_173 = arith.constant 24 : i32
    %636 = vector.broadcast %c24_i32_173 : i32 to vector<1x32xi32>
    %637 = arith.cmpi sge, %280, %636 : vector<1x32xi32>
    %c32_i32_174 = arith.constant 32 : i32
    %638 = vector.broadcast %c32_i32_174 : i32 to vector<1x32xi32>
    %639 = arith.cmpi slt, %280, %638 : vector<1x32xi32>
    %640 = arith.andi %637, %639 : vector<1x32xi1>
    %cst_175 = arith.constant 1.000000e+00 : f32
    %cst_176 = arith.constant 0.000000e+00 : f32
    %641 = vector.broadcast %cst_175 : f32 to vector<1x32xf32>
    %642 = vector.broadcast %cst_176 : f32 to vector<1x32xf32>
    %643 = arith.select %640, %641, %642 : vector<1x32xi1>, vector<1x32xf32>
    %644 = vector.broadcast %643 : vector<1x32xf32> to vector<8x32xf32>
    %645 = arith.mulf %541, %644 : vector<8x32xf32>
    %646 = arith.truncf %645 : vector<8x32xf32> to vector<8x32xbf16>
    %cst_177 = arith.constant dense<0.000000e+00> : vector<8x8xf32>
    %647 = tpu.matmul %646, %543, %cst_177 {dimension_numbers = #tpu.dot_dimension_numbers<[1], [1], [0], [0], [0, 0, 1, 0], [], []>} : vector<8x32xbf16>, vector<8x32xbf16>, vector<8x8xf32> -> vector<8x8xf32>
    %648 = vector.broadcast %279 : vector<1x8xf32> to vector<8x8xf32>
    %649 = arith.addf %647, %648 : vector<8x8xf32>
    %cst_178 = arith.constant dense<0xFF800000> : vector<8xf32>
    %650 = vector.multi_reduction <maximumf>, %649, %cst_178 [1] : vector<8x8xf32> to vector<8xf32>
    %651 = vector.shape_cast %650 : vector<8xf32> to vector<8x1xf32>
    %652 = vector.broadcast %651 : vector<8x1xf32> to vector<8x8xf32>
    %653 = arith.subf %649, %652 : vector<8x8xf32>
    %654 = math.exp %653 : vector<8x8xf32>
    %cst_179 = arith.constant dense<0.000000e+00> : vector<8xf32>
    %655 = vector.multi_reduction <add>, %654, %cst_179 [1] : vector<8x8xf32> to vector<8xf32>
    %656 = vector.shape_cast %655 : vector<8xf32> to vector<8x1xf32>
    %657 = tpu.reciprocal %656 {approx = true} : vector<8x1xf32> -> vector<8x1xf32>
    %658 = vector.broadcast %657 : vector<8x1xf32> to vector<8x8xf32>
    %659 = arith.mulf %654, %658 : vector<8x8xf32>
    %660 = arith.truncf %659 : vector<8x8xf32> to vector<8x8xbf16>
    %661 = vector.broadcast %643 : vector<1x32xf32> to vector<8x32xf32>
    %662 = arith.mulf %544, %661 : vector<8x32xf32>
    %663 = arith.truncf %662 : vector<8x32xf32> to vector<8x32xbf16>
    %cst_180 = arith.constant dense<0.000000e+00> : vector<8x32xf32>
    %664 = tpu.matmul %660, %663, %cst_180 {dimension_numbers = #tpu.dot_dimension_numbers<[1], [0], [0], [1], [0, 0, 1, 1], [], []>} : vector<8x8xbf16>, vector<8x32xbf16>, vector<8x32xf32> -> vector<8x32xf32>
    %665 = arith.addf %635, %664 : vector<8x32xf32>
    %666 = arith.truncf %665 : vector<8x32xf32> to vector<8x32xbf16>
    %cst_181 = arith.constant dense<0.000000e+00> : vector<8x32xf32>
    %667 = tpu.matmul %666, %526, %cst_181 {dimension_numbers = #tpu.dot_dimension_numbers<[1], [0], [0], [1], [0, 0, 1, 1], [], []>} : vector<8x32xbf16>, vector<32x32xbf16>, vector<8x32xf32> -> vector<8x32xf32>
    %668 = vector.broadcast %530 : vector<1x32xf32> to vector<8x32xf32>
    %669 = arith.addf %667, %668 : vector<8x32xf32>
    %670 = arith.addf %669, %522 : vector<8x32xf32>
    %cst_182 = arith.constant dense<0.000000e+00> : vector<8xf32>
    %671 = vector.multi_reduction <add>, %670, %cst_182 [1] : vector<8x32xf32> to vector<8xf32>
    %672 = vector.shape_cast %671 : vector<8xf32> to vector<8x1xf32>
    %cst_183 = arith.constant 3.200000e+01 : f32
    %673 = vector.broadcast %cst_183 : f32 to vector<8x1xf32>
    %674 = arith.divf %672, %673 : vector<8x1xf32>
    %675 = vector.broadcast %674 : vector<8x1xf32> to vector<8x32xf32>
    %676 = arith.subf %670, %675 : vector<8x32xf32>
    %677 = arith.mulf %676, %676 : vector<8x32xf32>
    %cst_184 = arith.constant dense<0.000000e+00> : vector<8xf32>
    %678 = vector.multi_reduction <add>, %677, %cst_184 [1] : vector<8x32xf32> to vector<8xf32>
    %679 = vector.shape_cast %678 : vector<8xf32> to vector<8x1xf32>
    %cst_185 = arith.constant 3.200000e+01 : f32
    %680 = vector.broadcast %cst_185 : f32 to vector<8x1xf32>
    %681 = arith.divf %679, %680 : vector<8x1xf32>
    %682 = vector.broadcast %674 : vector<8x1xf32> to vector<8x32xf32>
    %683 = arith.subf %670, %682 : vector<8x32xf32>
    %cst_186 = arith.constant 9.99999996E-13 : f32
    %684 = vector.broadcast %cst_186 : f32 to vector<8x1xf32>
    %685 = arith.addf %681, %684 : vector<8x1xf32>
    %686 = math.rsqrt %685 : vector<8x1xf32>
    %687 = vector.broadcast %686 : vector<8x1xf32> to vector<8x32xf32>
    %688 = arith.mulf %683, %687 : vector<8x32xf32>
    %689 = vector.broadcast %531 : vector<1x32xf32> to vector<8x32xf32>
    %690 = arith.mulf %688, %689 : vector<8x32xf32>
    %691 = vector.broadcast %532 : vector<1x32xf32> to vector<8x32xf32>
    %692 = arith.addf %690, %691 : vector<8x32xf32>
    %693 = arith.truncf %692 : vector<8x32xf32> to vector<8x32xbf16>
    %cst_187 = arith.constant dense<0.000000e+00> : vector<8x64xf32>
    %694 = tpu.matmul %693, %527, %cst_187 {dimension_numbers = #tpu.dot_dimension_numbers<[1], [0], [0], [1], [0, 0, 1, 1], [], []>} : vector<8x32xbf16>, vector<32x64xbf16>, vector<8x64xf32> -> vector<8x64xf32>
    %695 = vector.broadcast %533 : vector<1x64xf32> to vector<8x64xf32>
    %696 = arith.addf %694, %695 : vector<8x64xf32>
    %cst_188 = arith.constant 5.000000e-01 : f32
    %697 = vector.broadcast %cst_188 : f32 to vector<8x64xf32>
    %698 = arith.mulf %697, %696 : vector<8x64xf32>
    %cst_189 = arith.constant 0.707106769 : f32
    %699 = vector.broadcast %cst_189 : f32 to vector<8x64xf32>
    %700 = arith.mulf %696, %699 : vector<8x64xf32>
    %cst_190 = arith.constant 0.000000e+00 : f32
    %701 = vector.broadcast %cst_190 : f32 to vector<8x64xf32>
    %702 = arith.cmpf olt, %700, %701 : vector<8x64xf32>
    %cst_191 = arith.constant -1.000000e+00 : f32
    %cst_192 = arith.constant 1.000000e+00 : f32
    %703 = vector.broadcast %cst_191 : f32 to vector<8x64xf32>
    %704 = vector.broadcast %cst_192 : f32 to vector<8x64xf32>
    %705 = arith.select %702, %703, %704 : vector<8x64xi1>, vector<8x64xf32>
    %706 = math.absf %700 : vector<8x64xf32>
    %cst_193 = arith.constant 0.327591091 : f32
    %707 = vector.broadcast %cst_193 : f32 to vector<8x64xf32>
    %708 = arith.mulf %707, %706 : vector<8x64xf32>
    %cst_194 = arith.constant 1.000000e+00 : f32
    %709 = vector.broadcast %cst_194 : f32 to vector<8x64xf32>
    %710 = arith.addf %709, %708 : vector<8x64xf32>
    %cst_195 = arith.constant 1.000000e+00 : f32
    %711 = vector.broadcast %cst_195 : f32 to vector<8x64xf32>
    %712 = arith.divf %711, %710 : vector<8x64xf32>
    %cst_196 = arith.constant 1.06140542 : f32
    %713 = vector.broadcast %cst_196 : f32 to vector<8x64xf32>
    %714 = arith.mulf %713, %712 : vector<8x64xf32>
    %cst_197 = arith.constant -1.45315206 : f32
    %715 = vector.broadcast %cst_197 : f32 to vector<8x64xf32>
    %716 = arith.addf %714, %715 : vector<8x64xf32>
    %717 = arith.mulf %716, %712 : vector<8x64xf32>
    %cst_198 = arith.constant 1.42141378 : f32
    %718 = vector.broadcast %cst_198 : f32 to vector<8x64xf32>
    %719 = arith.addf %717, %718 : vector<8x64xf32>
    %720 = arith.mulf %719, %712 : vector<8x64xf32>
    %cst_199 = arith.constant -0.284496725 : f32
    %721 = vector.broadcast %cst_199 : f32 to vector<8x64xf32>
    %722 = arith.addf %720, %721 : vector<8x64xf32>
    %723 = arith.mulf %722, %712 : vector<8x64xf32>
    %cst_200 = arith.constant 0.254829586 : f32
    %724 = vector.broadcast %cst_200 : f32 to vector<8x64xf32>
    %725 = arith.addf %723, %724 : vector<8x64xf32>
    %726 = arith.mulf %725, %712 : vector<8x64xf32>
    %cst_201 = arith.constant 0.000000e+00 : f32
    %727 = vector.broadcast %cst_201 : f32 to vector<8x64xf32>
    %728 = arith.subf %727, %706 : vector<8x64xf32>
    %729 = arith.mulf %728, %706 : vector<8x64xf32>
    %730 = math.exp %729 : vector<8x64xf32>
    %731 = arith.mulf %726, %730 : vector<8x64xf32>
    %cst_202 = arith.constant 1.000000e+00 : f32
    %732 = vector.broadcast %cst_202 : f32 to vector<8x64xf32>
    %733 = arith.subf %732, %731 : vector<8x64xf32>
    %734 = arith.mulf %705, %733 : vector<8x64xf32>
    %cst_203 = arith.constant 1.000000e+00 : f32
    %735 = vector.broadcast %cst_203 : f32 to vector<8x64xf32>
    %736 = arith.addf %735, %734 : vector<8x64xf32>
    %737 = arith.mulf %698, %736 : vector<8x64xf32>
    %738 = arith.truncf %737 : vector<8x64xf32> to vector<8x64xbf16>
    %cst_204 = arith.constant dense<0.000000e+00> : vector<8x32xf32>
    %739 = tpu.matmul %738, %528, %cst_204 {dimension_numbers = #tpu.dot_dimension_numbers<[1], [0], [0], [1], [0, 0, 1, 1], [], []>} : vector<8x64xbf16>, vector<64x32xbf16>, vector<8x32xf32> -> vector<8x32xf32>
    %740 = vector.broadcast %534 : vector<1x32xf32> to vector<8x32xf32>
    %741 = arith.addf %739, %740 : vector<8x32xf32>
    %742 = arith.addf %741, %692 : vector<8x32xf32>
    %cst_205 = arith.constant dense<0.000000e+00> : vector<8xf32>
    %743 = vector.multi_reduction <add>, %742, %cst_205 [1] : vector<8x32xf32> to vector<8xf32>
    %744 = vector.shape_cast %743 : vector<8xf32> to vector<8x1xf32>
    %cst_206 = arith.constant 3.200000e+01 : f32
    %745 = vector.broadcast %cst_206 : f32 to vector<8x1xf32>
    %746 = arith.divf %744, %745 : vector<8x1xf32>
    %747 = vector.broadcast %746 : vector<8x1xf32> to vector<8x32xf32>
    %748 = arith.subf %742, %747 : vector<8x32xf32>
    %749 = arith.mulf %748, %748 : vector<8x32xf32>
    %cst_207 = arith.constant dense<0.000000e+00> : vector<8xf32>
    %750 = vector.multi_reduction <add>, %749, %cst_207 [1] : vector<8x32xf32> to vector<8xf32>
    %751 = vector.shape_cast %750 : vector<8xf32> to vector<8x1xf32>
    %cst_208 = arith.constant 3.200000e+01 : f32
    %752 = vector.broadcast %cst_208 : f32 to vector<8x1xf32>
    %753 = arith.divf %751, %752 : vector<8x1xf32>
    %754 = vector.broadcast %746 : vector<8x1xf32> to vector<8x32xf32>
    %755 = arith.subf %742, %754 : vector<8x32xf32>
    %cst_209 = arith.constant 9.99999996E-13 : f32
    %756 = vector.broadcast %cst_209 : f32 to vector<8x1xf32>
    %757 = arith.addf %753, %756 : vector<8x1xf32>
    %758 = math.rsqrt %757 : vector<8x1xf32>
    %759 = vector.broadcast %758 : vector<8x1xf32> to vector<8x32xf32>
    %760 = arith.mulf %755, %759 : vector<8x32xf32>
    %761 = vector.broadcast %535 : vector<1x32xf32> to vector<8x32xf32>
    %762 = arith.mulf %760, %761 : vector<8x32xf32>
    %763 = vector.broadcast %536 : vector<1x32xf32> to vector<8x32xf32>
    %764 = arith.addf %762, %763 : vector<8x32xf32>
    %765 = vector.extract_strided_slice %764 {offsets = [0, 0], sizes = [1, 32], strides = [1, 1]} : vector<8x32xf32> to vector<1x32xf32>
    %766 = vector.shape_cast %765 : vector<1x32xf32> to vector<1x1x32xf32>
    %c0_210 = arith.constant 0 : index
    %c0_211 = arith.constant 0 : index
    %c0_212 = arith.constant 0 : index
    %767 = vector.load %arg7[%c0_210, %c0_211, %c0_212] : memref<1x1x32xf32, #tpu.memory_space<vmem>>, vector<1x1x32xf32>
    tpu.vector_store %arg7[%c0_210, %c0_211, %c0_212], %766 {strides = array<i32>} : memref<1x1x32xf32, #tpu.memory_space<vmem>>, vector<1x1x32xf32>,
    return
  }
  func.func @transform_0(%arg0: i32, %arg1: memref<2x8xi32, #tpu.memory_space<smem>>, %arg2: memref<2x8xi32, #tpu.memory_space<smem>>, %arg3: memref<2x8xi32, #tpu.memory_space<smem>>) -> (i32, i32) {
    %c0_i32 = arith.constant 0 : i32
    %c0_i32_0 = arith.constant 0 : i32
    %c0_i32_1 = arith.constant 0 : i32
    return %c0_i32, %c0_i32_0 : i32, i32
  }
  func.func @transform_1(%arg0: i32, %arg1: memref<2x8xi32, #tpu.memory_space<smem>>, %arg2: memref<2x8xi32, #tpu.memory_space<smem>>, %arg3: memref<2x8xi32, #tpu.memory_space<smem>>) -> (i32, i32, i32) {
    %c0_i32 = arith.constant 0 : i32
    %c0_i32_0 = arith.constant 0 : i32
    %c0_i32_1 = arith.constant 0 : i32
    %c0_i32_2 = arith.constant 0 : i32
    return %c0_i32, %c0_i32_0, %c0_i32_1 : i32, i32, i32
  }
  func.func @transform_2(%arg0: i32, %arg1: memref<2x8xi32, #tpu.memory_space<smem>>, %arg2: memref<2x8xi32, #tpu.memory_space<smem>>, %arg3: memref<2x8xi32, #tpu.memory_space<smem>>) -> (i32, i32) {
    %c0_i32 = arith.constant 0 : i32
    %c0_i32_0 = arith.constant 0 : i32
    %c0_i32_1 = arith.constant 0 : i32
    return %c0_i32, %c0_i32_0 : i32, i32
  }
  func.func @transform_3(%arg0: i32, %arg1: memref<2x8xi32, #tpu.memory_space<smem>>, %arg2: memref<2x8xi32, #tpu.memory_space<smem>>, %arg3: memref<2x8xi32, #tpu.memory_space<smem>>) -> (i32, i32, i32) {
    %c0_i32 = arith.constant 0 : i32
    %c0_i32_0 = arith.constant 0 : i32
    %c0_i32_1 = arith.constant 0 : i32
    return %arg0, %c0_i32, %c0_i32_0 : i32, i32, i32
  }
}

</mosaic_0001>

<llo_original>
// kernel: bert_forward.1
$region0: #{bert_forward.1}
  #allocation0 [shape = 'u32[]', space=smem, size = 0x4, offset = 0x4, fixed_abs, tag = 'smem constant byte address 0x4 - core index']
  #allocation1 [shape = 'u32[144,128]{1,0:T(1,128)}', space=vmem, size = 0x12000, scoped, tag = 'internal scratch']
  #allocation2 [shape = 's32[1]{0}', space=sflag, size = 0x4, scoped, tag = 'scoped memory for bert_forward.1']
  #allocation3 [shape = 'u8[1024]{0}', space=smem, size = 0x400, scoped, tag = 'prefetched SMEM operand 0']
  #allocation4 [shape = 'u8[1024]{0}', space=smem, size = 0x400, scoped, tag = 'prefetched SMEM operand 1']
  #allocation5 [shape = 'u8[1024]{0}', space=smem, size = 0x400, scoped, tag = 'prefetched SMEM operand 2']
  %s0 = inlined_call_operand.vmem [shape: s32[2,8], index: 0, kind: input, shape index: {}]
  %s1 = inlined_call_operand.vmem [shape: s32[2,8], index: 1, kind: input, shape index: {}]
  %s2 = inlined_call_operand.vmem [shape: s32[2,8], index: 2, kind: input, shape index: {}]
  %s3 = inlined_call_operand.vmem [shape: f32[118,32], index: 3, kind: input, shape index: {}]
  %s4 = inlined_call_operand.hbm [shape: bf16[2,160,96], index: 4, kind: input, shape index: {}]
  %s5 = inlined_call_operand.vmem [shape: f32[18,96], index: 5, kind: input, shape index: {}]
  %s6 = inlined_call_operand.hbm [shape: f32[2,1,32], index: 6, kind: output, shape index: {}]
  %s7 = sld [smem:[#allocation0]]
  $region49: #{bert_forward.1} parent=0
    _
  %s9 = ssub.s32 1, %s7
  %s10 = scalar_select 0, %s9, %s7
  %s11 = sshll.u32 %s0, 4
  %s12 = int_to_ptr.vmem [resolvable:$true] %s11
  %14 = dma.vmem_to_smem %s12, 32, [#allocation3], [#allocation2]
  %s15 = sshll.u32 %s1, 4
  %s16 = int_to_ptr.vmem [resolvable:$true] %s15
  %18 = dma.vmem_to_smem %s16, 32, [#allocation4], [#allocation2]
  %s19 = sshll.u32 %s2, 4
  %s20 = int_to_ptr.vmem [resolvable:$true] %s19
  %22 = dma.vmem_to_smem %s20, 32, [#allocation5], [#allocation2]
  %23 = dma.done [#allocation2], 96
  %24 = sfence
  $region1: #{bert_forward.1} parent=0
    #allocation6 [shape = 'u8[81920]{0}', space=vmem, size = 0x14000, scoped, tag = 'input window, operand 4, single buffered']
    #allocation7 [shape = 's32[2]{0}', space=sflag, size = 0x8, scoped, tag = 'scoped memory for bert_forward.1']
    #allocation8 [shape = 's32[2]{0}', space=sflag, size = 0x8, scoped, tag = 'scoped memory for bert_forward.1']
    #allocation9 [shape = 'u8[1024]{0}', space=vmem, size = 0x400, scoped, tag = 'output window, operand 0']
    %25 = vsyncpa [#allocation7], 0
    %26 = vsyncpa [#allocation8], 0
    %s27 = scalar_lea.sflag [#allocation8], 1
    %28 = vsyncpa %s27, 0
    loop: start=0, step=1, limit=4
    $region2: #{bert_forward.1} parent=1 // loop_pre_header
      _
    $region3: #{bert_forward.1} parent=1 // loop_header
      %s30 = sphi 0, %s34
      %p31 = scmp.ge.s32.totalorder %s30, 4
      %s38 = sphi 0, %s38
      %s40 = sphi 0, %s38
      %s41 = sphi 0, %s40
      %s55 = sphi 0, %s41
      %s59 = sphi 0, %s59
      %s61 = sphi 0, %s59
      %s62 = sphi 0, %s61
      %s76 = sphi 0, %s62
      %s80 = sphi 0, %s80
      %s82 = sphi 0, %s80
      %s83 = sphi 0, %s82
      %s97 = sphi 0, %s83
      %s103 = sphi 0, %s105
      %s106 = sphi 0, %s103
      %s107 = sphi 0, %s106
      %s123 = sphi 0, %s107
    $region4: #{bert_forward.1} parent=1 // loop_header_branch
      %33 = sbr.rel (%p31) target = $region8
    $region5: #{bert_forward.1} parent=1 // loop_body
      %s35 = ssub.s32 %s30, 1
      %s36 = ssub.s32 %s30, 2
      %s37 = sadd.s32 %s30, 1
      %s39 = sadd.s32 %s38, 1
      %p42 = scmp.eq.s32.totalorder %s30, 1
      %p43 = scmp.ne.s32.totalorder %s38, %s40
      %p44 = scmp.eq.s32.totalorder %s30, 0
      %p45 = por %p43, %p44
      %p46 = scmp.ne.s32.totalorder %s38, %s40
      %p47 = scmp.eq.s32.totalorder %s35, 1
      %p48 = por %p46, %p47
      %p49 = scmp.ne.s32.totalorder %s40, %s41
      %p50 = scmp.eq.s32.totalorder %s35, 0
      %p51 = por %p49, %p50
      %p52 = scmp.ne.s32.totalorder %s40, %s41
      %p53 = scmp.eq.s32.totalorder %s36, 1
      %p54 = por %p52, %p53
      %p56 = scmp.ne.s32.totalorder %s41, %s55
      %p57 = scmp.eq.s32.totalorder %s36, 0
      %p58 = por %p56, %p57
      %s60 = sadd.s32 %s59, 1
      %p63 = scmp.eq.s32.totalorder %s30, 1
      %p64 = scmp.ne.s32.totalorder %s59, %s61
      %p65 = scmp.eq.s32.totalorder %s30, 0
      %p66 = por %p64, %p65
      %p67 = scmp.ne.s32.totalorder %s59, %s61
      %p68 = scmp.eq.s32.totalorder %s35, 1
      %p69 = por %p67, %p68
      %p70 = scmp.ne.s32.totalorder %s61, %s62
      %p71 = scmp.eq.s32.totalorder %s35, 0
      %p72 = por %p70, %p71
      %p73 = scmp.ne.s32.totalorder %s61, %s62
      %p74 = scmp.eq.s32.totalorder %s36, 1
      %p75 = por %p73, %p74
      %p77 = scmp.ne.s32.totalorder %s62, %s76
      %p78 = scmp.eq.s32.totalorder %s36, 0
      %p79 = por %p77, %p78
      %s81 = sadd.s32 %s80, 1
      %p84 = scmp.eq.s32.totalorder %s30, 1
      %p85 = scmp.ne.s32.totalorder %s80, %s82
      %p86 = scmp.eq.s32.totalorder %s30, 0
      %p87 = por %p85, %p86
      %p88 = scmp.ne.s32.totalorder %s80, %s82
      %p89 = scmp.eq.s32.totalorder %s35, 1
      %p90 = por %p88, %p89
      %p91 = scmp.ne.s32.totalorder %s82, %s83
      %p92 = scmp.eq.s32.totalorder %s35, 0
      %p93 = por %p91, %p92
      %p94 = scmp.ne.s32.totalorder %s82, %s83
      %p95 = scmp.eq.s32.totalorder %s36, 1
      %p96 = por %p94, %p95
      %p98 = scmp.ne.s32.totalorder %s83, %s97
      %p99 = scmp.eq.s32.totalorder %s36, 0
      %p100 = por %p98, %p99
      %s101 = ssub.s32 %s30, %s37
      %p102 = scmp.eq.s32.totalorder %s101, 0
      %s104 = sadd.s32 %s103, 1
      %s105 = scalar_select %p102, %s103, %s104
      %p108 = pneg %p102
      %p109 = scmp.eq.s32.totalorder %s30, 1
      %p110 = por %p108, %p109
      %p111 = scmp.ne.s32.totalorder %s103, %s106
      %p112 = scmp.eq.s32.totalorder %s30, 0
      %p113 = por %p111, %p112
      %p114 = scmp.ne.s32.totalorder %s103, %s106
      %p115 = scmp.eq.s32.totalorder %s35, 1
      %p116 = por %p114, %p115
      %p117 = scmp.ne.s32.totalorder %s106, %s107
      %p118 = scmp.eq.s32.totalorder %s35, 0
      %p119 = por %p117, %p118
      %p120 = scmp.ne.s32.totalorder %s106, %s107
      %p121 = scmp.eq.s32.totalorder %s36, 1
      %p122 = por %p120, %p121
      %p124 = scmp.ne.s32.totalorder %s107, %s123
      %p125 = scmp.eq.s32.totalorder %s36, 0
      %p126 = por %p124, %p125
      %p127 = scmp.le.s32.totalorder 1, %s30
      %p128 = scmp.lt.s32.totalorder %s30, 3
      %p129 = pnand %p127, %p128
      %p130 = pneg %p129
      // Predicated region
      $region9: #{bert_forward.1} parent=5 // pred_check
        _
      $region10: #{bert_forward.1} parent=5 // pred_check_branch
        %132 = sbr.rel (%p129) target = $region12
      $region11: #{bert_forward.1} parent=5 // pred_region
        %s133 = ssub.s32 %s30, 1
        // Predicated region
        $region13: #{bert_forward.1} parent=11 // pred_check
          %p134 = pneg %p51
        $region14: #{bert_forward.1} parent=11 // pred_check_branch
          %136 = sbr.rel (%p134) target = $region16
        $region15: #{bert_forward.1} parent=11 // pred_region
          _
        $region16: #{bert_forward.1} parent=11 // pred_fallthru
          _
        // Predicated region
        $region17: #{bert_forward.1} parent=11 // pred_check
          %p137 = pneg %p72
        $region18: #{bert_forward.1} parent=11 // pred_check_branch
          %139 = sbr.rel (%p137) target = $region20
        $region19: #{bert_forward.1} parent=11 // pred_region
          %s141 = ssub.s32 2560, 2560
          %142 = vsyncadd [#allocation7], %s141
          %s143 = sshll.u32 [#allocation6], 4
          %s144 = int_to_ptr.vmem [resolvable:$true] %s143
          %149 = dma.hbm_to_vmem [thread:$0]  %s4, 2560, %s144, [#allocation7], 64, 64, 4
        $region20: #{bert_forward.1} parent=11 // pred_fallthru
          _
        // Predicated region
        $region21: #{bert_forward.1} parent=11 // pred_check
          %p150 = pneg %p93
        $region22: #{bert_forward.1} parent=11 // pred_check_branch
          %152 = sbr.rel (%p150) target = $region24
        $region23: #{bert_forward.1} parent=11 // pred_region
          _
        $region24: #{bert_forward.1} parent=11 // pred_fallthru
          _
      $region12: #{bert_forward.1} parent=5 // pred_fallthru
        _
      %p153 = scmp.lt.s32.totalorder %s30, 2
      // Predicated region
      $region25: #{bert_forward.1} parent=5 // pred_check
        %p154 = pneg %p153
      $region26: #{bert_forward.1} parent=5 // pred_check_branch
        %156 = sbr.rel (%p154) target = $region28
      $region27: #{bert_forward.1} parent=5 // pred_region
        _
      $region28: #{bert_forward.1} parent=5 // pred_fallthru
        _
      %p157 = scmp.le.s32.totalorder 1, %s30
      %p158 = scmp.lt.s32.totalorder %s30, 3
      %p159 = pnand %p157, %p158
      %p160 = pneg %p159
      // Predicated region
      $region29: #{bert_forward.1} parent=5 // pred_check
        _
      $region30: #{bert_forward.1} parent=5 // pred_check_branch
        %162 = sbr.rel (%p159) target = $region32
      $region31: #{bert_forward.1} parent=5 // pred_region
        %s163 = ssub.s32 %s30, 1
        // Predicated region
        $region33: #{bert_forward.1} parent=31 // pred_check
          %p164 = pneg %p72
        $region34: #{bert_forward.1} parent=31 // pred_check_branch
          %166 = sbr.rel (%p164) target = $region36
        $region35: #{bert_forward.1} parent=31 // pred_region
          %167 = dma.done [#allocation7], 2560
        $region36: #{bert_forward.1} parent=31 // pred_fallthru
          _
        %p168 = pneg %p51
        %p169 = pneg %p48
        %p170 = pneg %p72
        %p171 = pneg %p69
        %p172 = pneg %p93
        %p173 = pneg %p90
        %p174 = pneg %p119
        %p175 = pneg %p116
        %s176 = sand.u32 %s106, 1
        %s177 = scalar_lea.sflag [#allocation8], %s176
        %s178 = sand.u32 %s106, 1
        %s179 = scalar_lea.vmem [#allocation9], %s178
        %v181 = vld [vmem:[%s5] sm:$0xff]
        %v182 = vld [vmem:[%s5 + $0x8] sm:$0xff]
        %v183 = vld [vmem:[%s5 + $0x10] sm:$0x3]
        %v184 = vlaneseq
        %v185 = vshrl.u32 %v184, 7
        %v186 = vlaneseq
        %v187 = vand.u32 %v186, 127
        %s188 = smul.u32 %s35, 128
        %s189 = sld [smem:[#allocation3 + %s188]]
        %s190 = sld [smem:[#allocation4 + %s188]]
        %v191 = vstv %s189
        %vm192 = vcmp.eq.s32.totalorder %v187, %v191
        %vm193 = vcmp.eq.s32.totalorder %v187, 100
        %vm194 = vmor %vm192, %vm193
        %s195 = sadd.s32 %s190, 116
        %v196 = vstv %s195
        %vm197 = vcmp.eq.s32.totalorder %v187, %v196
        %vm198 = vmor %vm194, %vm197
        %vm199 = vcmp.eq.s32.totalorder %v185, 0
        %vm200 = vmand %vm199, %vm198
        %v201 = vsel %vm200, 1.0, 0.0
        %v202 = vadd.f32 %v201, 0.0
        %s203 = sadd.s32 %s188, 1
        %s204 = sld [smem:[#allocation3 + %s203]]
        %s205 = sld [smem:[#allocation4 + %s203]]
        %v206 = vstv %s204
        %vm207 = vcmp.eq.s32.totalorder %v187, %v206
        %vm208 = vcmp.eq.s32.totalorder %v187, 101
        %vm209 = vmor %vm207, %vm208
        %s210 = sadd.s32 %s205, 116
        %v211 = vstv %s210
        %vm212 = vcmp.eq.s32.totalorder %v187, %v211
        %vm213 = vmor %vm209, %vm212
        %vm214 = vcmp.eq.s32.totalorder %v185, 1
        %vm215 = vmand %vm214, %vm213
        %v216 = vsel %vm215, 1.0, 0.0
        %v217 = vadd.f32 %v202, %v216
        %s218 = sadd.s32 %s188, 2
        %s219 = sld [smem:[#allocation3 + %s218]]
        %s220 = sld [smem:[#allocation4 + %s218]]
        %v221 = vstv %s219
        %vm222 = vcmp.eq.s32.totalorder %v187, %v221
        %vm223 = vcmp.eq.s32.totalorder %v187, 102
        %vm224 = vmor %vm222, %vm223
        %s225 = sadd.s32 %s220, 116
        %v226 = vstv %s225
        %vm227 = vcmp.eq.s32.totalorder %v187, %v226
        %vm228 = vmor %vm224, %vm227
        %vm229 = vcmp.eq.s32.totalorder %v185, 2
        %vm230 = vmand %vm229, %vm228
        %v231 = vsel %vm230, 1.0, 0.0
        %v232 = vadd.f32 %v217, %v231
        %s233 = sadd.s32 %s188, 3
        %s234 = sld [smem:[#allocation3 + %s233]]
        %s235 = sld [smem:[#allocation4 + %s233]]
        %v236 = vstv %s234
        %vm237 = vcmp.eq.s32.totalorder %v187, %v236
        %vm238 = vcmp.eq.s32.totalorder %v187, 103
        %vm239 = vmor %vm237, %vm238
        %s240 = sadd.s32 %s235, 116
        %v241 = vstv %s240
        %vm242 = vcmp.eq.s32.totalorder %v187, %v241
        %vm243 = vmor %vm239, %vm242
        %vm244 = vcmp.eq.s32.totalorder %v185, 3
        %vm245 = vmand %vm244, %vm243
        %v246 = vsel %vm245, 1.0, 0.0
        %v247 = vadd.f32 %v232, %v246
        %s248 = sadd.s32 %s188, 4
        %s249 = sld [smem:[#allocation3 + %s248]]
        %s250 = sld [smem:[#allocation4 + %s248]]
        %v251 = vstv %s249
        %vm252 = vcmp.eq.s32.totalorder %v187, %v251
        %vm253 = vcmp.eq.s32.totalorder %v187, 104
        %vm254 = vmor %vm252, %vm253
        %s255 = sadd.s32 %s250, 116
        %v256 = vstv %s255
        %vm257 = vcmp.eq.s32.totalorder %v187, %v256
        %vm258 = vmor %vm254, %vm257
        %vm259 = vcmp.eq.s32.totalorder %v185, 4
        %vm260 = vmand %vm259, %vm258
        %v261 = vsel %vm260, 1.0, 0.0
        %v262 = vadd.f32 %v247, %v261
        %s263 = sadd.s32 %s188, 5
        %s264 = sld [smem:[#allocation3 + %s263]]
        %s265 = sld [smem:[#allocation4 + %s263]]
        %v266 = vstv %s264
        %vm267 = vcmp.eq.s32.totalorder %v187, %v266
        %vm268 = vcmp.eq.s32.totalorder %v187, 105
        %vm269 = vmor %vm267, %vm268
        %s270 = sadd.s32 %s265, 116
        %v271 = vstv %s270
        %vm272 = vcmp.eq.s32.totalorder %v187, %v271
        %vm273 = vmor %vm269, %vm272
        %vm274 = vcmp.eq.s32.totalorder %v185, 5
        %vm275 = vmand %vm274, %vm273
        %v276 = vsel %vm275, 1.0, 0.0
        %v277 = vadd.f32 %v262, %v276
        %s278 = sadd.s32 %s188, 6
        %s279 = sld [smem:[#allocation3 + %s278]]
        %s280 = sld [smem:[#allocation4 + %s278]]
        %v281 = vstv %s279
        %vm282 = vcmp.eq.s32.totalorder %v187, %v281
        %vm283 = vcmp.eq.s32.totalorder %v187, 106
        %vm284 = vmor %vm282, %vm283
        %s285 = sadd.s32 %s280, 116
        %v286 = vstv %s285
        %vm287 = vcmp.eq.s32.totalorder %v187, %v286
        %vm288 = vmor %vm284, %vm287
        %vm289 = vcmp.eq.s32.totalorder %v185, 6
        %vm290 = vmand %vm289, %vm288
        %v291 = vsel %vm290, 1.0, 0.0
        %v292 = vadd.f32 %v277, %v291
        %s293 = sadd.s32 %s188, 7
        %s294 = sld [smem:[#allocation3 + %s293]]
        %s295 = sld [smem:[#allocation4 + %s293]]
        %v296 = vstv %s294
        %vm297 = vcmp.eq.s32.totalorder %v187, %v296
        %vm298 = vcmp.eq.s32.totalorder %v187, 107
        %vm299 = vmor %vm297, %vm298
        %s300 = sadd.s32 %s295, 116
        %v301 = vstv %s300
        %vm302 = vcmp.eq.s32.totalorder %v187, %v301
        %vm303 = vmor %vm299, %vm302
        %vm304 = vcmp.eq.s32.totalorder %v185, 7
        %vm305 = vmand %vm304, %vm303
        %v306 = vsel %vm305, 1.0, 0.0
        %v307 = vadd.f32 %v292, %v306
        %v308 = vld [vmem:[%s3] sm:$0xff]
        %v309 = vld [vmem:[%s3 + $0x8] sm:$0xff]
        %v310 = vld [vmem:[%s3 + $0x10] sm:$0xff]
        %v311 = vld [vmem:[%s3 + $0x18] sm:$0xff]
        %v312 = vld [vmem:[%s3 + $0x20] sm:$0xff]
        %v313 = vld [vmem:[%s3 + $0x28] sm:$0xff]
        %v314 = vld [vmem:[%s3 + $0x30] sm:$0xff]
        %v315 = vld [vmem:[%s3 + $0x38] sm:$0xff]
        %v316 = vld [vmem:[%s3 + $0x40] sm:$0xff]
        %v317 = vld [vmem:[%s3 + $0x48] sm:$0xff]
        %v318 = vld [vmem:[%s3 + $0x50] sm:$0xff]
        %v319 = vld [vmem:[%s3 + $0x58] sm:$0xff]
        %v320 = vld [vmem:[%s3 + $0x60] sm:$0xff]
        %v321 = vld [vmem:[%s3 + $0x68] sm:$0xff]
        %v322 = vld [vmem:[%s3 + $0x70] sm:$0x3f]
        %vm323 = vcmask 965632
        %v325 = vsel %vm323, %v307, 0
        %vm327 = vcmask 1045504
        %v329 = vsel %vm327, %v322, 0
        %331 = vmatprep.subr.mxu0 0.0
        %332 = vmatpush1.msra.mxu0 %v308
        %333 = vmatprep.subr.mxu0 0.0
        %334 = vmatpush1.msra.mxu0 %v309
        %335 = vmatprep.subr.mxu0 0.0
        %336 = vmatpush1.msra.mxu0 %v310
        %337 = vmatprep.subr.mxu0 0.0
        %338 = vmatpush1.msra.mxu0 %v311
        %339 = vmatprep.subr.mxu0 0.0
        %340 = vmatpush1.msra.mxu0 %v312
        %341 = vmatprep.subr.mxu0 0.0
        %342 = vmatpush1.msra.mxu0 %v313
        %343 = vmatprep.subr.mxu0 0.0
        %344 = vmatpush1.msra.mxu0 %v314
        %345 = vmatprep.subr.mxu0 0.0
        %346 = vmatpush1.msra.mxu0 %v315
        %347 = vmatprep.subr.mxu0 0.0
        %348 = vmatpush1.msra.mxu0 %v316
        %349 = vmatprep.subr.mxu0 0.0
        %350 = vmatpush1.msra.mxu0 %v317
        %351 = vmatprep.subr.mxu0 0.0
        %352 = vmatpush1.msra.mxu0 %v318
        %353 = vmatprep.subr.mxu0 0.0
        %354 = vmatpush1.msra.mxu0 %v319
        %355 = vmatprep.subr.mxu0 0.0
        %356 = vmatpush1.msra.mxu0 %v320
        %357 = vmatprep.subr.mxu0 0.0
        %358 = vmatpush1.msra.mxu0 %v321
        %359 = vmatprep.subr.mxu0 0.0
        %360 = vmatpush1.msra.mxu0 %v329
        %361 = vmatprep.subr.mxu0 0.0
        %362 = vmatpush1.msra.mxu0 0.0
        %363 = vmatprep.subr.mxu0 0.0
        %364 = vmatpush1.msra.mxu0 0.0
        %365 = vmatprep.subr.mxu0 0.0
        %366 = vmatpush1.msra.mxu0 0.0
        %367 = vmatprep.subr.mxu0 0.0
        %368 = vmatpush1.msra.mxu0 0.0
        %369 = vmatprep.subr.mxu0 0.0
        %370 = vmatpush1.msra.mxu0 0.0
        %371 = vmatprep.subr.mxu0 0.0
        %372 = vmatpush1.msra.mxu0 0.0
        %373 = vmatprep.subr.mxu0 0.0
        %374 = vmatpush1.msra.mxu0 0.0
        %375 = vmatprep.subr.mxu0 0.0
        %376 = vmatpush1.msra.mxu0 0.0
        %377 = vmatprep.subr.mxu0 0.0
        %378 = vmatpush1.msra.mxu0 0.0
        %379 = vmatprep.subr.mxu0 0.0
        %380 = vmatpush1.msra.mxu0 0.0
        %381 = vmatprep.subr.mxu0 0.0
        %382 = vmatpush1.msra.mxu0 0.0
        %383 = vmatprep.subr.mxu0 0.0
        %384 = vmatpush1.msra.mxu0 0.0
        %385 = vmatprep.subr.mxu0 0.0
        %386 = vmatpush1.msra.mxu0 0.0
        %387 = vmatprep.subr.mxu0 0.0
        %388 = vmatpush1.msra.mxu0 0.0
        %389 = vmatprep.subr.mxu0 0.0
        %390 = vmatpush1.msra.mxu0 0.0
        %391 = vmatprep.subr.mxu0 0.0
        %392 = vmatpush1.msra.mxu0 0.0
        %393 = vmatprep.subr.mxu0 0.0
        %394 = vmatpush1.msra.mxu0 0.0
        %395 = vmatprep.mubr.f32.mxu0 0.0
        %396 = vmatmul.mubr.f32.gmra.mrb[0].mxu0 %v325
        %v397 = vpop.f32.mrb[0].mxu0
        %v398 = vadd.f32 0.0, %v397
        %v399 = vpop.f32.mrb[0].mxu0
        %400 = vdwg.mxu0
        %vm401 = vcmask 261120
        %v402 = vsel %vm401, %v398, 0.0
        %403 = vadd.xlane.f32.xlu0 %v402
        %v404 = vpop.xlane.xlu0 %403
        %v405 = vrcp.pop 32.0
        %v406 = vmul.f32 %v404, %v405
        %v407 = vsub.f32 %v398, %v406
        %v408 = vmul.f32 %v407, %v407
        %v409 = vsel %vm401, %v408, 0.0
        %410 = vadd.xlane.f32.xlu0 %v409
        %v411 = vpop.xlane.xlu0 %410
        %v412 = vmul.f32 %v411, %v405
        %v413 = vadd.f32 %v412, 1e-12
        %v414 = vrsqrt.pop %v413
        %v415 = vmul.f32 %v407, %v414
        %v416 = vlaneseq
        %v417 = vshrl.u32 %v416, 7
        %v418 = vsub.s32 0, %v417
        %v419 = vrot.slane %v181, %v418
        %v420 = vmul.f32 %v415, %v419
        %v421 = vlaneseq
        %v422 = vshrl.u32 %v421, 7
        %v423 = vsub.s32 1, %v422
        %v424 = vrot.slane %v181, %v423
        %v425 = vadd.f32 %v420, %v424
        %s426 = sld [smem:[#allocation5 + %s188]]
        %s427 = scvt.s32.f32 %s426
        %s428 = ssub.f32 1.0, %s427
        %s429 = smul.f32 %s428, -10000.0
        %vm430 = vcmp.eq.s32.totalorder %v187, 0
        %v431 = vstv %s429
        %v432 = vsel %vm430, %v431, 0.0
        %v433 = vadd.f32 %v432, 0.0
        %s434 = sld [smem:[#allocation5 + %s203]]
        %s435 = scvt.s32.f32 %s434
        %s436 = ssub.f32 1.0, %s435
        %s437 = smul.f32 %s436, -10000.0
        %vm438 = vcmp.eq.s32.totalorder %v187, 1
        %v439 = vstv %s437
        %v440 = vsel %vm438, %v439, 0.0
        %v441 = vadd.f32 %v433, %v440
        %s442 = sld [smem:[#allocation5 + %s218]]
        %s443 = scvt.s32.f32 %s442
        %s444 = ssub.f32 1.0, %s443
        %s445 = smul.f32 %s444, -10000.0
        %vm446 = vcmp.eq.s32.totalorder %v187, 2
        %v447 = vstv %s445
        %v448 = vsel %vm446, %v447, 0.0
        %v449 = vadd.f32 %v441, %v448
        %s450 = sld [smem:[#allocation5 + %s233]]
        %s451 = scvt.s32.f32 %s450
        %s452 = ssub.f32 1.0, %s451
        %s453 = smul.f32 %s452, -10000.0
        %vm454 = vcmp.eq.s32.totalorder %v187, 3
        %v455 = vstv %s453
        %v456 = vsel %vm454, %v455, 0.0
        %v457 = vadd.f32 %v449, %v456
        %s458 = sld [smem:[#allocation5 + %s248]]
        %s459 = scvt.s32.f32 %s458
        %s460 = ssub.f32 1.0, %s459
        %s461 = smul.f32 %s460, -10000.0
        %vm462 = vcmp.eq.s32.totalorder %v187, 4
        %v463 = vstv %s461
        %v464 = vsel %vm462, %v463, 0.0
        %v465 = vadd.f32 %v457, %v464
        %s466 = sld [smem:[#allocation5 + %s263]]
        %s467 = scvt.s32.f32 %s466
        %s468 = ssub.f32 1.0, %s467
        %s469 = smul.f32 %s468, -10000.0
        %vm470 = vcmp.eq.s32.totalorder %v187, 5
        %v471 = vstv %s469
        %v472 = vsel %vm470, %v471, 0.0
        %v473 = vadd.f32 %v465, %v472
        %s474 = sld [smem:[#allocation5 + %s278]]
        %s475 = scvt.s32.f32 %s474
        %s476 = ssub.f32 1.0, %s475
        %s477 = smul.f32 %s476, -10000.0
        %vm478 = vcmp.eq.s32.totalorder %v187, 6
        %v479 = vstv %s477
        %v480 = vsel %vm478, %v479, 0.0
        %v481 = vadd.f32 %v473, %v480
        %s482 = sld [smem:[#allocation5 + %s293]]
        %s483 = scvt.s32.f32 %s482
        %s484 = ssub.f32 1.0, %s483
        %s485 = smul.f32 %s484, -10000.0
        %vm486 = vcmp.eq.s32.totalorder %v187, 7
        %v487 = vstv %s485
        %v488 = vsel %vm486, %v487, 0.0
        %v489 = vadd.f32 %v481, %v488
        %v490 = vld [vmem:[#allocation6] sm:$0xf]
        %v491 = vld [vmem:[#allocation6 + $0x4] sm:$0xf]
        %v492 = vld [vmem:[#allocation6 + $0x8] sm:$0xf]
        %v493 = vld [vmem:[#allocation6 + $0xc] sm:$0xf]
        %v494 = vld [vmem:[#allocation6 + $0x10] sm:$0xf]
        %v495 = vld [vmem:[#allocation6 + $0x14] sm:$0xf]
        %v496 = vld [vmem:[#allocation6 + $0x18] sm:$0xf]
        %v497 = vld [vmem:[#allocation6 + $0x1c] sm:$0xf]
        %v498 = vld [vmem:[#allocation6 + $0x20] sm:$0xf]
        %v499 = vld [vmem:[#allocation6 + $0x24] sm:$0xf]
        %v500 = vld [vmem:[#allocation6 + $0x28] sm:$0xf]
        %v501 = vld [vmem:[#allocation6 + $0x2c] sm:$0xf]
        %v502 = vld [vmem:[#allocation6 + $0x30] sm:$0xf]
        %v503 = vld [vmem:[#allocation6 + $0x34] sm:$0xf]
        %v504 = vld [vmem:[#allocation6 + $0x38] sm:$0xf]
        %v505 = vld [vmem:[#allocation6 + $0x3c] sm:$0xf]
        %v506 = vld [vmem:[#allocation6 + $0x40] sm:$0xf]
        %v507 = vld [vmem:[#allocation6 + $0x44] sm:$0xf]
        %v508 = vld [vmem:[#allocation6 + $0x48] sm:$0xf]
        %v509 = vld [vmem:[#allocation6 + $0x4c] sm:$0xf]
        %v510 = vpack.c.bf16 %v425, %v425
        %v511 = vlaneseq
        %v512 = vshrl.u32 %v511, 7
        %v513 = vsub.s32 2, %v512
        %v514 = vrot.slane %v181, %v513
        %v519 = vunpack.c.l.b16 %v490
        %v520 = vunpack.c.l.b16 %v491
        %v521 = vunpack.c.l.b16 %v492
        %v522 = vunpack.c.l.b16 %v493
        %v523 = vpack.c.b16 %v520, %v519
        %v524 = vpack.c.b16 %v522, %v521
        %v528 = vsel %vm401, %v510, 0
        %530 = vmatprep.subr.bf16.mxu0 0
        %531 = vmatpush1.bf16.msra.mxu0 %v523
        %532 = vmatprep.subr.bf16.mxu0 0
        %533 = vmatpush1.bf16.msra.mxu0 %v524
        %534 = vmatprep.subr.bf16.mxu0 0
        %535 = vmatpush1.bf16.msra.mxu0 0
        %536 = vmatprep.subr.bf16.mxu0 0
        %537 = vmatpush1.bf16.msra.mxu0 0
        %538 = vmatprep.subr.bf16.mxu0 0
        %539 = vmatpush1.bf16.msra.mxu0 0
        %540 = vmatprep.subr.bf16.mxu0 0
        %541 = vmatpush1.bf16.msra.mxu0 0
        %542 = vmatprep.subr.bf16.mxu0 0
        %543 = vmatpush1.bf16.msra.mxu0 0
        %544 = vmatprep.subr.bf16.mxu0 0
        %545 = vmatpush1.bf16.msra.mxu0 0
        %546 = vmatprep.subr.bf16.mxu0 0
        %547 = vmatpush1.bf16.msra.mxu0 0
        %548 = vmatprep.subr.bf16.mxu0 0
        %549 = vmatpush1.bf16.msra.mxu0 0
        %550 = vmatprep.subr.bf16.mxu0 0
        %551 = vmatpush1.bf16.msra.mxu0 0
        %552 = vmatprep.subr.bf16.mxu0 0
        %553 = vmatpush1.bf16.msra.mxu0 0
        %554 = vmatprep.subr.bf16.mxu0 0
        %555 = vmatpush1.bf16.msra.mxu0 0
        %556 = vmatprep.subr.bf16.mxu0 0
        %557 = vmatpush1.bf16.msra.mxu0 0
        %558 = vmatprep.subr.bf16.mxu0 0
        %559 = vmatpush1.bf16.msra.mxu0 0
        %560 = vmatprep.subr.bf16.mxu0 0
        %561 = vmatpush1.bf16.msra.mxu0 0
        %562 = vmatprep.mubr.bf16.mxu0 0
        %563 = vmatmul.mubr.bf16.gmra.mrb[0].mxu0 %v528
        %v564 = vpop.f32.mrb[0].mxu0
        %v565 = vadd.f32 %v514, %v564
        %v566 = vpop.f32.mrb[0].mxu0
        %v567 = vpop.f32.mrb[0].mxu0
        %v568 = vpop.f32.mrb[0].mxu0
        %569 = vdwg.mxu0
        %v570 = vpack.c.bf16 %v565, %v565
        %vm571 = vcmp.ge.s32.totalorder %v187, 0
        %vm572 = vcmp.lt.s32.totalorder %v187, 8
        %vm573 = vmand %vm571, %vm572
        %v574 = vsel %vm573, 1.0, 0.0
        %v575 = vmul.f32 %v565, %v574
        %v576 = vpack.c.bf16 %v575, %v575
        %578 = vrot.lane.b32.xlu0 %v570, 96
        %v579 = vpop.permute.xlu0 %578
        %v581 = vsel %vm401, %v576, 0
        %v584 = vsel %vm401, %v579, 0
        %586 = vmatprep.subr.bf16.mxu0 0
        %587 = vmatpush1.bf16.xpose.msra.mxu0 %v584
        %588 = vmatprep.subr.bf16.mxu0 0
        %589 = vmatpush1.bf16.xpose.msra.mxu0 0
        %590 = vmatprep.subr.bf16.mxu0 0
        %591 = vmatpush1.bf16.xpose.msra.mxu0 0
        %592 = vmatprep.subr.bf16.mxu0 0
        %593 = vmatpush1.bf16.xpose.msra.mxu0 0
        %594 = vmatprep.subr.bf16.mxu0 0
        %595 = vmatpush1.bf16.xpose.msra.mxu0 0
        %596 = vmatprep.subr.bf16.mxu0 0
        %597 = vmatpush1.bf16.xpose.msra.mxu0 0
        %598 = vmatprep.subr.bf16.mxu0 0
        %599 = vmatpush1.bf16.xpose.msra.mxu0 0
        %600 = vmatprep.subr.bf16.mxu0 0
        %601 = vmatpush1.bf16.xpose.msra.mxu0 0
        %602 = vmatprep.subr.bf16.mxu0 0
        %603 = vmatpush1.bf16.xpose.msra.mxu0 0
        %604 = vmatprep.subr.bf16.mxu0 0
        %605 = vmatpush1.bf16.xpose.msra.mxu0 0
        %606 = vmatprep.subr.bf16.mxu0 0
        %607 = vmatpush1.bf16.xpose.msra.mxu0 0
        %608 = vmatprep.subr.bf16.mxu0 0
        %609 = vmatpush1.bf16.xpose.msra.mxu0 0
        %610 = vmatprep.subr.bf16.mxu0 0
        %611 = vmatpush1.bf16.xpose.msra.mxu0 0
        %612 = vmatprep.subr.bf16.mxu0 0
        %613 = vmatpush1.bf16.xpose.msra.mxu0 0
        %614 = vmatprep.subr.bf16.mxu0 0
        %615 = vmatpush1.bf16.xpose.msra.mxu0 0
        %616 = vmatprep.subr.bf16.mxu0 0
        %617 = vmatpush1.bf16.xpose.msra.mxu0 0
        %618 = vmatprep.mubr.bf16.mxu0 0
        %619 = vmatmul.mubr.bf16.gmra.mrb[0].mxu0 %v581
        %v620 = vpop.f32.mrb[0].mxu0
        %v621 = vadd.f32 %v489, %v620
        %v622 = vpop.f32.mrb[0].mxu0
        %v623 = vpop.f32.mrb[0].mxu0
        %v624 = vpop.f32.mrb[0].mxu0
        %625 = vdwg.mxu0
        %vm626 = vcmask 64512
        %v627 = vsel %vm626, %v621, -inf
        %628 = vmax.xlane.f32.xlu0 %v627
        %v629 = vpop.xlane.xlu0 %628
        %v630 = vsub.f32 %v621, %v629
        %v631 = vmul.f32 %v630, 1.442695
        %v632 = vpow.pop %v631
        %v633 = vsel %vm626, %v632, 0.0
        %634 = vadd.xlane.f32.xlu0 %v633
        %v635 = vpop.xlane.xlu0 %634
        %v636 = vrcp.pop %v635
        %v637 = vmul.f32 %v632, %v636
        %v638 = vpack.c.bf16 %v637, %v637
        %640 = vrot.lane.b32.xlu0 %v574, 64
        %v641 = vpop.permute.xlu0 %640
        %v643 = vmul.f32 %v565, %v641
        %v644 = vpack.c.bf16 %v643, %v643
        %vm645 = vcmp.ge.s32.totalorder %v187, 8
        %vm646 = vcmp.lt.s32.totalorder %v187, 16
        %vm647 = vmand %vm645, %vm646
        %v648 = vsel %vm647, 1.0, 0.0
        %v649 = vmul.f32 %v565, %v648
        %v650 = vpack.c.bf16 %v649, %v649
        %v652 = vsel %vm401, %v650, 0
        %654 = vmatprep.subr.bf16.mxu0 0
        %655 = vmatpush1.bf16.xpose.msra.mxu0 %v584
        %656 = vmatprep.subr.bf16.mxu0 0
        %657 = vmatpush1.bf16.xpose.msra.mxu0 0
        %658 = vmatprep.subr.bf16.mxu0 0
        %659 = vmatpush1.bf16.xpose.msra.mxu0 0
        %660 = vmatprep.subr.bf16.mxu0 0
        %661 = vmatpush1.bf16.xpose.msra.mxu0 0
        %662 = vmatprep.subr.bf16.mxu0 0
        %663 = vmatpush1.bf16.xpose.msra.mxu0 0
        %664 = vmatprep.subr.bf16.mxu0 0
        %665 = vmatpush1.bf16.xpose.msra.mxu0 0
        %666 = vmatprep.subr.bf16.mxu0 0
        %667 = vmatpush1.bf16.xpose.msra.mxu0 0
        %668 = vmatprep.subr.bf16.mxu0 0
        %669 = vmatpush1.bf16.xpose.msra.mxu0 0
        %670 = vmatprep.subr.bf16.mxu0 0
        %671 = vmatpush1.bf16.xpose.msra.mxu0 0
        %672 = vmatprep.subr.bf16.mxu0 0
        %673 = vmatpush1.bf16.xpose.msra.mxu0 0
        %674 = vmatprep.subr.bf16.mxu0 0
        %675 = vmatpush1.bf16.xpose.msra.mxu0 0
        %676 = vmatprep.subr.bf16.mxu0 0
        %677 = vmatpush1.bf16.xpose.msra.mxu0 0
        %678 = vmatprep.subr.bf16.mxu0 0
        %679 = vmatpush1.bf16.xpose.msra.mxu0 0
        %680 = vmatprep.subr.bf16.mxu0 0
        %681 = vmatpush1.bf16.xpose.msra.mxu0 0
        %682 = vmatprep.subr.bf16.mxu0 0
        %683 = vmatpush1.bf16.xpose.msra.mxu0 0
        %684 = vmatprep.subr.bf16.mxu0 0
        %685 = vmatpush1.bf16.xpose.msra.mxu0 0
        %686 = vmatprep.mubr.bf16.mxu0 0
        %687 = vmatmul.mubr.bf16.gmra.mrb[0].mxu0 %v652
        %v688 = vpop.f32.mrb[0].mxu0
        %v689 = vadd.f32 %v489, %v688
        %v690 = vpop.f32.mrb[0].mxu0
        %v691 = vpop.f32.mrb[0].mxu0
        %v692 = vpop.f32.mrb[0].mxu0
        %693 = vdwg.mxu0
        %v694 = vsel %vm626, %v689, -inf
        %695 = vmax.xlane.f32.xlu0 %v694
        %v696 = vpop.xlane.xlu0 %695
        %v697 = vsub.f32 %v689, %v696
        %v698 = vmul.f32 %v697, 1.442695
        %v699 = vpow.pop %v698
        %v700 = vsel %vm626, %v699, 0.0
        %701 = vadd.xlane.f32.xlu0 %v700
        %v702 = vpop.xlane.xlu0 %701
        %v703 = vrcp.pop %v702
        %v704 = vmul.f32 %v699, %v703
        %v705 = vpack.c.bf16 %v704, %v704
        %707 = vrot.lane.b32.xlu0 %v648, 64
        %v708 = vpop.permute.xlu0 %707
        %v710 = vmul.f32 %v565, %v708
        %v711 = vpack.c.bf16 %v710, %v710
        %713 = vrot.lane.b32.xlu0 %v711, 64
        %v714 = vpop.permute.xlu0 %713
        %v716 = vsel %vm626, %v705, 0
        %vm718 = vcmask 1043456
        %v720 = vsel %vm718, %v714, 0
        %722 = vmatprep.subr.bf16.mxu0 0
        %723 = vmatpush1.bf16.msra.mxu0 %v720
        %724 = vmatprep.subr.bf16.mxu0 0
        %725 = vmatpush1.bf16.msra.mxu0 0
        %726 = vmatprep.subr.bf16.mxu0 0
        %727 = vmatpush1.bf16.msra.mxu0 0
        %728 = vmatprep.subr.bf16.mxu0 0
        %729 = vmatpush1.bf16.msra.mxu0 0
        %730 = vmatprep.subr.bf16.mxu0 0
        %731 = vmatpush1.bf16.msra.mxu0 0
        %732 = vmatprep.subr.bf16.mxu0 0
        %733 = vmatpush1.bf16.msra.mxu0 0
        %734 = vmatprep.subr.bf16.mxu0 0
        %735 = vmatpush1.bf16.msra.mxu0 0
        %736 = vmatprep.subr.bf16.mxu0 0
        %737 = vmatpush1.bf16.msra.mxu0 0
        %738 = vmatprep.subr.bf16.mxu0 0
        %739 = vmatpush1.bf16.msra.mxu0 0
        %740 = vmatprep.subr.bf16.mxu0 0
        %741 = vmatpush1.bf16.msra.mxu0 0
        %742 = vmatprep.subr.bf16.mxu0 0
        %743 = vmatpush1.bf16.msra.mxu0 0
        %744 = vmatprep.subr.bf16.mxu0 0
        %745 = vmatpush1.bf16.msra.mxu0 0
        %746 = vmatprep.subr.bf16.mxu0 0
        %747 = vmatpush1.bf16.msra.mxu0 0
        %748 = vmatprep.subr.bf16.mxu0 0
        %749 = vmatpush1.bf16.msra.mxu0 0
        %750 = vmatprep.subr.bf16.mxu0 0
        %751 = vmatpush1.bf16.msra.mxu0 0
        %752 = vmatprep.subr.bf16.mxu0 0
        %753 = vmatpush1.bf16.msra.mxu0 0
        %754 = vmatprep.mubr.bf16.mxu0 0
        %755 = vmatmul.mubr.bf16.gmra.mrb[0].mxu0 %v716
        %v756 = vpop.f32.mrb[0].mxu0
        %v757 = vadd.f32 0.0, %v756
        %v758 = vpop.f32.mrb[0].mxu0
        %v759 = vpop.f32.mrb[0].mxu0
        %v760 = vpop.f32.mrb[0].mxu0
        %761 = vdwg.mxu0
        %763 = vrot.lane.b32.xlu0 %v644, 64
        %v764 = vpop.permute.xlu0 %763
        %v766 = vsel %vm626, %v638, 0
        %v769 = vsel %vm718, %v764, 0
        %771 = vmatprep.subr.bf16.mxu0 0
        %772 = vmatpush1.bf16.msra.mxu0 %v769
        %773 = vmatprep.subr.bf16.mxu0 0
        %774 = vmatpush1.bf16.msra.mxu0 0
        %775 = vmatprep.subr.bf16.mxu0 0
        %776 = vmatpush1.bf16.msra.mxu0 0
        %777 = vmatprep.subr.bf16.mxu0 0
        %778 = vmatpush1.bf16.msra.mxu0 0
        %779 = vmatprep.subr.bf16.mxu0 0
        %780 = vmatpush1.bf16.msra.mxu0 0
        %781 = vmatprep.subr.bf16.mxu0 0
        %782 = vmatpush1.bf16.msra.mxu0 0
        %783 = vmatprep.subr.bf16.mxu0 0
        %784 = vmatpush1.bf16.msra.mxu0 0
        %785 = vmatprep.subr.bf16.mxu0 0
        %786 = vmatpush1.bf16.msra.mxu0 0
        %787 = vmatprep.subr.bf16.mxu0 0
        %788 = vmatpush1.bf16.msra.mxu0 0
        %789 = vmatprep.subr.bf16.mxu0 0
        %790 = vmatpush1.bf16.msra.mxu0 0
        %791 = vmatprep.subr.bf16.mxu0 0
        %792 = vmatpush1.bf16.msra.mxu0 0
        %793 = vmatprep.subr.bf16.mxu0 0
        %794 = vmatpush1.bf16.msra.mxu0 0
        %795 = vmatprep.subr.bf16.mxu0 0
        %796 = vmatpush1.bf16.msra.mxu0 0
        %797 = vmatprep.subr.bf16.mxu0 0
        %798 = vmatpush1.bf16.msra.mxu0 0
        %799 = vmatprep.subr.bf16.mxu0 0
        %800 = vmatpush1.bf16.msra.mxu0 0
        %801 = vmatprep.subr.bf16.mxu0 0
        %802 = vmatpush1.bf16.msra.mxu0 0
        %803 = vmatprep.mubr.bf16.mxu0 0
        %804 = vmatmul.mubr.bf16.gmra.mrb[0].mxu0 %v766
        %v805 = vpop.f32.mrb[0].mxu0
        %v806 = vadd.f32 %v757, %v805
        %v807 = vpop.f32.mrb[0].mxu0
        %v808 = vpop.f32.mrb[0].mxu0
        %v809 = vpop.f32.mrb[0].mxu0
        %810 = vdwg.mxu0
        %vm811 = vcmp.ge.s32.totalorder %v187, 16
        %vm812 = vcmp.lt.s32.totalorder %v187, 24
        %vm813 = vmand %vm811, %vm812
        %v814 = vsel %vm813, 1.0, 0.0
        %v815 = vmul.f32 %v565, %v814
        %v816 = vpack.c.bf16 %v815, %v815
        %v818 = vsel %vm401, %v816, 0
        %820 = vmatprep.subr.bf16.mxu0 0
        %821 = vmatpush1.bf16.xpose.msra.mxu0 %v584
        %822 = vmatprep.subr.bf16.mxu0 0
        %823 = vmatpush1.bf16.xpose.msra.mxu0 0
        %824 = vmatprep.subr.bf16.mxu0 0
        %825 = vmatpush1.bf16.xpose.msra.mxu0 0
        %826 = vmatprep.subr.bf16.mxu0 0
        %827 = vmatpush1.bf16.xpose.msra.mxu0 0
        %828 = vmatprep.subr.bf16.mxu0 0
        %829 = vmatpush1.bf16.xpose.msra.mxu0 0
        %830 = vmatprep.subr.bf16.mxu0 0
        %831 = vmatpush1.bf16.xpose.msra.mxu0 0
        %832 = vmatprep.subr.bf16.mxu0 0
        %833 = vmatpush1.bf16.xpose.msra.mxu0 0
        %834 = vmatprep.subr.bf16.mxu0 0
        %835 = vmatpush1.bf16.xpose.msra.mxu0 0
        %836 = vmatprep.subr.bf16.mxu0 0
        %837 = vmatpush1.bf16.xpose.msra.mxu0 0
        %838 = vmatprep.subr.bf16.mxu0 0
        %839 = vmatpush1.bf16.xpose.msra.mxu0 0
        %840 = vmatprep.subr.bf16.mxu0 0
        %841 = vmatpush1.bf16.xpose.msra.mxu0 0
        %842 = vmatprep.subr.bf16.mxu0 0
        %843 = vmatpush1.bf16.xpose.msra.mxu0 0
        %844 = vmatprep.subr.bf16.mxu0 0
        %845 = vmatpush1.bf16.xpose.msra.mxu0 0
        %846 = vmatprep.subr.bf16.mxu0 0
        %847 = vmatpush1.bf16.xpose.msra.mxu0 0
        %848 = vmatprep.subr.bf16.mxu0 0
        %849 = vmatpush1.bf16.xpose.msra.mxu0 0
        %850 = vmatprep.subr.bf16.mxu0 0
        %851 = vmatpush1.bf16.xpose.msra.mxu0 0
        %852 = vmatprep.mubr.bf16.mxu0 0
        %853 = vmatmul.mubr.bf16.gmra.mrb[0].mxu0 %v818
        %v854 = vpop.f32.mrb[0].mxu0
        %v855 = vadd.f32 %v489, %v854
        %v856 = vpop.f32.mrb[0].mxu0
        %v857 = vpop.f32.mrb[0].mxu0
        %v858 = vpop.f32.mrb[0].mxu0
        %859 = vdwg.mxu0
        %v860 = vsel %vm626, %v855, -inf
        %861 = vmax.xlane.f32.xlu0 %v860
        %v862 = vpop.xlane.xlu0 %861
        %v863 = vsub.f32 %v855, %v862
        %v864 = vmul.f32 %v863, 1.442695
        %v865 = vpow.pop %v864
        %v866 = vsel %vm626, %v865, 0.0
        %867 = vadd.xlane.f32.xlu0 %v866
        %v868 = vpop.xlane.xlu0 %867
        %v869 = vrcp.pop %v868
        %v870 = vmul.f32 %v865, %v869
        %v871 = vpack.c.bf16 %v870, %v870
        %873 = vrot.lane.b32.xlu0 %v814, 64
        %v874 = vpop.permute.xlu0 %873
        %v876 = vmul.f32 %v565, %v874
        %v877 = vpack.c.bf16 %v876, %v876
        %879 = vrot.lane.b32.xlu0 %v877, 64
        %v880 = vpop.permute.xlu0 %879
        %v882 = vsel %vm626, %v871, 0
        %v885 = vsel %vm718, %v880, 0
        %887 = vmatprep.subr.bf16.mxu0 0
        %888 = vmatpush1.bf16.msra.mxu0 %v885
        %889 = vmatprep.subr.bf16.mxu0 0
        %890 = vmatpush1.bf16.msra.mxu0 0
        %891 = vmatprep.subr.bf16.mxu0 0
        %892 = vmatpush1.bf16.msra.mxu0 0
        %893 = vmatprep.subr.bf16.mxu0 0
        %894 = vmatpush1.bf16.msra.mxu0 0
        %895 = vmatprep.subr.bf16.mxu0 0
        %896 = vmatpush1.bf16.msra.mxu0 0
        %897 = vmatprep.subr.bf16.mxu0 0
        %898 = vmatpush1.bf16.msra.mxu0 0
        %899 = vmatprep.subr.bf16.mxu0 0
        %900 = vmatpush1.bf16.msra.mxu0 0
        %901 = vmatprep.subr.bf16.mxu0 0
        %902 = vmatpush1.bf16.msra.mxu0 0
        %903 = vmatprep.subr.bf16.mxu0 0
        %904 = vmatpush1.bf16.msra.mxu0 0
        %905 = vmatprep.subr.bf16.mxu0 0
        %906 = vmatpush1.bf16.msra.mxu0 0
        %907 = vmatprep.subr.bf16.mxu0 0
        %908 = vmatpush1.bf16.msra.mxu0 0
        %909 = vmatprep.subr.bf16.mxu0 0
        %910 = vmatpush1.bf16.msra.mxu0 0
        %911 = vmatprep.subr.bf16.mxu0 0
        %912 = vmatpush1.bf16.msra.mxu0 0
        %913 = vmatprep.subr.bf16.mxu0 0
        %914 = vmatpush1.bf16.msra.mxu0 0
        %915 = vmatprep.subr.bf16.mxu0 0
        %916 = vmatpush1.bf16.msra.mxu0 0
        %917 = vmatprep.subr.bf16.mxu0 0
        %918 = vmatpush1.bf16.msra.mxu0 0
        %919 = vmatprep.mubr.bf16.mxu0 0
        %920 = vmatmul.mubr.bf16.gmra.mrb[0].mxu0 %v882
        %v921 = vpop.f32.mrb[0].mxu0
        %v922 = vadd.f32 0.0, %v921
        %v923 = vpop.f32.mrb[0].mxu0
        %v924 = vpop.f32.mrb[0].mxu0
        %v925 = vpop.f32.mrb[0].mxu0
        %926 = vdwg.mxu0
        %v927 = vadd.f32 %v806, %v922
        %vm928 = vcmp.ge.s32.totalorder %v187, 24
        %vm929 = vcmp.lt.s32.totalorder %v187, 32
        %vm930 = vmand %vm928, %vm929
        %v931 = vsel %vm930, 1.0, 0.0
        %v932 = vmul.f32 %v565, %v931
        %v933 = vpack.c.bf16 %v932, %v932
        %v935 = vsel %vm401, %v933, 0
        %937 = vmatprep.subr.bf16.mxu0 0
        %938 = vmatpush1.bf16.xpose.msra.mxu0 %v584
        %939 = vmatprep.subr.bf16.mxu0 0
        %940 = vmatpush1.bf16.xpose.msra.mxu0 0
        %941 = vmatprep.subr.bf16.mxu0 0
        %942 = vmatpush1.bf16.xpose.msra.mxu0 0
        %943 = vmatprep.subr.bf16.mxu0 0
        %944 = vmatpush1.bf16.xpose.msra.mxu0 0
        %945 = vmatprep.subr.bf16.mxu0 0
        %946 = vmatpush1.bf16.xpose.msra.mxu0 0
        %947 = vmatprep.subr.bf16.mxu0 0
        %948 = vmatpush1.bf16.xpose.msra.mxu0 0
        %949 = vmatprep.subr.bf16.mxu0 0
        %950 = vmatpush1.bf16.xpose.msra.mxu0 0
        %951 = vmatprep.subr.bf16.mxu0 0
        %952 = vmatpush1.bf16.xpose.msra.mxu0 0
        %953 = vmatprep.subr.bf16.mxu0 0
        %954 = vmatpush1.bf16.xpose.msra.mxu0 0
        %955 = vmatprep.subr.bf16.mxu0 0
        %956 = vmatpush1.bf16.xpose.msra.mxu0 0
        %957 = vmatprep.subr.bf16.mxu0 0
        %958 = vmatpush1.bf16.xpose.msra.mxu0 0
        %959 = vmatprep.subr.bf16.mxu0 0
        %960 = vmatpush1.bf16.xpose.msra.mxu0 0
        %961 = vmatprep.subr.bf16.mxu0 0
        %962 = vmatpush1.bf16.xpose.msra.mxu0 0
        %963 = vmatprep.subr.bf16.mxu0 0
        %964 = vmatpush1.bf16.xpose.msra.mxu0 0
        %965 = vmatprep.subr.bf16.mxu0 0
        %966 = vmatpush1.bf16.xpose.msra.mxu0 0
        %967 = vmatprep.subr.bf16.mxu0 0
        %968 = vmatpush1.bf16.xpose.msra.mxu0 0
        %969 = vmatprep.mubr.bf16.mxu0 0
        %970 = vmatmul.mubr.bf16.gmra.mrb[0].mxu0 %v935
        %v971 = vpop.f32.mrb[0].mxu0
        %v972 = vadd.f32 %v489, %v971
        %v973 = vpop.f32.mrb[0].mxu0
        %v974 = vpop.f32.mrb[0].mxu0
        %v975 = vpop.f32.mrb[0].mxu0
        %976 = vdwg.mxu0
        %v977 = vsel %vm626, %v972, -inf
        %978 = vmax.xlane.f32.xlu0 %v977
        %v979 = vpop.xlane.xlu0 %978
        %v980 = vsub.f32 %v972, %v979
        %v981 = vmul.f32 %v980, 1.442695
        %v982 = vpow.pop %v981
        %v983 = vsel %vm626, %v982, 0.0
        %984 = vadd.xlane.f32.xlu0 %v983
        %v985 = vpop.xlane.xlu0 %984
        %v986 = vrcp.pop %v985
        %v987 = vmul.f32 %v982, %v986
        %v988 = vpack.c.bf16 %v987, %v987
        %990 = vrot.lane.b32.xlu0 %v931, 64
        %v991 = vpop.permute.xlu0 %990
        %v993 = vmul.f32 %v565, %v991
        %v994 = vpack.c.bf16 %v993, %v993
        %996 = vrot.lane.b32.xlu0 %v994, 64
        %v997 = vpop.permute.xlu0 %996
        %v999 = vsel %vm626, %v988, 0
        %v1002 = vsel %vm718, %v997, 0
        %1004 = vmatprep.subr.bf16.mxu0 0
        %1005 = vmatpush1.bf16.msra.mxu0 %v1002
        %1006 = vmatprep.subr.bf16.mxu0 0
        %1007 = vmatpush1.bf16.msra.mxu0 0
        %1008 = vmatprep.subr.bf16.mxu0 0
        %1009 = vmatpush1.bf16.msra.mxu0 0
        %1010 = vmatprep.subr.bf16.mxu0 0
        %1011 = vmatpush1.bf16.msra.mxu0 0
        %1012 = vmatprep.subr.bf16.mxu0 0
        %1013 = vmatpush1.bf16.msra.mxu0 0
        %1014 = vmatprep.subr.bf16.mxu0 0
        %1015 = vmatpush1.bf16.msra.mxu0 0
        %1016 = vmatprep.subr.bf16.mxu0 0
        %1017 = vmatpush1.bf16.msra.mxu0 0
        %1018 = vmatprep.subr.bf16.mxu0 0
        %1019 = vmatpush1.bf16.msra.mxu0 0
        %1020 = vmatprep.subr.bf16.mxu0 0
        %1021 = vmatpush1.bf16.msra.mxu0 0
        %1022 = vmatprep.subr.bf16.mxu0 0
        %1023 = vmatpush1.bf16.msra.mxu0 0
        %1024 = vmatprep.subr.bf16.mxu0 0
        %1025 = vmatpush1.bf16.msra.mxu0 0
        %1026 = vmatprep.subr.bf16.mxu0 0
        %1027 = vmatpush1.bf16.msra.mxu0 0
        %1028 = vmatprep.subr.bf16.mxu0 0
        %1029 = vmatpush1.bf16.msra.mxu0 0
        %1030 = vmatprep.subr.bf16.mxu0 0
        %1031 = vmatpush1.bf16.msra.mxu0 0
        %1032 = vmatprep.subr.bf16.mxu0 0
        %1033 = vmatpush1.bf16.msra.mxu0 0
        %1034 = vmatprep.subr.bf16.mxu0 0
        %1035 = vmatpush1.bf16.msra.mxu0 0
        %1036 = vmatprep.mubr.bf16.mxu0 0
        %1037 = vmatmul.mubr.bf16.gmra.mrb[0].mxu0 %v999
        %v1038 = vpop.f32.mrb[0].mxu0
        %v1039 = vadd.f32 0.0, %v1038
        %v1040 = vpop.f32.mrb[0].mxu0
        %v1041 = vpop.f32.mrb[0].mxu0
        %v1042 = vpop.f32.mrb[0].mxu0
        %1043 = vdwg.mxu0
        %v1044 = vadd.f32 %v927, %v1039
        %v1045 = vpack.c.bf16 %v1044, %v1044
        %v1046 = vlaneseq
        %v1047 = vshrl.u32 %v1046, 7
        %v1048 = vsub.s32 3, %v1047
        %v1049 = vrot.slane %v181, %v1048
        %v1054 = vunpack.c.l.b16 %v494
        %v1055 = vunpack.c.l.b16 %v495
        %v1056 = vunpack.c.l.b16 %v496
        %v1057 = vunpack.c.l.b16 %v497
        %v1058 = vpack.c.b16 %v1055, %v1054
        %v1059 = vpack.c.b16 %v1057, %v1056
        %v1063 = vsel %vm401, %v1045, 0
        %1065 = vmatprep.subr.bf16.mxu0 0
        %1066 = vmatpush1.bf16.msra.mxu0 %v1058
        %1067 = vmatprep.subr.bf16.mxu0 0
        %1068 = vmatpush1.bf16.msra.mxu0 %v1059
        %1069 = vmatprep.subr.bf16.mxu0 0
        %1070 = vmatpush1.bf16.msra.mxu0 0
        %1071 = vmatprep.subr.bf16.mxu0 0
        %1072 = vmatpush1.bf16.msra.mxu0 0
        %1073 = vmatprep.subr.bf16.mxu0 0
        %1074 = vmatpush1.bf16.msra.mxu0 0
        %1075 = vmatprep.subr.bf16.mxu0 0
        %1076 = vmatpush1.bf16.msra.mxu0 0
        %1077 = vmatprep.subr.bf16.mxu0 0
        %1078 = vmatpush1.bf16.msra.mxu0 0
        %1079 = vmatprep.subr.bf16.mxu0 0
        %1080 = vmatpush1.bf16.msra.mxu0 0
        %1081 = vmatprep.subr.bf16.mxu0 0
        %1082 = vmatpush1.bf16.msra.mxu0 0
        %1083 = vmatprep.subr.bf16.mxu0 0
        %1084 = vmatpush1.bf16.msra.mxu0 0
        %1085 = vmatprep.subr.bf16.mxu0 0
        %1086 = vmatpush1.bf16.msra.mxu0 0
        %1087 = vmatprep.subr.bf16.mxu0 0
        %1088 = vmatpush1.bf16.msra.mxu0 0
        %1089 = vmatprep.subr.bf16.mxu0 0
        %1090 = vmatpush1.bf16.msra.mxu0 0
        %1091 = vmatprep.subr.bf16.mxu0 0
        %1092 = vmatpush1.bf16.msra.mxu0 0
        %1093 = vmatprep.subr.bf16.mxu0 0
        %1094 = vmatpush1.bf16.msra.mxu0 0
        %1095 = vmatprep.subr.bf16.mxu0 0
        %1096 = vmatpush1.bf16.msra.mxu0 0
        %1097 = vmatprep.mubr.bf16.mxu0 0
        %1098 = vmatmul.mubr.bf16.gmra.mrb[0].mxu0 %v1063
        %v1099 = vpop.f32.mrb[0].mxu0
        %v1100 = vadd.f32 %v1049, %v1099
        %v1101 = vpop.f32.mrb[0].mxu0
        %v1102 = vpop.f32.mrb[0].mxu0
        %v1103 = vpop.f32.mrb[0].mxu0
        %1104 = vdwg.mxu0
        %v1105 = vadd.f32 %v1100, %v425
        %v1106 = vsel %vm401, %v1105, 0.0
        %1107 = vadd.xlane.f32.xlu0 %v1106
        %v1108 = vpop.xlane.xlu0 %1107
        %v1109 = vmul.f32 %v1108, %v405
        %v1110 = vsub.f32 %v1105, %v1109
        %v1111 = vmul.f32 %v1110, %v1110
        %v1112 = vsel %vm401, %v1111, 0.0
        %1113 = vadd.xlane.f32.xlu0 %v1112
        %v1114 = vpop.xlane.xlu0 %1113
        %v1115 = vmul.f32 %v1114, %v405
        %v1116 = vadd.f32 %v1115, 1e-12
        %v1117 = vrsqrt.pop %v1116
        %v1118 = vmul.f32 %v1110, %v1117
        %v1119 = vlaneseq
        %v1120 = vshrl.u32 %v1119, 7
        %v1121 = vsub.s32 4, %v1120
        %v1122 = vrot.slane %v181, %v1121
        %v1123 = vmul.f32 %v1118, %v1122
        %v1124 = vlaneseq
        %v1125 = vshrl.u32 %v1124, 7
        %v1126 = vsub.s32 5, %v1125
        %v1127 = vrot.slane %v181, %v1126
        %v1128 = vadd.f32 %v1123, %v1127
        %v1129 = vpack.c.bf16 %v1128, %v1128
        %v1130 = vlaneseq
        %v1131 = vshrl.u32 %v1130, 7
        %v1132 = vsub.s32 6, %v1131
        %v1133 = vrot.slane %v181, %v1132
        %v1138 = vunpack.c.l.b16 %v498
        %v1139 = vunpack.c.l.b16 %v499
        %v1140 = vunpack.c.l.b16 %v500
        %v1141 = vunpack.c.l.b16 %v501
        %v1142 = vpack.c.b16 %v1139, %v1138
        %v1143 = vpack.c.b16 %v1141, %v1140
        %v1147 = vsel %vm401, %v1129, 0
        %1149 = vmatprep.subr.bf16.mxu0 0
        %1150 = vmatpush1.bf16.msra.mxu0 %v1142
        %1151 = vmatprep.subr.bf16.mxu0 0
        %1152 = vmatpush1.bf16.msra.mxu0 %v1143
        %1153 = vmatprep.subr.bf16.mxu0 0
        %1154 = vmatpush1.bf16.msra.mxu0 0
        %1155 = vmatprep.subr.bf16.mxu0 0
        %1156 = vmatpush1.bf16.msra.mxu0 0
        %1157 = vmatprep.subr.bf16.mxu0 0
        %1158 = vmatpush1.bf16.msra.mxu0 0
        %1159 = vmatprep.subr.bf16.mxu0 0
        %1160 = vmatpush1.bf16.msra.mxu0 0
        %1161 = vmatprep.subr.bf16.mxu0 0
        %1162 = vmatpush1.bf16.msra.mxu0 0
        %1163 = vmatprep.subr.bf16.mxu0 0
        %1164 = vmatpush1.bf16.msra.mxu0 0
        %1165 = vmatprep.subr.bf16.mxu0 0
        %1166 = vmatpush1.bf16.msra.mxu0 0
        %1167 = vmatprep.subr.bf16.mxu0 0
        %1168 = vmatpush1.bf16.msra.mxu0 0
        %1169 = vmatprep.subr.bf16.mxu0 0
        %1170 = vmatpush1.bf16.msra.mxu0 0
        %1171 = vmatprep.subr.bf16.mxu0 0
        %1172 = vmatpush1.bf16.msra.mxu0 0
        %1173 = vmatprep.subr.bf16.mxu0 0
        %1174 = vmatpush1.bf16.msra.mxu0 0
        %1175 = vmatprep.subr.bf16.mxu0 0
        %1176 = vmatpush1.bf16.msra.mxu0 0
        %1177 = vmatprep.subr.bf16.mxu0 0
        %1178 = vmatpush1.bf16.msra.mxu0 0
        %1179 = vmatprep.subr.bf16.mxu0 0
        %1180 = vmatpush1.bf16.msra.mxu0 0
        %1181 = vmatprep.mubr.bf16.mxu0 0
        %1182 = vmatmul.mubr.bf16.gmra.mrb[0].mxu0 %v1147
        %v1183 = vpop.f32.mrb[0].mxu0
        %v1184 = vadd.f32 %v1133, %v1183
        %v1185 = vpop.f32.mrb[0].mxu0
        %v1186 = vpop.f32.mrb[0].mxu0
        %v1187 = vpop.f32.mrb[0].mxu0
        %1188 = vdwg.mxu0
        %v1189 = vmul.f32 %v1184, 0.5
        %v1190 = vmul.f32 %v1184, 0.70710677
        %vm1191 = vcmp.lt.f32.partialorder %v1190, 0.0
        %v1192 = vsel %vm1191, -1.0, 1.0
        %v1193 = vand.u32 2147483647, %v1190
        %v1194 = vmul.f32 %v1193, 0.3275911
        %v1195 = vadd.f32 %v1194, 1.0
        %v1196 = vrcp.pop %v1195
        %v1197 = vmul.f32 1.0, %v1196
        %v1198 = vmul.f32 %v1197, 1.0614054
        %v1199 = vadd.f32 %v1198, -1.4531521
        %v1200 = vmul.f32 %v1199, %v1197
        %v1201 = vadd.f32 %v1200, 1.4214138
        %v1202 = vmul.f32 %v1201, %v1197
        %v1203 = vadd.f32 %v1202, -0.28449672
        %v1204 = vmul.f32 %v1203, %v1197
        %v1205 = vadd.f32 %v1204, 0.2548296
        %v1206 = vmul.f32 %v1205, %v1197
        %v1207 = vsub.f32 0.0, %v1193
        %v1208 = vmul.f32 %v1207, %v1193
        %v1209 = vmul.f32 %v1208, 1.442695
        %v1210 = vpow.pop %v1209
        %v1211 = vmul.f32 %v1206, %v1210
        %v1212 = vsub.f32 1.0, %v1211
        %v1213 = vmul.f32 %v1192, %v1212
        %v1214 = vadd.f32 %v1213, 1.0
        %v1215 = vmul.f32 %v1189, %v1214
        %v1216 = vpack.c.bf16 %v1215, %v1215
        %v1217 = vlaneseq
        %v1218 = vshrl.u32 %v1217, 7
        %v1219 = vsub.s32 7, %v1218
        %v1220 = vrot.slane %v181, %v1219
        %v1229 = vunpack.c.l.b16 %v502
        %v1230 = vunpack.c.l.b16 %v503
        %v1231 = vunpack.c.l.b16 %v504
        %v1232 = vunpack.c.l.b16 %v505
        %v1233 = vunpack.c.l.b16 %v506
        %v1234 = vunpack.c.l.b16 %v507
        %v1235 = vunpack.c.l.b16 %v508
        %v1236 = vunpack.c.l.b16 %v509
        %v1237 = vpack.c.b16 %v1230, %v1229
        %v1238 = vpack.c.b16 %v1232, %v1231
        %v1239 = vpack.c.b16 %v1234, %v1233
        %v1240 = vpack.c.b16 %v1236, %v1235
        %vm1245 = vcmask 523264
        %v1247 = vsel %vm1245, %v1216, 0
        %1249 = vmatprep.subr.bf16.mxu0 0
        %1250 = vmatpush1.bf16.msra.mxu0 %v1237
        %1251 = vmatprep.subr.bf16.mxu0 0
        %1252 = vmatpush1.bf16.msra.mxu0 %v1238
        %1253 = vmatprep.subr.bf16.mxu0 0
        %1254 = vmatpush1.bf16.msra.mxu0 %v1239
        %1255 = vmatprep.subr.bf16.mxu0 0
        %1256 = vmatpush1.bf16.msra.mxu0 %v1240
        %1257 = vmatprep.subr.bf16.mxu0 0
        %1258 = vmatpush1.bf16.msra.mxu0 0
        %1259 = vmatprep.subr.bf16.mxu0 0
        %1260 = vmatpush1.bf16.msra.mxu0 0
        %1261 = vmatprep.subr.bf16.mxu0 0
        %1262 = vmatpush1.bf16.msra.mxu0 0
        %1263 = vmatprep.subr.bf16.mxu0 0
        %1264 = vmatpush1.bf16.msra.mxu0 0
        %1265 = vmatprep.subr.bf16.mxu0 0
        %1266 = vmatpush1.bf16.msra.mxu0 0
        %1267 = vmatprep.subr.bf16.mxu0 0
        %1268 = vmatpush1.bf16.msra.mxu0 0
        %1269 = vmatprep.subr.bf16.mxu0 0
        %1270 = vmatpush1.bf16.msra.mxu0 0
        %1271 = vmatprep.subr.bf16.mxu0 0
        %1272 = vmatpush1.bf16.msra.mxu0 0
        %1273 = vmatprep.subr.bf16.mxu0 0
        %1274 = vmatpush1.bf16.msra.mxu0 0
        %1275 = vmatprep.subr.bf16.mxu0 0
        %1276 = vmatpush1.bf16.msra.mxu0 0
        %1277 = vmatprep.subr.bf16.mxu0 0
        %1278 = vmatpush1.bf16.msra.mxu0 0
        %1279 = vmatprep.subr.bf16.mxu0 0
        %1280 = vmatpush1.bf16.msra.mxu0 0
        %1281 = vmatprep.mubr.bf16.mxu0 0
        %1282 = vmatmul.mubr.bf16.gmra.mrb[0].mxu0 %v1247
        %v1283 = vpop.f32.mrb[0].mxu0
        %v1284 = vadd.f32 %v1220, %v1283
        %v1285 = vpop.f32.mrb[0].mxu0
        %v1286 = vpop.f32.mrb[0].mxu0
        %v1287 = vpop.f32.mrb[0].mxu0
        %1288 = vdwg.mxu0
        %v1289 = vadd.f32 %v1284, %v1128
        %v1290 = vsel %vm401, %v1289, 0.0
        %1291 = vadd.xlane.f32.xlu0 %v1290
        %v1292 = vpop.xlane.xlu0 %1291
        %v1293 = vmul.f32 %v1292, %v405
        %v1294 = vsub.f32 %v1289, %v1293
        %v1295 = vmul.f32 %v1294, %v1294
        %v1296 = vsel %vm401, %v1295, 0.0
        %1297 = vadd.xlane.f32.xlu0 %v1296
        %v1298 = vpop.xlane.xlu0 %1297
        %v1299 = vmul.f32 %v1298, %v405
        %v1300 = vadd.f32 %v1299, 1e-12
        %v1301 = vrsqrt.pop %v1300
        %v1302 = vmul.f32 %v1294, %v1301
        %v1303 = vlaneseq
        %v1304 = vshrl.u32 %v1303, 7
        %v1305 = vsub.s32 0, %v1304
        %v1306 = vrot.slane %v182, %v1305
        %v1307 = vmul.f32 %v1302, %v1306
        %v1308 = vlaneseq
        %v1309 = vshrl.u32 %v1308, 7
        %v1310 = vsub.s32 1, %v1309
        %v1311 = vrot.slane %v182, %v1310
        %v1312 = vadd.f32 %v1307, %v1311
        %s1313 = scalar_lea.vmem [#allocation6], 80
        %v1314 = vld [vmem:[%s1313] sm:$0xf]
        %v1315 = vld [vmem:[%s1313 + $0x4] sm:$0xf]
        %v1316 = vld [vmem:[%s1313 + $0x8] sm:$0xf]
        %v1317 = vld [vmem:[%s1313 + $0xc] sm:$0xf]
        %v1318 = vld [vmem:[%s1313 + $0x10] sm:$0xf]
        %v1319 = vld [vmem:[%s1313 + $0x14] sm:$0xf]
        %v1320 = vld [vmem:[%s1313 + $0x18] sm:$0xf]
        %v1321 = vld [vmem:[%s1313 + $0x1c] sm:$0xf]
        %v1322 = vld [vmem:[%s1313 + $0x20] sm:$0xf]
        %v1323 = vld [vmem:[%s1313 + $0x24] sm:$0xf]
        %v1324 = vld [vmem:[%s1313 + $0x28] sm:$0xf]
        %v1325 = vld [vmem:[%s1313 + $0x2c] sm:$0xf]
        %v1326 = vld [vmem:[%s1313 + $0x30] sm:$0xf]
        %v1327 = vld [vmem:[%s1313 + $0x34] sm:$0xf]
        %v1328 = vld [vmem:[%s1313 + $0x38] sm:$0xf]
        %v1329 = vld [vmem:[%s1313 + $0x3c] sm:$0xf]
        %v1330 = vld [vmem:[%s1313 + $0x40] sm:$0xf]
        %v1331 = vld [vmem:[%s1313 + $0x44] sm:$0xf]
        %v1332 = vld [vmem:[%s1313 + $0x48] sm:$0xf]
        %v1333 = vld [vmem:[%s1313 + $0x4c] sm:$0xf]
        %v1334 = vpack.c.bf16 %v1312, %v1312
        %v1335 = vlaneseq
        %v1336 = vshrl.u32 %v1335, 7
        %v1337 = vsub.s32 2, %v1336
        %v1338 = vrot.slane %v182, %v1337
        %v1343 = vunpack.c.l.b16 %v1314
        %v1344 = vunpack.c.l.b16 %v1315
        %v1345 = vunpack.c.l.b16 %v1316
        %v1346 = vunpack.c.l.b16 %v1317
        %v1347 = vpack.c.b16 %v1344, %v1343
        %v1348 = vpack.c.b16 %v1346, %v1345
        %v1352 = vsel %vm401, %v1334, 0
        %1354 = vmatprep.subr.bf16.mxu0 0
        %1355 = vmatpush1.bf16.msra.mxu0 %v1347
        %1356 = vmatprep.subr.bf16.mxu0 0
        %1357 = vmatpush1.bf16.msra.mxu0 %v1348
        %1358 = vmatprep.subr.bf16.mxu0 0
        %1359 = vmatpush1.bf16.msra.mxu0 0
        %1360 = vmatprep.subr.bf16.mxu0 0
        %1361 = vmatpush1.bf16.msra.mxu0 0
        %1362 = vmatprep.subr.bf16.mxu0 0
        %1363 = vmatpush1.bf16.msra.mxu0 0
        %1364 = vmatprep.subr.bf16.mxu0 0
        %1365 = vmatpush1.bf16.msra.mxu0 0
        %1366 = vmatprep.subr.bf16.mxu0 0
        %1367 = vmatpush1.bf16.msra.mxu0 0
        %1368 = vmatprep.subr.bf16.mxu0 0
        %1369 = vmatpush1.bf16.msra.mxu0 0
        %1370 = vmatprep.subr.bf16.mxu0 0
        %1371 = vmatpush1.bf16.msra.mxu0 0
        %1372 = vmatprep.subr.bf16.mxu0 0
        %1373 = vmatpush1.bf16.msra.mxu0 0
        %1374 = vmatprep.subr.bf16.mxu0 0
        %1375 = vmatpush1.bf16.msra.mxu0 0
        %1376 = vmatprep.subr.bf16.mxu0 0
        %1377 = vmatpush1.bf16.msra.mxu0 0
        %1378 = vmatprep.subr.bf16.mxu0 0
        %1379 = vmatpush1.bf16.msra.mxu0 0
        %1380 = vmatprep.subr.bf16.mxu0 0
        %1381 = vmatpush1.bf16.msra.mxu0 0
        %1382 = vmatprep.subr.bf16.mxu0 0
        %1383 = vmatpush1.bf16.msra.mxu0 0
        %1384 = vmatprep.subr.bf16.mxu0 0
        %1385 = vmatpush1.bf16.msra.mxu0 0
        %1386 = vmatprep.mubr.bf16.mxu0 0
        %1387 = vmatmul.mubr.bf16.gmra.mrb[0].mxu0 %v1352
        %v1388 = vpop.f32.mrb[0].mxu0
        %v1389 = vadd.f32 %v1338, %v1388
        %v1390 = vpop.f32.mrb[0].mxu0
        %v1391 = vpop.f32.mrb[0].mxu0
        %v1392 = vpop.f32.mrb[0].mxu0
        %1393 = vdwg.mxu0
        %v1394 = vpack.c.bf16 %v1389, %v1389
        %v1395 = vmul.f32 %v1389, %v574
        %v1396 = vpack.c.bf16 %v1395, %v1395
        %1398 = vrot.lane.b32.xlu0 %v1394, 96
        %v1399 = vpop.permute.xlu0 %1398
        %v1401 = vsel %vm401, %v1396, 0
        %v1404 = vsel %vm401, %v1399, 0
        %1406 = vmatprep.subr.bf16.mxu0 0
        %1407 = vmatpush1.bf16.xpose.msra.mxu0 %v1404
        %1408 = vmatprep.subr.bf16.mxu0 0
        %1409 = vmatpush1.bf16.xpose.msra.mxu0 0
        %1410 = vmatprep.subr.bf16.mxu0 0
        %1411 = vmatpush1.bf16.xpose.msra.mxu0 0
        %1412 = vmatprep.subr.bf16.mxu0 0
        %1413 = vmatpush1.bf16.xpose.msra.mxu0 0
        %1414 = vmatprep.subr.bf16.mxu0 0
        %1415 = vmatpush1.bf16.xpose.msra.mxu0 0
        %1416 = vmatprep.subr.bf16.mxu0 0
        %1417 = vmatpush1.bf16.xpose.msra.mxu0 0
        %1418 = vmatprep.subr.bf16.mxu0 0
        %1419 = vmatpush1.bf16.xpose.msra.mxu0 0
        %1420 = vmatprep.subr.bf16.mxu0 0
        %1421 = vmatpush1.bf16.xpose.msra.mxu0 0
        %1422 = vmatprep.subr.bf16.mxu0 0
        %1423 = vmatpush1.bf16.xpose.msra.mxu0 0
        %1424 = vmatprep.subr.bf16.mxu0 0
        %1425 = vmatpush1.bf16.xpose.msra.mxu0 0
        %1426 = vmatprep.subr.bf16.mxu0 0
        %1427 = vmatpush1.bf16.xpose.msra.mxu0 0
        %1428 = vmatprep.subr.bf16.mxu0 0
        %1429 = vmatpush1.bf16.xpose.msra.mxu0 0
        %1430 = vmatprep.subr.bf16.mxu0 0
        %1431 = vmatpush1.bf16.xpose.msra.mxu0 0
        %1432 = vmatprep.subr.bf16.mxu0 0
        %1433 = vmatpush1.bf16.xpose.msra.mxu0 0
        %1434 = vmatprep.subr.bf16.mxu0 0
        %1435 = vmatpush1.bf16.xpose.msra.mxu0 0
        %1436 = vmatprep.subr.bf16.mxu0 0
        %1437 = vmatpush1.bf16.xpose.msra.mxu0 0
        %1438 = vmatprep.mubr.bf16.mxu0 0
        %1439 = vmatmul.mubr.bf16.gmra.mrb[0].mxu0 %v1401
        %v1440 = vpop.f32.mrb[0].mxu0
        %v1441 = vadd.f32 %v489, %v1440
        %v1442 = vpop.f32.mrb[0].mxu0
        %v1443 = vpop.f32.mrb[0].mxu0
        %v1444 = vpop.f32.mrb[0].mxu0
        %1445 = vdwg.mxu0
        %v1446 = vsel %vm626, %v1441, -inf
        %1447 = vmax.xlane.f32.xlu0 %v1446
        %v1448 = vpop.xlane.xlu0 %1447
        %v1449 = vsub.f32 %v1441, %v1448
        %v1450 = vmul.f32 %v1449, 1.442695
        %v1451 = vpow.pop %v1450
        %v1452 = vsel %vm626, %v1451, 0.0
        %1453 = vadd.xlane.f32.xlu0 %v1452
        %v1454 = vpop.xlane.xlu0 %1453
        %v1455 = vrcp.pop %v1454
        %v1456 = vmul.f32 %v1451, %v1455
        %v1457 = vpack.c.bf16 %v1456, %v1456
        %v1458 = vmul.f32 %v1389, %v641
        %v1459 = vpack.c.bf16 %v1458, %v1458
        %v1460 = vmul.f32 %v1389, %v648
        %v1461 = vpack.c.bf16 %v1460, %v1460
        %v1463 = vsel %vm401, %v1461, 0
        %1465 = vmatprep.subr.bf16.mxu0 0
        %1466 = vmatpush1.bf16.xpose.msra.mxu0 %v1404
        %1467 = vmatprep.subr.bf16.mxu0 0
        %1468 = vmatpush1.bf16.xpose.msra.mxu0 0
        %1469 = vmatprep.subr.bf16.mxu0 0
        %1470 = vmatpush1.bf16.xpose.msra.mxu0 0
        %1471 = vmatprep.subr.bf16.mxu0 0
        %1472 = vmatpush1.bf16.xpose.msra.mxu0 0
        %1473 = vmatprep.subr.bf16.mxu0 0
        %1474 = vmatpush1.bf16.xpose.msra.mxu0 0
        %1475 = vmatprep.subr.bf16.mxu0 0
        %1476 = vmatpush1.bf16.xpose.msra.mxu0 0
        %1477 = vmatprep.subr.bf16.mxu0 0
        %1478 = vmatpush1.bf16.xpose.msra.mxu0 0
        %1479 = vmatprep.subr.bf16.mxu0 0
        %1480 = vmatpush1.bf16.xpose.msra.mxu0 0
        %1481 = vmatprep.subr.bf16.mxu0 0
        %1482 = vmatpush1.bf16.xpose.msra.mxu0 0
        %1483 = vmatprep.subr.bf16.mxu0 0
        %1484 = vmatpush1.bf16.xpose.msra.mxu0 0
        %1485 = vmatprep.subr.bf16.mxu0 0
        %1486 = vmatpush1.bf16.xpose.msra.mxu0 0
        %1487 = vmatprep.subr.bf16.mxu0 0
        %1488 = vmatpush1.bf16.xpose.msra.mxu0 0
        %1489 = vmatprep.subr.bf16.mxu0 0
        %1490 = vmatpush1.bf16.xpose.msra.mxu0 0
        %1491 = vmatprep.subr.bf16.mxu0 0
        %1492 = vmatpush1.bf16.xpose.msra.mxu0 0
        %1493 = vmatprep.subr.bf16.mxu0 0
        %1494 = vmatpush1.bf16.xpose.msra.mxu0 0
        %1495 = vmatprep.subr.bf16.mxu0 0
        %1496 = vmatpush1.bf16.xpose.msra.mxu0 0
        %1497 = vmatprep.mubr.bf16.mxu0 0
        %1498 = vmatmul.mubr.bf16.gmra.mrb[0].mxu0 %v1463
        %v1499 = vpop.f32.mrb[0].mxu0
        %v1500 = vadd.f32 %v489, %v1499
        %v1501 = vpop.f32.mrb[0].mxu0
        %v1502 = vpop.f32.mrb[0].mxu0
        %v1503 = vpop.f32.mrb[0].mxu0
        %1504 = vdwg.mxu0
        %v1505 = vsel %vm626, %v1500, -inf
        %1506 = vmax.xlane.f32.xlu0 %v1505
        %v1507 = vpop.xlane.xlu0 %1506
        %v1508 = vsub.f32 %v1500, %v1507
        %v1509 = vmul.f32 %v1508, 1.442695
        %v1510 = vpow.pop %v1509
        %v1511 = vsel %vm626, %v1510, 0.0
        %1512 = vadd.xlane.f32.xlu0 %v1511
        %v1513 = vpop.xlane.xlu0 %1512
        %v1514 = vrcp.pop %v1513
        %v1515 = vmul.f32 %v1510, %v1514
        %v1516 = vpack.c.bf16 %v1515, %v1515
        %v1517 = vmul.f32 %v1389, %v708
        %v1518 = vpack.c.bf16 %v1517, %v1517
        %1520 = vrot.lane.b32.xlu0 %v1518, 64
        %v1521 = vpop.permute.xlu0 %1520
        %v1523 = vsel %vm626, %v1516, 0
        %v1526 = vsel %vm718, %v1521, 0
        %1528 = vmatprep.subr.bf16.mxu0 0
        %1529 = vmatpush1.bf16.msra.mxu0 %v1526
        %1530 = vmatprep.subr.bf16.mxu0 0
        %1531 = vmatpush1.bf16.msra.mxu0 0
        %1532 = vmatprep.subr.bf16.mxu0 0
        %1533 = vmatpush1.bf16.msra.mxu0 0
        %1534 = vmatprep.subr.bf16.mxu0 0
        %1535 = vmatpush1.bf16.msra.mxu0 0
        %1536 = vmatprep.subr.bf16.mxu0 0
        %1537 = vmatpush1.bf16.msra.mxu0 0
        %1538 = vmatprep.subr.bf16.mxu0 0
        %1539 = vmatpush1.bf16.msra.mxu0 0
        %1540 = vmatprep.subr.bf16.mxu0 0
        %1541 = vmatpush1.bf16.msra.mxu0 0
        %1542 = vmatprep.subr.bf16.mxu0 0
        %1543 = vmatpush1.bf16.msra.mxu0 0
        %1544 = vmatprep.subr.bf16.mxu0 0
        %1545 = vmatpush1.bf16.msra.mxu0 0
        %1546 = vmatprep.subr.bf16.mxu0 0
        %1547 = vmatpush1.bf16.msra.mxu0 0
        %1548 = vmatprep.subr.bf16.mxu0 0
        %1549 = vmatpush1.bf16.msra.mxu0 0
        %1550 = vmatprep.subr.bf16.mxu0 0
        %1551 = vmatpush1.bf16.msra.mxu0 0
        %1552 = vmatprep.subr.bf16.mxu0 0
        %1553 = vmatpush1.bf16.msra.mxu0 0
        %1554 = vmatprep.subr.bf16.mxu0 0
        %1555 = vmatpush1.bf16.msra.mxu0 0
        %1556 = vmatprep.subr.bf16.mxu0 0
        %1557 = vmatpush1.bf16.msra.mxu0 0
        %1558 = vmatprep.subr.bf16.mxu0 0
        %1559 = vmatpush1.bf16.msra.mxu0 0
        %1560 = vmatprep.mubr.bf16.mxu0 0
        %1561 = vmatmul.mubr.bf16.gmra.mrb[0].mxu0 %v1523
        %v1562 = vpop.f32.mrb[0].mxu0
        %v1563 = vadd.f32 0.0, %v1562
        %v1564 = vpop.f32.mrb[0].mxu0
        %v1565 = vpop.f32.mrb[0].mxu0
        %v1566 = vpop.f32.mrb[0].mxu0
        %1567 = vdwg.mxu0
        %1569 = vrot.lane.b32.xlu0 %v1459, 64
        %v1570 = vpop.permute.xlu0 %1569
        %v1572 = vsel %vm626, %v1457, 0
        %v1575 = vsel %vm718, %v1570, 0
        %1577 = vmatprep.subr.bf16.mxu0 0
        %1578 = vmatpush1.bf16.msra.mxu0 %v1575
        %1579 = vmatprep.subr.bf16.mxu0 0
        %1580 = vmatpush1.bf16.msra.mxu0 0
        %1581 = vmatprep.subr.bf16.mxu0 0
        %1582 = vmatpush1.bf16.msra.mxu0 0
        %1583 = vmatprep.subr.bf16.mxu0 0
        %1584 = vmatpush1.bf16.msra.mxu0 0
        %1585 = vmatprep.subr.bf16.mxu0 0
        %1586 = vmatpush1.bf16.msra.mxu0 0
        %1587 = vmatprep.subr.bf16.mxu0 0
        %1588 = vmatpush1.bf16.msra.mxu0 0
        %1589 = vmatprep.subr.bf16.mxu0 0
        %1590 = vmatpush1.bf16.msra.mxu0 0
        %1591 = vmatprep.subr.bf16.mxu0 0
        %1592 = vmatpush1.bf16.msra.mxu0 0
        %1593 = vmatprep.subr.bf16.mxu0 0
        %1594 = vmatpush1.bf16.msra.mxu0 0
        %1595 = vmatprep.subr.bf16.mxu0 0
        %1596 = vmatpush1.bf16.msra.mxu0 0
        %1597 = vmatprep.subr.bf16.mxu0 0
        %1598 = vmatpush1.bf16.msra.mxu0 0
        %1599 = vmatprep.subr.bf16.mxu0 0
        %1600 = vmatpush1.bf16.msra.mxu0 0
        %1601 = vmatprep.subr.bf16.mxu0 0
        %1602 = vmatpush1.bf16.msra.mxu0 0
        %1603 = vmatprep.subr.bf16.mxu0 0
        %1604 = vmatpush1.bf16.msra.mxu0 0
        %1605 = vmatprep.subr.bf16.mxu0 0
        %1606 = vmatpush1.bf16.msra.mxu0 0
        %1607 = vmatprep.subr.bf16.mxu0 0
        %1608 = vmatpush1.bf16.msra.mxu0 0
        %1609 = vmatprep.mubr.bf16.mxu0 0
        %1610 = vmatmul.mubr.bf16.gmra.mrb[0].mxu0 %v1572
        %v1611 = vpop.f32.mrb[0].mxu0
        %v1612 = vadd.f32 %v1563, %v1611
        %v1613 = vpop.f32.mrb[0].mxu0
        %v1614 = vpop.f32.mrb[0].mxu0
        %v1615 = vpop.f32.mrb[0].mxu0
        %1616 = vdwg.mxu0
        %v1617 = vmul.f32 %v1389, %v814
        %v1618 = vpack.c.bf16 %v1617, %v1617
        %v1620 = vsel %vm401, %v1618, 0
        %1622 = vmatprep.subr.bf16.mxu0 0
        %1623 = vmatpush1.bf16.xpose.msra.mxu0 %v1404
        %1624 = vmatprep.subr.bf16.mxu0 0
        %1625 = vmatpush1.bf16.xpose.msra.mxu0 0
        %1626 = vmatprep.subr.bf16.mxu0 0
        %1627 = vmatpush1.bf16.xpose.msra.mxu0 0
        %1628 = vmatprep.subr.bf16.mxu0 0
        %1629 = vmatpush1.bf16.xpose.msra.mxu0 0
        %1630 = vmatprep.subr.bf16.mxu0 0
        %1631 = vmatpush1.bf16.xpose.msra.mxu0 0
        %1632 = vmatprep.subr.bf16.mxu0 0
        %1633 = vmatpush1.bf16.xpose.msra.mxu0 0
        %1634 = vmatprep.subr.bf16.mxu0 0
        %1635 = vmatpush1.bf16.xpose.msra.mxu0 0
        %1636 = vmatprep.subr.bf16.mxu0 0
        %1637 = vmatpush1.bf16.xpose.msra.mxu0 0
        %1638 = vmatprep.subr.bf16.mxu0 0
        %1639 = vmatpush1.bf16.xpose.msra.mxu0 0
        %1640 = vmatprep.subr.bf16.mxu0 0
        %1641 = vmatpush1.bf16.xpose.msra.mxu0 0
        %1642 = vmatprep.subr.bf16.mxu0 0
        %1643 = vmatpush1.bf16.xpose.msra.mxu0 0
        %1644 = vmatprep.subr.bf16.mxu0 0
        %1645 = vmatpush1.bf16.xpose.msra.mxu0 0
        %1646 = vmatprep.subr.bf16.mxu0 0
        %1647 = vmatpush1.bf16.xpose.msra.mxu0 0
        %1648 = vmatprep.subr.bf16.mxu0 0
        %1649 = vmatpush1.bf16.xpose.msra.mxu0 0
        %1650 = vmatprep.subr.bf16.mxu0 0
        %1651 = vmatpush1.bf16.xpose.msra.mxu0 0
        %1652 = vmatprep.subr.bf16.mxu0 0
        %1653 = vmatpush1.bf16.xpose.msra.mxu0 0
        %1654 = vmatprep.mubr.bf16.mxu0 0
        %1655 = vmatmul.mubr.bf16.gmra.mrb[0].mxu0 %v1620
        %v1656 = vpop.f32.mrb[0].mxu0
        %v1657 = vadd.f32 %v489, %v1656
        %v1658 = vpop.f32.mrb[0].mxu0
        %v1659 = vpop.f32.mrb[0].mxu0
        %v1660 = vpop.f32.mrb[0].mxu0
        %1661 = vdwg.mxu0
        %v1662 = vsel %vm626, %v1657, -inf
        %1663 = vmax.xlane.f32.xlu0 %v1662
        %v1664 = vpop.xlane.xlu0 %1663
        %v1665 = vsub.f32 %v1657, %v1664
        %v1666 = vmul.f32 %v1665, 1.442695
        %v1667 = vpow.pop %v1666
        %v1668 = vsel %vm626, %v1667, 0.0
        %1669 = vadd.xlane.f32.xlu0 %v1668
        %v1670 = vpop.xlane.xlu0 %1669
        %v1671 = vrcp.pop %v1670
        %v1672 = vmul.f32 %v1667, %v1671
        %v1673 = vpack.c.bf16 %v1672, %v1672
        %v1674 = vmul.f32 %v1389, %v874
        %v1675 = vpack.c.bf16 %v1674, %v1674
        %1677 = vrot.lane.b32.xlu0 %v1675, 64
        %v1678 = vpop.permute.xlu0 %1677
        %v1680 = vsel %vm626, %v1673, 0
        %v1683 = vsel %vm718, %v1678, 0
        %1685 = vmatprep.subr.bf16.mxu0 0
        %1686 = vmatpush1.bf16.msra.mxu0 %v1683
        %1687 = vmatprep.subr.bf16.mxu0 0
        %1688 = vmatpush1.bf16.msra.mxu0 0
        %1689 = vmatprep.subr.bf16.mxu0 0
        %1690 = vmatpush1.bf16.msra.mxu0 0
        %1691 = vmatprep.subr.bf16.mxu0 0
        %1692 = vmatpush1.bf16.msra.mxu0 0
        %1693 = vmatprep.subr.bf16.mxu0 0
        %1694 = vmatpush1.bf16.msra.mxu0 0
        %1695 = vmatprep.subr.bf16.mxu0 0
        %1696 = vmatpush1.bf16.msra.mxu0 0
        %1697 = vmatprep.subr.bf16.mxu0 0
        %1698 = vmatpush1.bf16.msra.mxu0 0
        %1699 = vmatprep.subr.bf16.mxu0 0
        %1700 = vmatpush1.bf16.msra.mxu0 0
        %1701 = vmatprep.subr.bf16.mxu0 0
        %1702 = vmatpush1.bf16.msra.mxu0 0
        %1703 = vmatprep.subr.bf16.mxu0 0
        %1704 = vmatpush1.bf16.msra.mxu0 0
        %1705 = vmatprep.subr.bf16.mxu0 0
        %1706 = vmatpush1.bf16.msra.mxu0 0
        %1707 = vmatprep.subr.bf16.mxu0 0
        %1708 = vmatpush1.bf16.msra.mxu0 0
        %1709 = vmatprep.subr.bf16.mxu0 0
        %1710 = vmatpush1.bf16.msra.mxu0 0
        %1711 = vmatprep.subr.bf16.mxu0 0
        %1712 = vmatpush1.bf16.msra.mxu0 0
        %1713 = vmatprep.subr.bf16.mxu0 0
        %1714 = vmatpush1.bf16.msra.mxu0 0
        %1715 = vmatprep.subr.bf16.mxu0 0
        %1716 = vmatpush1.bf16.msra.mxu0 0
        %1717 = vmatprep.mubr.bf16.mxu0 0
        %1718 = vmatmul.mubr.bf16.gmra.mrb[0].mxu0 %v1680
        %v1719 = vpop.f32.mrb[0].mxu0
        %v1720 = vadd.f32 0.0, %v1719
        %v1721 = vpop.f32.mrb[0].mxu0
        %v1722 = vpop.f32.mrb[0].mxu0
        %v1723 = vpop.f32.mrb[0].mxu0
        %1724 = vdwg.mxu0
        %v1725 = vadd.f32 %v1612, %v1720
        %v1726 = vmul.f32 %v1389, %v931
        %v1727 = vpack.c.bf16 %v1726, %v1726
        %v1729 = vsel %vm401, %v1727, 0
        %1731 = vmatprep.subr.bf16.mxu0 0
        %1732 = vmatpush1.bf16.xpose.msra.mxu0 %v1404
        %1733 = vmatprep.subr.bf16.mxu0 0
        %1734 = vmatpush1.bf16.xpose.msra.mxu0 0
        %1735 = vmatprep.subr.bf16.mxu0 0
        %1736 = vmatpush1.bf16.xpose.msra.mxu0 0
        %1737 = vmatprep.subr.bf16.mxu0 0
        %1738 = vmatpush1.bf16.xpose.msra.mxu0 0
        %1739 = vmatprep.subr.bf16.mxu0 0
        %1740 = vmatpush1.bf16.xpose.msra.mxu0 0
        %1741 = vmatprep.subr.bf16.mxu0 0
        %1742 = vmatpush1.bf16.xpose.msra.mxu0 0
        %1743 = vmatprep.subr.bf16.mxu0 0
        %1744 = vmatpush1.bf16.xpose.msra.mxu0 0
        %1745 = vmatprep.subr.bf16.mxu0 0
        %1746 = vmatpush1.bf16.xpose.msra.mxu0 0
        %1747 = vmatprep.subr.bf16.mxu0 0
        %1748 = vmatpush1.bf16.xpose.msra.mxu0 0
        %1749 = vmatprep.subr.bf16.mxu0 0
        %1750 = vmatpush1.bf16.xpose.msra.mxu0 0
        %1751 = vmatprep.subr.bf16.mxu0 0
        %1752 = vmatpush1.bf16.xpose.msra.mxu0 0
        %1753 = vmatprep.subr.bf16.mxu0 0
        %1754 = vmatpush1.bf16.xpose.msra.mxu0 0
        %1755 = vmatprep.subr.bf16.mxu0 0
        %1756 = vmatpush1.bf16.xpose.msra.mxu0 0
        %1757 = vmatprep.subr.bf16.mxu0 0
        %1758 = vmatpush1.bf16.xpose.msra.mxu0 0
        %1759 = vmatprep.subr.bf16.mxu0 0
        %1760 = vmatpush1.bf16.xpose.msra.mxu0 0
        %1761 = vmatprep.subr.bf16.mxu0 0
        %1762 = vmatpush1.bf16.xpose.msra.mxu0 0
        %1763 = vmatprep.mubr.bf16.mxu0 0
        %1764 = vmatmul.mubr.bf16.gmra.mrb[0].mxu0 %v1729
        %v1765 = vpop.f32.mrb[0].mxu0
        %v1766 = vadd.f32 %v489, %v1765
        %v1767 = vpop.f32.mrb[0].mxu0
        %v1768 = vpop.f32.mrb[0].mxu0
        %v1769 = vpop.f32.mrb[0].mxu0
        %1770 = vdwg.mxu0
        %v1771 = vsel %vm626, %v1766, -inf
        %1772 = vmax.xlane.f32.xlu0 %v1771
        %v1773 = vpop.xlane.xlu0 %1772
        %v1774 = vsub.f32 %v1766, %v1773
        %v1775 = vmul.f32 %v1774, 1.442695
        %v1776 = vpow.pop %v1775
        %v1777 = vsel %vm626, %v1776, 0.0
        %1778 = vadd.xlane.f32.xlu0 %v1777
        %v1779 = vpop.xlane.xlu0 %1778
        %v1780 = vrcp.pop %v1779
        %v1781 = vmul.f32 %v1776, %v1780
        %v1782 = vpack.c.bf16 %v1781, %v1781
        %v1783 = vmul.f32 %v1389, %v991
        %v1784 = vpack.c.bf16 %v1783, %v1783
        %1786 = vrot.lane.b32.xlu0 %v1784, 64
        %v1787 = vpop.permute.xlu0 %1786
        %v1789 = vsel %vm626, %v1782, 0
        %v1792 = vsel %vm718, %v1787, 0
        %1794 = vmatprep.subr.bf16.mxu0 0
        %1795 = vmatpush1.bf16.msra.mxu0 %v1792
        %1796 = vmatprep.subr.bf16.mxu0 0
        %1797 = vmatpush1.bf16.msra.mxu0 0
        %1798 = vmatprep.subr.bf16.mxu0 0
        %1799 = vmatpush1.bf16.msra.mxu0 0
        %1800 = vmatprep.subr.bf16.mxu0 0
        %1801 = vmatpush1.bf16.msra.mxu0 0
        %1802 = vmatprep.subr.bf16.mxu0 0
        %1803 = vmatpush1.bf16.msra.mxu0 0
        %1804 = vmatprep.subr.bf16.mxu0 0
        %1805 = vmatpush1.bf16.msra.mxu0 0
        %1806 = vmatprep.subr.bf16.mxu0 0
        %1807 = vmatpush1.bf16.msra.mxu0 0
        %1808 = vmatprep.subr.bf16.mxu0 0
        %1809 = vmatpush1.bf16.msra.mxu0 0
        %1810 = vmatprep.subr.bf16.mxu0 0
        %1811 = vmatpush1.bf16.msra.mxu0 0
        %1812 = vmatprep.subr.bf16.mxu0 0
        %1813 = vmatpush1.bf16.msra.mxu0 0
        %1814 = vmatprep.subr.bf16.mxu0 0
        %1815 = vmatpush1.bf16.msra.mxu0 0
        %1816 = vmatprep.subr.bf16.mxu0 0
        %1817 = vmatpush1.bf16.msra.mxu0 0
        %1818 = vmatprep.subr.bf16.mxu0 0
        %1819 = vmatpush1.bf16.msra.mxu0 0
        %1820 = vmatprep.subr.bf16.mxu0 0
        %1821 = vmatpush1.bf16.msra.mxu0 0
        %1822 = vmatprep.subr.bf16.mxu0 0
        %1823 = vmatpush1.bf16.msra.mxu0 0
        %1824 = vmatprep.subr.bf16.mxu0 0
        %1825 = vmatpush1.bf16.msra.mxu0 0
        %1826 = vmatprep.mubr.bf16.mxu0 0
        %1827 = vmatmul.mubr.bf16.gmra.mrb[0].mxu0 %v1789
        %v1828 = vpop.f32.mrb[0].mxu0
        %v1829 = vadd.f32 0.0, %v1828
        %v1830 = vpop.f32.mrb[0].mxu0
        %v1831 = vpop.f32.mrb[0].mxu0
        %v1832 = vpop.f32.mrb[0].mxu0
        %1833 = vdwg.mxu0
        %v1834 = vadd.f32 %v1725, %v1829
        %v1835 = vpack.c.bf16 %v1834, %v1834
        %v1836 = vlaneseq
        %v1837 = vshrl.u32 %v1836, 7
        %v1838 = vsub.s32 3, %v1837
        %v1839 = vrot.slane %v182, %v1838
        %v1844 = vunpack.c.l.b16 %v1318
        %v1845 = vunpack.c.l.b16 %v1319
        %v1846 = vunpack.c.l.b16 %v1320
        %v1847 = vunpack.c.l.b16 %v1321
        %v1848 = vpack.c.b16 %v1845, %v1844
        %v1849 = vpack.c.b16 %v1847, %v1846
        %v1853 = vsel %vm401, %v1835, 0
        %1855 = vmatprep.subr.bf16.mxu0 0
        %1856 = vmatpush1.bf16.msra.mxu0 %v1848
        %1857 = vmatprep.subr.bf16.mxu0 0
        %1858 = vmatpush1.bf16.msra.mxu0 %v1849
        %1859 = vmatprep.subr.bf16.mxu0 0
        %1860 = vmatpush1.bf16.msra.mxu0 0
        %1861 = vmatprep.subr.bf16.mxu0 0
        %1862 = vmatpush1.bf16.msra.mxu0 0
        %1863 = vmatprep.subr.bf16.mxu0 0
        %1864 = vmatpush1.bf16.msra.mxu0 0
        %1865 = vmatprep.subr.bf16.mxu0 0
        %1866 = vmatpush1.bf16.msra.mxu0 0
        %1867 = vmatprep.subr.bf16.mxu0 0
        %1868 = vmatpush1.bf16.msra.mxu0 0
        %1869 = vmatprep.subr.bf16.mxu0 0
        %1870 = vmatpush1.bf16.msra.mxu0 0
        %1871 = vmatprep.subr.bf16.mxu0 0
        %1872 = vmatpush1.bf16.msra.mxu0 0
        %1873 = vmatprep.subr.bf16.mxu0 0
        %1874 = vmatpush1.bf16.msra.mxu0 0
        %1875 = vmatprep.subr.bf16.mxu0 0
        %1876 = vmatpush1.bf16.msra.mxu0 0
        %1877 = vmatprep.subr.bf16.mxu0 0
        %1878 = vmatpush1.bf16.msra.mxu0 0
        %1879 = vmatprep.subr.bf16.mxu0 0
        %1880 = vmatpush1.bf16.msra.mxu0 0
        %1881 = vmatprep.subr.bf16.mxu0 0
        %1882 = vmatpush1.bf16.msra.mxu0 0
        %1883 = vmatprep.subr.bf16.mxu0 0
        %1884 = vmatpush1.bf16.msra.mxu0 0
        %1885 = vmatprep.subr.bf16.mxu0 0
        %1886 = vmatpush1.bf16.msra.mxu0 0
        %1887 = vmatprep.mubr.bf16.mxu0 0
        %1888 = vmatmul.mubr.bf16.gmra.mrb[0].mxu0 %v1853
        %v1889 = vpop.f32.mrb[0].mxu0
        %v1890 = vadd.f32 %v1839, %v1889
        %v1891 = vpop.f32.mrb[0].mxu0
        %v1892 = vpop.f32.mrb[0].mxu0
        %v1893 = vpop.f32.mrb[0].mxu0
        %1894 = vdwg.mxu0
        %v1895 = vadd.f32 %v1890, %v1312
        %v1896 = vsel %vm401, %v1895, 0.0
        %1897 = vadd.xlane.f32.xlu0 %v1896
        %v1898 = vpop.xlane.xlu0 %1897
        %v1899 = vmul.f32 %v1898, %v405
        %v1900 = vsub.f32 %v1895, %v1899
        %v1901 = vmul.f32 %v1900, %v1900
        %v1902 = vsel %vm401, %v1901, 0.0
        %1903 = vadd.xlane.f32.xlu0 %v1902
        %v1904 = vpop.xlane.xlu0 %1903
        %v1905 = vmul.f32 %v1904, %v405
        %v1906 = vadd.f32 %v1905, 1e-12
        %v1907 = vrsqrt.pop %v1906
        %v1908 = vmul.f32 %v1900, %v1907
        %v1909 = vlaneseq
        %v1910 = vshrl.u32 %v1909, 7
        %v1911 = vsub.s32 4, %v1910
        %v1912 = vrot.slane %v182, %v1911
        %v1913 = vmul.f32 %v1908, %v1912
        %v1914 = vlaneseq
        %v1915 = vshrl.u32 %v1914, 7
        %v1916 = vsub.s32 5, %v1915
        %v1917 = vrot.slane %v182, %v1916
        %v1918 = vadd.f32 %v1913, %v1917
        %v1919 = vpack.c.bf16 %v1918, %v1918
        %v1920 = vlaneseq
        %v1921 = vshrl.u32 %v1920, 7
        %v1922 = vsub.s32 6, %v1921
        %v1923 = vrot.slane %v182, %v1922
        %v1928 = vunpack.c.l.b16 %v1322
        %v1929 = vunpack.c.l.b16 %v1323
        %v1930 = vunpack.c.l.b16 %v1324
        %v1931 = vunpack.c.l.b16 %v1325
        %v1932 = vpack.c.b16 %v1929, %v1928
        %v1933 = vpack.c.b16 %v1931, %v1930
        %v1937 = vsel %vm401, %v1919, 0
        %1939 = vmatprep.subr.bf16.mxu0 0
        %1940 = vmatpush1.bf16.msra.mxu0 %v1932
        %1941 = vmatprep.subr.bf16.mxu0 0
        %1942 = vmatpush1.bf16.msra.mxu0 %v1933
        %1943 = vmatprep.subr.bf16.mxu0 0
        %1944 = vmatpush1.bf16.msra.mxu0 0
        %1945 = vmatprep.subr.bf16.mxu0 0
        %1946 = vmatpush1.bf16.msra.mxu0 0
        %1947 = vmatprep.subr.bf16.mxu0 0
        %1948 = vmatpush1.bf16.msra.mxu0 0
        %1949 = vmatprep.subr.bf16.mxu0 0
        %1950 = vmatpush1.bf16.msra.mxu0 0
        %1951 = vmatprep.subr.bf16.mxu0 0
        %1952 = vmatpush1.bf16.msra.mxu0 0
        %1953 = vmatprep.subr.bf16.mxu0 0
        %1954 = vmatpush1.bf16.msra.mxu0 0
        %1955 = vmatprep.subr.bf16.mxu0 0
        %1956 = vmatpush1.bf16.msra.mxu0 0
        %1957 = vmatprep.subr.bf16.mxu0 0
        %1958 = vmatpush1.bf16.msra.mxu0 0
        %1959 = vmatprep.subr.bf16.mxu0 0
        %1960 = vmatpush1.bf16.msra.mxu0 0
        %1961 = vmatprep.subr.bf16.mxu0 0
        %1962 = vmatpush1.bf16.msra.mxu0 0
        %1963 = vmatprep.subr.bf16.mxu0 0
        %1964 = vmatpush1.bf16.msra.mxu0 0
        %1965 = vmatprep.subr.bf16.mxu0 0
        %1966 = vmatpush1.bf16.msra.mxu0 0
        %1967 = vmatprep.subr.bf16.mxu0 0
        %1968 = vmatpush1.bf16.msra.mxu0 0
        %1969 = vmatprep.subr.bf16.mxu0 0
        %1970 = vmatpush1.bf16.msra.mxu0 0
        %1971 = vmatprep.mubr.bf16.mxu0 0
        %1972 = vmatmul.mubr.bf16.gmra.mrb[0].mxu0 %v1937
        %v1973 = vpop.f32.mrb[0].mxu0
        %v1974 = vadd.f32 %v1923, %v1973
        %v1975 = vpop.f32.mrb[0].mxu0
        %v1976 = vpop.f32.mrb[0].mxu0
        %v1977 = vpop.f32.mrb[0].mxu0
        %1978 = vdwg.mxu0
        %v1979 = vmul.f32 %v1974, 0.5
        %v1980 = vmul.f32 %v1974, 0.70710677
        %vm1981 = vcmp.lt.f32.partialorder %v1980, 0.0
        %v1982 = vsel %vm1981, -1.0, 1.0
        %v1983 = vand.u32 2147483647, %v1980
        %v1984 = vmul.f32 %v1983, 0.3275911
        %v1985 = vadd.f32 %v1984, 1.0
        %v1986 = vrcp.pop %v1985
        %v1987 = vmul.f32 1.0, %v1986
        %v1988 = vmul.f32 %v1987, 1.0614054
        %v1989 = vadd.f32 %v1988, -1.4531521
        %v1990 = vmul.f32 %v1989, %v1987
        %v1991 = vadd.f32 %v1990, 1.4214138
        %v1992 = vmul.f32 %v1991, %v1987
        %v1993 = vadd.f32 %v1992, -0.28449672
        %v1994 = vmul.f32 %v1993, %v1987
        %v1995 = vadd.f32 %v1994, 0.2548296
        %v1996 = vmul.f32 %v1995, %v1987
        %v1997 = vsub.f32 0.0, %v1983
        %v1998 = vmul.f32 %v1997, %v1983
        %v1999 = vmul.f32 %v1998, 1.442695
        %v2000 = vpow.pop %v1999
        %v2001 = vmul.f32 %v1996, %v2000
        %v2002 = vsub.f32 1.0, %v2001
        %v2003 = vmul.f32 %v1982, %v2002
        %v2004 = vadd.f32 %v2003, 1.0
        %v2005 = vmul.f32 %v1979, %v2004
        %v2006 = vpack.c.bf16 %v2005, %v2005
        %v2007 = vlaneseq
        %v2008 = vshrl.u32 %v2007, 7
        %v2009 = vsub.s32 7, %v2008
        %v2010 = vrot.slane %v182, %v2009
        %v2019 = vunpack.c.l.b16 %v1326
        %v2020 = vunpack.c.l.b16 %v1327
        %v2021 = vunpack.c.l.b16 %v1328
        %v2022 = vunpack.c.l.b16 %v1329
        %v2023 = vunpack.c.l.b16 %v1330
        %v2024 = vunpack.c.l.b16 %v1331
        %v2025 = vunpack.c.l.b16 %v1332
        %v2026 = vunpack.c.l.b16 %v1333
        %v2027 = vpack.c.b16 %v2020, %v2019
        %v2028 = vpack.c.b16 %v2022, %v2021
        %v2029 = vpack.c.b16 %v2024, %v2023
        %v2030 = vpack.c.b16 %v2026, %v2025
        %v2036 = vsel %vm1245, %v2006, 0
        %2038 = vmatprep.subr.bf16.mxu0 0
        %2039 = vmatpush1.bf16.msra.mxu0 %v2027
        %2040 = vmatprep.subr.bf16.mxu0 0
        %2041 = vmatpush1.bf16.msra.mxu0 %v2028
        %2042 = vmatprep.subr.bf16.mxu0 0
        %2043 = vmatpush1.bf16.msra.mxu0 %v2029
        %2044 = vmatprep.subr.bf16.mxu0 0
        %2045 = vmatpush1.bf16.msra.mxu0 %v2030
        %2046 = vmatprep.subr.bf16.mxu0 0
        %2047 = vmatpush1.bf16.msra.mxu0 0
        %2048 = vmatprep.subr.bf16.mxu0 0
        %2049 = vmatpush1.bf16.msra.mxu0 0
        %2050 = vmatprep.subr.bf16.mxu0 0
        %2051 = vmatpush1.bf16.msra.mxu0 0
        %2052 = vmatprep.subr.bf16.mxu0 0
        %2053 = vmatpush1.bf16.msra.mxu0 0
        %2054 = vmatprep.subr.bf16.mxu0 0
        %2055 = vmatpush1.bf16.msra.mxu0 0
        %2056 = vmatprep.subr.bf16.mxu0 0
        %2057 = vmatpush1.bf16.msra.mxu0 0
        %2058 = vmatprep.subr.bf16.mxu0 0
        %2059 = vmatpush1.bf16.msra.mxu0 0
        %2060 = vmatprep.subr.bf16.mxu0 0
        %2061 = vmatpush1.bf16.msra.mxu0 0
        %2062 = vmatprep.subr.bf16.mxu0 0
        %2063 = vmatpush1.bf16.msra.mxu0 0
        %2064 = vmatprep.subr.bf16.mxu0 0
        %2065 = vmatpush1.bf16.msra.mxu0 0
        %2066 = vmatprep.subr.bf16.mxu0 0
        %2067 = vmatpush1.bf16.msra.mxu0 0
        %2068 = vmatprep.subr.bf16.mxu0 0
        %2069 = vmatpush1.bf16.msra.mxu0 0
        %2070 = vmatprep.mubr.bf16.mxu0 0
        %2071 = vmatmul.mubr.bf16.gmra.mrb[0].mxu0 %v2036
        %v2072 = vpop.f32.mrb[0].mxu0
        %v2073 = vadd.f32 %v2010, %v2072
        %v2074 = vpop.f32.mrb[0].mxu0
        %v2075 = vpop.f32.mrb[0].mxu0
        %v2076 = vpop.f32.mrb[0].mxu0
        %2077 = vdwg.mxu0
        %v2078 = vadd.f32 %v2073, %v1918
        %v2079 = vsel %vm401, %v2078, 0.0
        %2080 = vadd.xlane.f32.xlu0 %v2079
        %v2081 = vpop.xlane.xlu0 %2080
        %v2082 = vmul.f32 %v2081, %v405
        %v2083 = vsub.f32 %v2078, %v2082
        %v2084 = vmul.f32 %v2083, %v2083
        %v2085 = vsel %vm401, %v2084, 0.0
        %2086 = vadd.xlane.f32.xlu0 %v2085
        %v2087 = vpop.xlane.xlu0 %2086
        %v2088 = vmul.f32 %v2087, %v405
        %v2089 = vadd.f32 %v2088, 1e-12
        %v2090 = vrsqrt.pop %v2089
        %v2091 = vmul.f32 %v2083, %v2090
        %v2092 = vlaneseq
        %v2093 = vshrl.u32 %v2092, 7
        %v2094 = vsub.s32 0, %v2093
        %v2095 = vrot.slane %v183, %v2094
        %v2096 = vmul.f32 %v2091, %v2095
        %v2097 = vlaneseq
        %v2098 = vshrl.u32 %v2097, 7
        %v2099 = vsub.s32 1, %v2098
        %v2100 = vrot.slane %v183, %v2099
        %v2101 = vadd.f32 %v2096, %v2100
        %vm2102 = vcmask 253952
        %2103 = vst.msk [vmem:[%s179] sm:$0x1] %vm2102, %v2101
        %s2104 = sand.u32 %s106, 1
        %s2105 = scalar_lea.sflag [#allocation8], %s2104
        %s2106 = sand.u32 %s106, 1
        %s2107 = scalar_lea.vmem [#allocation9], %s2106
        // Predicated region
        $region37: #{bert_forward.1} parent=31 // pred_check
          %p2108 = pneg %p116
        $region38: #{bert_forward.1} parent=31 // pred_check_branch
          %2110 = sbr.rel (%p2108) target = $region40
        $region39: #{bert_forward.1} parent=31 // pred_region
          %s2112 = ssub.s32 16, 16
          %2113 = vsyncadd %s2105, %s2112
          %s2114 = smul.addr %s35, 16
          %s2115 = scalar_lea.hbm %s6, %s2114
          %s2117 = sshll.u32 %s2107, 4
          %s2118 = int_to_ptr.vmem [resolvable:$true] %s2117
          %2120 = dma.vmem_to_hbm [thread:$0]  %s2118, 16, %s2115, %s2105
        $region40: #{bert_forward.1} parent=31 // pred_fallthru
          _
      $region32: #{bert_forward.1} parent=5 // pred_fallthru
        _
      %p2121 = scmp.le.s32.totalorder 2, %s30
      // Predicated region
      $region41: #{bert_forward.1} parent=5 // pred_check
        %p2122 = pneg %p2121
      $region42: #{bert_forward.1} parent=5 // pred_check_branch
        %2124 = sbr.rel (%p2122) target = $region44
      $region43: #{bert_forward.1} parent=5 // pred_region
        %s2125 = ssub.s32 %s30, 2
        // Predicated region
        $region45: #{bert_forward.1} parent=43 // pred_check
          %p2126 = pneg %p122
        $region46: #{bert_forward.1} parent=43 // pred_check_branch
          %2128 = sbr.rel (%p2126) target = $region48
        $region47: #{bert_forward.1} parent=43 // pred_region
          %s2129 = sand.u32 %s107, 1
          %s2130 = scalar_lea.sflag [#allocation8], %s2129
          %s2131 = sand.u32 %s107, 1
          %s2132 = scalar_lea.vmem [#allocation9], %s2131
          %2133 = dma.done %s2130, 16
        $region48: #{bert_forward.1} parent=43 // pred_fallthru
          _
      $region44: #{bert_forward.1} parent=5 // pred_fallthru
        _
    $region6: #{bert_forward.1} parent=1 // loop_footer
      %s34 = sadd.s32 1, %s30
    $region7: #{bert_forward.1} parent=1 // loop_footer_branch
      %29 = sbr.rel target = $region3
    $region8: #{bert_forward.1} parent=1 // loop_exit
      _
    %2134 = vsyncpa [#allocation7], 1
    %s2135 = scalar_lea.sflag [#allocation7], 1
    %2136 = vsyncpa %s2135, 1
    %2137 = vsyncpa [#allocation8], 1
    %s2138 = scalar_lea.sflag [#allocation8], 1
    %2139 = vsyncpa %s2138, 1

</llo_original>
